<compile_context>
chip_gen: v6e
topology: v6e:2x2x1
jax: 0.10.0
libtpu: 0.0.40
codegen_flags: <defaults>
</compile_context>

<pallas_src>
import jax
import jax.numpy as jnp
from jax.experimental import pallas as pl
from jax.experimental.pallas import tpu as pltpu


QDTYPE = jnp.bfloat16  # simulated low-precision float format (e8m7, nearest)


def _q(x):
    # input_quant / weight_quant / bias_quant / output_quant / act_error_quant:
    # round-to-nearest cast to the simulated low-precision float format.
    # Returns bf16 so matmul operands stay on the MXU's native bf16 path.
    return x.astype(QDTYPE)


# ------------------------------ Pallas kernels --------------------------------

def _conv_bn_relu_kernel(p_ref, w_ref, o_ref):
    """QConv2d (bias=False) + BatchNorm2d (training-mode batch stats)
    + act_error_quant + ReLU on an im2col patch matrix.

    p_ref: [M, K] bf16 patches (rows = (n, oh, ow); input_quant already applied)
    w_ref: [K, C] bf16 weights (weight_quant already applied)
    o_ref: [M, C] bf16 (post act_error_quant values -> bf16 store is lossless)
    """
    # MXU matmul: bf16 operands, f32 accumulation.
    y = jnp.dot(p_ref[...], w_ref[...], preferred_element_type=jnp.float32)
    # QConv2d output_quant; keep an f32 copy for the BN math.
    y = _q(y).astype(jnp.float32)
    # BatchNorm2d (training mode): per-channel batch mean / biased var,
    # eps=1e-5, gamma=1, beta=0 (default init).  Rows span all (n, oh, ow), so a
    # column reduction == reduction over N, H, W.  One-pass statistics
    # (sum / sum-of-squares) to avoid a second full pass over the tile.
    inv_m = 1.0 / y.shape[0]
    s1 = jnp.sum(y, axis=0, keepdims=True)
    s2 = jnp.sum(y * y, axis=0, keepdims=True)
    mean = s1 * inv_m
    var = s2 * inv_m - mean * mean
    y = (y - mean) * jax.lax.rsqrt(var + 1e-5)
    # act_error_quant, then F.relu (quant is monotone with q(0)=0).
    o_ref[...] = jnp.maximum(_q(y), 0)


def _fc_stack_kernel(x_ref, w1_ref, b1_ref, w2_ref, b2_ref, w3_ref, b3_ref, o_ref):
    """fc1 + ReLU + fc2 + ReLU + fc3, fused so the narrow intermediate
    activations live only in VMEM/vregs (single kernel launch, no HBM round trip).

    x_ref : [N, 400] bf16 (input_quant already applied)
    wX/bX : bf16 (weight_quant / bias_quant already applied)
    o_ref : [N, 10] f32
    """
    def qlinear(h, w_ref, b_ref):
        y = jnp.dot(h, w_ref[...], preferred_element_type=jnp.float32)
        y = y + b_ref[...].astype(jnp.float32)
        return _q(y)                       # QLinear output_quant (bf16)

    h = qlinear(x_ref[...], w1_ref, b1_ref)
    h = jnp.maximum(h, 0)                  # F.relu
    h = qlinear(h, w2_ref, b2_ref)
    h = jnp.maximum(h, 0)                  # F.relu
    y = qlinear(h, w3_ref, b3_ref)
    o_ref[...] = y.astype(jnp.float32)


# ------------------------------ pallas wrappers --------------------------------

def _vmem():
    return pl.BlockSpec(memory_space=pltpu.MemorySpace.VMEM)


def conv_bn_relu(patches, w):
    """patches: [M, K] bf16, w: [K, C] bf16 -> [M, C] bf16."""
    M, K = patches.shape
    C = w.shape[1]
    cost = pl.CostEstimate(
        flops=2 * M * K * C + 8 * M * C,
        transcendentals=C,
        bytes_accessed=2 * (M * K + K * C + M * C),
    )
    # TODO(synk): for batches large enough to stress VMEM (esp. v7x's 64 MiB),
    # add a grid over M with dimension_semantics=("parallel",) and two-phase BN
    # statistics; at LeNet scale a single resident block is fastest.
    return pl.pallas_call(
        _conv_bn_relu_kernel,
        out_shape=jax.ShapeDtypeStruct((M, C), QDTYPE),
        in_specs=[_vmem(), _vmem()],
        out_specs=_vmem(),
        cost_estimate=cost,
    )(patches, w)


def fc_stack(x, w1, b1, w2, b2, w3, b3):
    N = x.shape[0]
    d0, d1 = w1.shape
    d2 = w2.shape[1]
    d3 = w3.shape[1]
    cost = pl.CostEstimate(
        flops=2 * N * (d0 * d1 + d1 * d2 + d2 * d3),
        transcendentals=0,
        bytes_accessed=2 * (N * d0 + d0 * d1 + d1 * d2 + d2 * d3 + d1 + d2 + d3)
        + 4 * N * d3,
    )
    return pl.pallas_call(
        _fc_stack_kernel,
        out_shape=jax.ShapeDtypeStruct((N, d3), jnp.float32),
        in_specs=[_vmem()] * 7,
        out_specs=_vmem(),
        cost_estimate=cost,
    )(x, w1, b1, w2, b2, w3, b3)


# --------------------------------- XLA glue ------------------------------------

def _patches_nhwc(x, kh, kw):
    """Single-op im2col: [N, H, W, C] -> [N*OH*OW, C*kh*kw].
    Feature order is (c, kh, kw), matching PyTorch's weight.reshape(Cout, -1)."""
    N, H, W, C = x.shape
    OH, OW = H - kh + 1, W - kw + 1
    p = jax.lax.conv_general_dilated_patches(
        x, (kh, kw), (1, 1), "VALID",
        dimension_numbers=("NHWC", "HWIO", "NHWC"))
    return p.reshape(N * OH * OW, C * kh * kw)


def _max_pool2x2_nhwc(x):
    # TODO(synk): 2x2 max-pool kept as a single XLA reshape+max fusion between the
    # fused conv kernels (the (n,oh,ow)-row -> pooled-row regrouping has no clean
    # in-kernel relayout at this layout/scale).
    N, H, W, C = x.shape
    return x.reshape(N, H // 2, 2, W // 2, 2, C).max(axis=(2, 4))


def qlenet_forward(x, params):
    """x: [N, 1, 32, 32] f32 (NCHW, as in the PyTorch module)."""
    N = x.shape[0]

    # NCHW -> NHWC is a free reshape for C=1; conv1's input_quant applied up front
    # (patch extraction only copies elements, so quantizing first is equivalent).
    xq = _q(x.reshape(N, 32, 32, 1))

    # conv1 (1->6, 5x5, no bias) + bn1 + quant + relu, then 2x2 max pool.
    p1 = _patches_nhwc(xq, 5, 5)                       # [N*784, 25] bf16
    y1 = conv_bn_relu(p1, params["conv1_w"])           # [N*784, 6]  bf16
    y1 = _max_pool2x2_nhwc(y1.reshape(N, 28, 28, 6))   # [N, 14, 14, 6]

    # conv2 (6->16, 5x5, no bias) + bn2 + quant + relu, then 2x2 max pool.
    p2 = _patches_nhwc(y1, 5, 5)                       # [N*100, 150] bf16
    y2 = conv_bn_relu(p2, params["conv2_w"])           # [N*100, 16]  bf16
    y2 = _max_pool2x2_nhwc(y2.reshape(N, 10, 10, 16))  # [N, 5, 5, 16]

    # Flatten in NHWC order; fc1 weight rows were permuted once host-side so this
    # matches PyTorch's x.view(N, -1) CHW flatten without a per-forward transpose.
    y2 = y2.reshape(N, 16 * 5 * 5)

    # fc1 -> relu -> fc2 -> relu -> fc3, fused into a single kernel.
    return fc_stack(y2, params["fc1_w"], params["fc1_b"],
                    params["fc2_w"], params["fc2_b"],
                    params["fc3_w"], params["fc3_b"])


# -------------------------- parameter preparation ------------------------------

def prepare_params(pt):
    """One-time host-side conversion of PyTorch-layout f32 parameters into
    kernel-ready form: weight_quant/bias_quant (bf16 round-to-nearest), matmul
    transposes, and the NHWC row permutation of the fc1 weight."""
    # Conv: [Cout, Cin, KH, KW] -> [Cin*KH*KW, Cout]; row order (cin, kh, kw)
    # matches the patch feature order produced by conv_general_dilated_patches.
    conv1_w = pt["conv1"].reshape(6, -1).T
    conv2_w = pt["conv2"].reshape(16, -1).T
    # fc1: PyTorch flattens [N,16,5,5] as (c, h, w); our activations flatten NHWC
    # as (h, w, c) -> permute the 400 input rows once.
    fc1_w = pt["fc1"].T.reshape(16, 5, 5, 120).transpose(1, 2, 0, 3).reshape(400, 120)
    return {
        "conv1_w": _q(conv1_w),
        "conv2_w": _q(conv2_w),
        "fc1_w": _q(fc1_w),        "fc1_b": _q(pt["fc1_b"].reshape(1, -1)),
        "fc2_w": _q(pt["fc2"].T),  "fc2_b": _q(pt["fc2_b"].reshape(1, -1)),
        "fc3_w": _q(pt["fc3"].T),  "fc3_b": _q(pt["fc3_b"].reshape(1, -1)),
    }


def _uniform(key, shape, fan_in):
    bound = float(fan_in) ** -0.5
    return jax.random.uniform(key, shape, jnp.float32, -bound, bound)


# ----------------------------------- main ---------------------------------------

if __name__ == "__main__":
    key = jax.random.PRNGKey(0)
    (kx, kc1, kc2, kw1, kb1, kw2, kb2, kw3, kb3) = jax.random.split(key, 9)

    # LeNet expects 32x32 single-channel images (so fc1 sees 16*5*5 = 400).
    x = jax.random.normal(kx, (2, 1, 32, 32), jnp.float32)

    # Parameters in PyTorch layout (conv: [Cout,Cin,KH,KW]; linear: [Dout,Din]).
    torch_params = {
        "conv1": _uniform(kc1, (6, 1, 5, 5), 1 * 5 * 5),
        "conv2": _uniform(kc2, (16, 6, 5, 5), 6 * 5 * 5),
        "fc1": _uniform(kw1, (120, 400), 400), "fc1_b": _uniform(kb1, (120,), 400),
        "fc2": _uniform(kw2, (84, 120), 120),  "fc2_b": _uniform(kb2, (84,), 120),
        "fc3": _uniform(kw3, (10, 84), 84),    "fc3_b": _uniform(kb3, (10,), 84),
    }
    params = prepare_params(torch_params)

    out = jax.jit(qlenet_forward)(x, params)
    out = jax.block_until_ready(out)
    assert out.shape == (2, 10) and out.dtype == jnp.float32
    print("KERNEL_OK")
</pallas_src>

<mosaic_0001>
module attributes {stable_mosaic.version = 11 : i64} {
  func.func @_conv_bn_relu_kernel(%arg0: memref<1568x25xbf16, #tpu.memory_space<vmem>>, %arg1: memref<25x6xbf16, #tpu.memory_space<vmem>>, %arg2: memref<1568x6xbf16, #tpu.memory_space<vmem>>) attributes {dimension_semantics = [], scalar_prefetch = 0 : i64, scratch_operands = 0 : i64, tpu.core_type = #tpu.core_type<tc>} {
    %c0 = arith.constant 0 : index
    %c0_0 = arith.constant 0 : index
    %0 = vector.load %arg0[%c0, %c0_0] : memref<1568x25xbf16, #tpu.memory_space<vmem>>, vector<1568x25xbf16>
    %c0_1 = arith.constant 0 : index
    %c0_2 = arith.constant 0 : index
    %1 = vector.load %arg1[%c0_1, %c0_2] : memref<25x6xbf16, #tpu.memory_space<vmem>>, vector<25x6xbf16>
    %cst = arith.constant dense<0.000000e+00> : vector<1568x6xf32>
    %2 = tpu.matmul %0, %1, %cst {dimension_numbers = #tpu.dot_dimension_numbers<[1], [0], [0], [1], [0, 0, 1, 1], [], []>} : vector<1568x25xbf16>, vector<25x6xbf16>, vector<1568x6xf32> -> vector<1568x6xf32>
    %3 = arith.truncf %2 : vector<1568x6xf32> to vector<1568x6xbf16>
    %4 = arith.extf %3 : vector<1568x6xbf16> to vector<1568x6xf32>
    %cst_3 = arith.constant dense<0.000000e+00> : vector<6xf32>
    %5 = vector.multi_reduction <add>, %4, %cst_3 [0] : vector<1568x6xf32> to vector<6xf32>
    %6 = vector.shape_cast %5 : vector<6xf32> to vector<1x6xf32>
    %7 = arith.mulf %4, %4 : vector<1568x6xf32>
    %cst_4 = arith.constant dense<0.000000e+00> : vector<6xf32>
    %8 = vector.multi_reduction <add>, %7, %cst_4 [0] : vector<1568x6xf32> to vector<6xf32>
    %9 = vector.shape_cast %8 : vector<6xf32> to vector<1x6xf32>
    %cst_5 = arith.constant 6.37755089E-4 : f32
    %10 = vector.broadcast %cst_5 : f32 to vector<1x6xf32>
    %11 = arith.mulf %6, %10 : vector<1x6xf32>
    %cst_6 = arith.constant 6.37755089E-4 : f32
    %12 = vector.broadcast %cst_6 : f32 to vector<1x6xf32>
    %13 = arith.mulf %9, %12 : vector<1x6xf32>
    %14 = arith.mulf %11, %11 : vector<1x6xf32>
    %15 = arith.subf %13, %14 : vector<1x6xf32>
    %16 = vector.broadcast %11 : vector<1x6xf32> to vector<1568x6xf32>
    %17 = arith.subf %4, %16 : vector<1568x6xf32>
    %cst_7 = arith.constant 9.99999974E-6 : f32
    %18 = vector.broadcast %cst_7 : f32 to vector<1x6xf32>
    %19 = arith.addf %15, %18 : vector<1x6xf32>
    %20 = math.rsqrt %19 : vector<1x6xf32>
    %21 = vector.broadcast %20 : vector<1x6xf32> to vector<1568x6xf32>
    %22 = arith.mulf %17, %21 : vector<1568x6xf32>
    %23 = arith.truncf %22 : vector<1568x6xf32> to vector<1568x6xbf16>
    %cst_8 = arith.constant 0.000000e+00 : bf16
    %24 = vector.broadcast %cst_8 : bf16 to vector<1568x6xbf16>
    %25 = arith.maximumf %23, %24 : vector<1568x6xbf16>
    %c0_9 = arith.constant 0 : index
    %c0_10 = arith.constant 0 : index
    %26 = vector.load %arg2[%c0_9, %c0_10] : memref<1568x6xbf16, #tpu.memory_space<vmem>>, vector<1568x6xbf16>
    tpu.vector_store %arg2[%c0_9, %c0_10], %25 {strides = array<i32>} : memref<1568x6xbf16, #tpu.memory_space<vmem>>, vector<1568x6xbf16>,
    return
  }
}

module attributes {stable_mosaic.version = 11 : i64} {
  func.func @_conv_bn_relu_kernel(%arg0: memref<200x150xbf16, #tpu.memory_space<vmem>>, %arg1: memref<150x16xbf16, #tpu.memory_space<vmem>>, %arg2: memref<200x16xbf16, #tpu.memory_space<vmem>>) attributes {dimension_semantics = [], scalar_prefetch = 0 : i64, scratch_operands = 0 : i64, tpu.core_type = #tpu.core_type<tc>} {
    %c0 = arith.constant 0 : index
    %c0_0 = arith.constant 0 : index
    %0 = vector.load %arg0[%c0, %c0_0] : memref<200x150xbf16, #tpu.memory_space<vmem>>, vector<200x150xbf16>
    %c0_1 = arith.constant 0 : index
    %c0_2 = arith.constant 0 : index
    %1 = vector.load %arg1[%c0_1, %c0_2] : memref<150x16xbf16, #tpu.memory_space<vmem>>, vector<150x16xbf16>
    %cst = arith.constant dense<0.000000e+00> : vector<200x16xf32>
    %2 = tpu.matmul %0, %1, %cst {dimension_numbers = #tpu.dot_dimension_numbers<[1], [0], [0], [1], [0, 0, 1, 1], [], []>} : vector<200x150xbf16>, vector<150x16xbf16>, vector<200x16xf32> -> vector<200x16xf32>
    %3 = arith.truncf %2 : vector<200x16xf32> to vector<200x16xbf16>
    %4 = arith.extf %3 : vector<200x16xbf16> to vector<200x16xf32>
    %cst_3 = arith.constant dense<0.000000e+00> : vector<16xf32>
    %5 = vector.multi_reduction <add>, %4, %cst_3 [0] : vector<200x16xf32> to vector<16xf32>
    %6 = vector.shape_cast %5 : vector<16xf32> to vector<1x16xf32>
    %7 = arith.mulf %4, %4 : vector<200x16xf32>
    %cst_4 = arith.constant dense<0.000000e+00> : vector<16xf32>
    %8 = vector.multi_reduction <add>, %7, %cst_4 [0] : vector<200x16xf32> to vector<16xf32>
    %9 = vector.shape_cast %8 : vector<16xf32> to vector<1x16xf32>
    %cst_5 = arith.constant 5.000000e-03 : f32
    %10 = vector.broadcast %cst_5 : f32 to vector<1x16xf32>
    %11 = arith.mulf %6, %10 : vector<1x16xf32>
    %cst_6 = arith.constant 5.000000e-03 : f32
    %12 = vector.broadcast %cst_6 : f32 to vector<1x16xf32>
    %13 = arith.mulf %9, %12 : vector<1x16xf32>
    %14 = arith.mulf %11, %11 : vector<1x16xf32>
    %15 = arith.subf %13, %14 : vector<1x16xf32>
    %16 = vector.broadcast %11 : vector<1x16xf32> to vector<200x16xf32>
    %17 = arith.subf %4, %16 : vector<200x16xf32>
    %cst_7 = arith.constant 9.99999974E-6 : f32
    %18 = vector.broadcast %cst_7 : f32 to vector<1x16xf32>
    %19 = arith.addf %15, %18 : vector<1x16xf32>
    %20 = math.rsqrt %19 : vector<1x16xf32>
    %21 = vector.broadcast %20 : vector<1x16xf32> to vector<200x16xf32>
    %22 = arith.mulf %17, %21 : vector<200x16xf32>
    %23 = arith.truncf %22 : vector<200x16xf32> to vector<200x16xbf16>
    %cst_8 = arith.constant 0.000000e+00 : bf16
    %24 = vector.broadcast %cst_8 : bf16 to vector<200x16xbf16>
    %25 = arith.maximumf %23, %24 : vector<200x16xbf16>
    %c0_9 = arith.constant 0 : index
    %c0_10 = arith.constant 0 : index
    %26 = vector.load %arg2[%c0_9, %c0_10] : memref<200x16xbf16, #tpu.memory_space<vmem>>, vector<200x16xbf16>
    tpu.vector_store %arg2[%c0_9, %c0_10], %25 {strides = array<i32>} : memref<200x16xbf16, #tpu.memory_space<vmem>>, vector<200x16xbf16>,
    return
  }
}

module attributes {stable_mosaic.version = 11 : i64} {
  func.func @_fc_stack_kernel(%arg0: memref<2x400xbf16, #tpu.memory_space<vmem>>, %arg1: memref<400x120xbf16, #tpu.memory_space<vmem>>, %arg2: memref<1x120xbf16, #tpu.memory_space<vmem>>, %arg3: memref<120x84xbf16, #tpu.memory_space<vmem>>, %arg4: memref<1x84xbf16, #tpu.memory_space<vmem>>, %arg5: memref<84x10xbf16, #tpu.memory_space<vmem>>, %arg6: memref<1x10xbf16, #tpu.memory_space<vmem>>, %arg7: memref<2x10xf32, #tpu.memory_space<vmem>>) attributes {dimension_semantics = [], scalar_prefetch = 0 : i64, scratch_operands = 0 : i64, tpu.core_type = #tpu.core_type<tc>} {
    %c0 = arith.constant 0 : index
    %c0_0 = arith.constant 0 : index
    %0 = vector.load %arg0[%c0, %c0_0] : memref<2x400xbf16, #tpu.memory_space<vmem>>, vector<2x400xbf16>
    %c0_1 = arith.constant 0 : index
    %c0_2 = arith.constant 0 : index
    %1 = vector.load %arg1[%c0_1, %c0_2] : memref<400x120xbf16, #tpu.memory_space<vmem>>, vector<400x120xbf16>
    %cst = arith.constant dense<0.000000e+00> : vector<2x120xf32>
    %2 = tpu.matmul %0, %1, %cst {dimension_numbers = #tpu.dot_dimension_numbers<[1], [0], [0], [1], [0, 0, 1, 1], [], []>} : vector<2x400xbf16>, vector<400x120xbf16>, vector<2x120xf32> -> vector<2x120xf32>
    %c0_3 = arith.constant 0 : index
    %c0_4 = arith.constant 0 : index
    %3 = vector.load %arg2[%c0_3, %c0_4] : memref<1x120xbf16, #tpu.memory_space<vmem>>, vector<1x120xbf16>
    %4 = arith.extf %3 : vector<1x120xbf16> to vector<1x120xf32>
    %5 = vector.broadcast %4 : vector<1x120xf32> to vector<2x120xf32>
    %6 = arith.addf %2, %5 : vector<2x120xf32>
    %7 = arith.truncf %6 : vector<2x120xf32> to vector<2x120xbf16>
    %cst_5 = arith.constant 0.000000e+00 : bf16
    %8 = vector.broadcast %cst_5 : bf16 to vector<2x120xbf16>
    %9 = arith.maximumf %7, %8 : vector<2x120xbf16>
    %c0_6 = arith.constant 0 : index
    %c0_7 = arith.constant 0 : index
    %10 = vector.load %arg3[%c0_6, %c0_7] : memref<120x84xbf16, #tpu.memory_space<vmem>>, vector<120x84xbf16>
    %cst_8 = arith.constant dense<0.000000e+00> : vector<2x84xf32>
    %11 = tpu.matmul %9, %10, %cst_8 {dimension_numbers = #tpu.dot_dimension_numbers<[1], [0], [0], [1], [0, 0, 1, 1], [], []>} : vector<2x120xbf16>, vector<120x84xbf16>, vector<2x84xf32> -> vector<2x84xf32>
    %c0_9 = arith.constant 0 : index
    %c0_10 = arith.constant 0 : index
    %12 = vector.load %arg4[%c0_9, %c0_10] : memref<1x84xbf16, #tpu.memory_space<vmem>>, vector<1x84xbf16>
    %13 = arith.extf %12 : vector<1x84xbf16> to vector<1x84xf32>
    %14 = vector.broadcast %13 : vector<1x84xf32> to vector<2x84xf32>
    %15 = arith.addf %11, %14 : vector<2x84xf32>
    %16 = arith.truncf %15 : vector<2x84xf32> to vector<2x84xbf16>
    %cst_11 = arith.constant 0.000000e+00 : bf16
    %17 = vector.broadcast %cst_11 : bf16 to vector<2x84xbf16>
    %18 = arith.maximumf %16, %17 : vector<2x84xbf16>
    %c0_12 = arith.constant 0 : index
    %c0_13 = arith.constant 0 : index
    %19 = vector.load %arg5[%c0_12, %c0_13] : memref<84x10xbf16, #tpu.memory_space<vmem>>, vector<84x10xbf16>
    %cst_14 = arith.constant dense<0.000000e+00> : vector<2x10xf32>
    %20 = tpu.matmul %18, %19, %cst_14 {dimension_numbers = #tpu.dot_dimension_numbers<[1], [0], [0], [1], [0, 0, 1, 1], [], []>} : vector<2x84xbf16>, vector<84x10xbf16>, vector<2x10xf32> -> vector<2x10xf32>
    %c0_15 = arith.constant 0 : index
    %c0_16 = arith.constant 0 : index
    %21 = vector.load %arg6[%c0_15, %c0_16] : memref<1x10xbf16, #tpu.memory_space<vmem>>, vector<1x10xbf16>
    %22 = arith.extf %21 : vector<1x10xbf16> to vector<1x10xf32>
    %23 = vector.broadcast %22 : vector<1x10xf32> to vector<2x10xf32>
    %24 = arith.addf %20, %23 : vector<2x10xf32>
    %25 = arith.truncf %24 : vector<2x10xf32> to vector<2x10xbf16>
    %26 = arith.extf %25 : vector<2x10xbf16> to vector<2x10xf32>
    %c0_17 = arith.constant 0 : index
    %c0_18 = arith.constant 0 : index
    %27 = vector.load %arg7[%c0_17, %c0_18] : memref<2x10xf32, #tpu.memory_space<vmem>>, vector<2x10xf32>
    tpu.vector_store %arg7[%c0_17, %c0_18], %26 {strides = array<i32>} : memref<2x10xf32, #tpu.memory_space<vmem>>, vector<2x10xf32>,
    return
  }
}

</mosaic_0001>

<llo_original>
// kernel: qlenet_forward.3
$region0: #{qlenet_forward.3}
  #allocation0 [shape = 'u32[]', space=smem, size = 0x4, offset = 0x4, fixed_abs, tag = 'smem constant byte address 0x4 - core index']
  #allocation1 [shape = 'u32[144,128]{1,0:T(1,128)}', space=vmem, size = 0x12000, scoped, tag = 'internal scratch']
  %s0 = inlined_call_operand.vmem [shape: bf16[1568,25], index: 0, kind: input, shape index: {}]
  %s1 = inlined_call_operand.vmem [shape: bf16[25,6], index: 1, kind: input, shape index: {}]
  %s2 = inlined_call_operand.vmem [shape: bf16[1568,6], index: 2, kind: output, shape index: {}]
  %s3 = sld [smem:[#allocation0]]
  $region18: #{qlenet_forward.3} parent=0
    _
  %s5 = ssub.s32 1, %s3
  %s6 = scalar_select 0, %s5, %s3
  // Predicated region
  $region2: #{qlenet_forward.3} parent=0 // pred_check
    _
  $region3: #{qlenet_forward.3} parent=0 // pred_check_branch
    %8 = sbr.rel (0) target = $region5
  $region4: #{qlenet_forward.3} parent=0 // pred_region
    _
  $region5: #{qlenet_forward.3} parent=0 // pred_fallthru
    _
  // Predicated region
  $region6: #{qlenet_forward.3} parent=0 // pred_check
    _
  $region7: #{qlenet_forward.3} parent=0 // pred_check_branch
    %10 = sbr.rel (0) target = $region9
  $region8: #{qlenet_forward.3} parent=0 // pred_region
    _
  $region9: #{qlenet_forward.3} parent=0 // pred_fallthru
    _
  %v12 = vld [vmem:[%s0] sm:$0xf]
  %v13 = vld [vmem:[%s0 + $0x4] sm:$0xf]
  %v14 = vld [vmem:[%s0 + $0x8] sm:$0xf]
  %v15 = vld [vmem:[%s0 + $0xc] sm:$0xf]
  %v16 = vld [vmem:[%s0 + $0x10] sm:$0xf]
  %v17 = vld [vmem:[%s0 + $0x14] sm:$0xf]
  %v18 = vld [vmem:[%s0 + $0x18] sm:$0xf]
  %v19 = vld [vmem:[%s0 + $0x1c] sm:$0xf]
  %v20 = vld [vmem:[%s0 + $0x20] sm:$0xf]
  %v21 = vld [vmem:[%s0 + $0x24] sm:$0xf]
  %v22 = vld [vmem:[%s0 + $0x28] sm:$0xf]
  %v23 = vld [vmem:[%s0 + $0x2c] sm:$0xf]
  %v24 = vld [vmem:[%s0 + $0x30] sm:$0xf]
  %v25 = vld [vmem:[%s0 + $0x34] sm:$0xf]
  %v26 = vld [vmem:[%s0 + $0x38] sm:$0xf]
  %v27 = vld [vmem:[%s0 + $0x3c] sm:$0xf]
  %v28 = vld [vmem:[%s0 + $0x40] sm:$0xf]
  %v29 = vld [vmem:[%s0 + $0x44] sm:$0xf]
  %v30 = vld [vmem:[%s0 + $0x48] sm:$0xf]
  %v31 = vld [vmem:[%s0 + $0x4c] sm:$0xf]
  %v32 = vld [vmem:[%s0 + $0x50] sm:$0xf]
  %v33 = vld [vmem:[%s0 + $0x54] sm:$0xf]
  %v34 = vld [vmem:[%s0 + $0x58] sm:$0xf]
  %v35 = vld [vmem:[%s0 + $0x5c] sm:$0xf]
  %v36 = vld [vmem:[%s0 + $0x60] sm:$0xf]
  %v37 = vld [vmem:[%s0 + $0x64] sm:$0xf]
  %v38 = vld [vmem:[%s0 + $0x68] sm:$0xf]
  %v39 = vld [vmem:[%s0 + $0x6c] sm:$0xf]
  %v40 = vld [vmem:[%s0 + $0x70] sm:$0xf]
  %v41 = vld [vmem:[%s0 + $0x74] sm:$0xf]
  %v42 = vld [vmem:[%s0 + $0x78] sm:$0xf]
  %v43 = vld [vmem:[%s0 + $0x7c] sm:$0xf]
  %v44 = vld [vmem:[%s0 + $0x80] sm:$0xf]
  %v45 = vld [vmem:[%s0 + $0x84] sm:$0xf]
  %v46 = vld [vmem:[%s0 + $0x88] sm:$0xf]
  %v47 = vld [vmem:[%s0 + $0x8c] sm:$0xf]
  %v48 = vld [vmem:[%s0 + $0x90] sm:$0xf]
  %v49 = vld [vmem:[%s0 + $0x94] sm:$0xf]
  %v50 = vld [vmem:[%s0 + $0x98] sm:$0xf]
  %v51 = vld [vmem:[%s0 + $0x9c] sm:$0xf]
  %v52 = vld [vmem:[%s0 + $0xa0] sm:$0xf]
  %v53 = vld [vmem:[%s0 + $0xa4] sm:$0xf]
  %v54 = vld [vmem:[%s0 + $0xa8] sm:$0xf]
  %v55 = vld [vmem:[%s0 + $0xac] sm:$0xf]
  %v56 = vld [vmem:[%s0 + $0xb0] sm:$0xf]
  %v57 = vld [vmem:[%s0 + $0xb4] sm:$0xf]
  %v58 = vld [vmem:[%s0 + $0xb8] sm:$0xf]
  %v59 = vld [vmem:[%s0 + $0xbc] sm:$0xf]
  %v60 = vld [vmem:[%s0 + $0xc0] sm:$0xf]
  %v61 = vld [vmem:[%s0 + $0xc4] sm:$0xf]
  %v62 = vld [vmem:[%s0 + $0xc8] sm:$0xf]
  %v63 = vld [vmem:[%s0 + $0xcc] sm:$0xf]
  %v64 = vld [vmem:[%s0 + $0xd0] sm:$0xf]
  %v65 = vld [vmem:[%s0 + $0xd4] sm:$0xf]
  %v66 = vld [vmem:[%s0 + $0xd8] sm:$0xf]
  %v67 = vld [vmem:[%s0 + $0xdc] sm:$0xf]
  %v68 = vld [vmem:[%s0 + $0xe0] sm:$0xf]
  %v69 = vld [vmem:[%s0 + $0xe4] sm:$0xf]
  %v70 = vld [vmem:[%s0 + $0xe8] sm:$0xf]
  %v71 = vld [vmem:[%s0 + $0xec] sm:$0xf]
  %v72 = vld [vmem:[%s0 + $0xf0] sm:$0xf]
  %v73 = vld [vmem:[%s0 + $0xf4] sm:$0xf]
  %v74 = vld [vmem:[%s0 + $0xf8] sm:$0xf]
  %v75 = vld [vmem:[%s0 + $0xfc] sm:$0xf]
  %v76 = vld [vmem:[%s0 + $0x100] sm:$0xf]
  %v77 = vld [vmem:[%s0 + $0x104] sm:$0xf]
  %v78 = vld [vmem:[%s0 + $0x108] sm:$0xf]
  %v79 = vld [vmem:[%s0 + $0x10c] sm:$0xf]
  %v80 = vld [vmem:[%s0 + $0x110] sm:$0xf]
  %v81 = vld [vmem:[%s0 + $0x114] sm:$0xf]
  %v82 = vld [vmem:[%s0 + $0x118] sm:$0xf]
  %v83 = vld [vmem:[%s0 + $0x11c] sm:$0xf]
  %v84 = vld [vmem:[%s0 + $0x120] sm:$0xf]
  %v85 = vld [vmem:[%s0 + $0x124] sm:$0xf]
  %v86 = vld [vmem:[%s0 + $0x128] sm:$0xf]
  %v87 = vld [vmem:[%s0 + $0x12c] sm:$0xf]
  %v88 = vld [vmem:[%s0 + $0x130] sm:$0xf]
  %v89 = vld [vmem:[%s0 + $0x134] sm:$0xf]
  %v90 = vld [vmem:[%s0 + $0x138] sm:$0xf]
  %v91 = vld [vmem:[%s0 + $0x13c] sm:$0xf]
  %v92 = vld [vmem:[%s0 + $0x140] sm:$0xf]
  %v93 = vld [vmem:[%s0 + $0x144] sm:$0xf]
  %v94 = vld [vmem:[%s0 + $0x148] sm:$0xf]
  %v95 = vld [vmem:[%s0 + $0x14c] sm:$0xf]
  %v96 = vld [vmem:[%s0 + $0x150] sm:$0xf]
  %v97 = vld [vmem:[%s0 + $0x154] sm:$0xf]
  %v98 = vld [vmem:[%s0 + $0x158] sm:$0xf]
  %v99 = vld [vmem:[%s0 + $0x15c] sm:$0xf]
  %v100 = vld [vmem:[%s0 + $0x160] sm:$0xf]
  %v101 = vld [vmem:[%s0 + $0x164] sm:$0xf]
  %v102 = vld [vmem:[%s0 + $0x168] sm:$0xf]
  %v103 = vld [vmem:[%s0 + $0x16c] sm:$0xf]
  %v104 = vld [vmem:[%s0 + $0x170] sm:$0xf]
  %v105 = vld [vmem:[%s0 + $0x174] sm:$0xf]
  %v106 = vld [vmem:[%s0 + $0x178] sm:$0xf]
  %v107 = vld [vmem:[%s0 + $0x17c] sm:$0xf]
  %v108 = vld [vmem:[%s0 + $0x180] sm:$0xf]
  %v109 = vld [vmem:[%s0 + $0x184] sm:$0xf]
  %v110 = vld [vmem:[%s0 + $0x188] sm:$0xf]
  %v111 = vld [vmem:[%s0 + $0x18c] sm:$0xf]
  %v112 = vld [vmem:[%s0 + $0x190] sm:$0xf]
  %v113 = vld [vmem:[%s0 + $0x194] sm:$0xf]
  %v114 = vld [vmem:[%s0 + $0x198] sm:$0xf]
  %v115 = vld [vmem:[%s0 + $0x19c] sm:$0xf]
  %v116 = vld [vmem:[%s0 + $0x1a0] sm:$0xf]
  %v117 = vld [vmem:[%s0 + $0x1a4] sm:$0xf]
  %v118 = vld [vmem:[%s0 + $0x1a8] sm:$0xf]
  %v119 = vld [vmem:[%s0 + $0x1ac] sm:$0xf]
  %v120 = vld [vmem:[%s0 + $0x1b0] sm:$0xf]
  %v121 = vld [vmem:[%s0 + $0x1b4] sm:$0xf]
  %v122 = vld [vmem:[%s0 + $0x1b8] sm:$0xf]
  %v123 = vld [vmem:[%s0 + $0x1bc] sm:$0xf]
  %v124 = vld [vmem:[%s0 + $0x1c0] sm:$0xf]
  %v125 = vld [vmem:[%s0 + $0x1c4] sm:$0xf]
  %v126 = vld [vmem:[%s0 + $0x1c8] sm:$0xf]
  %v127 = vld [vmem:[%s0 + $0x1cc] sm:$0xf]
  %v128 = vld [vmem:[%s0 + $0x1d0] sm:$0xf]
  %v129 = vld [vmem:[%s0 + $0x1d4] sm:$0xf]
  %v130 = vld [vmem:[%s0 + $0x1d8] sm:$0xf]
  %v131 = vld [vmem:[%s0 + $0x1dc] sm:$0xf]
  %v132 = vld [vmem:[%s0 + $0x1e0] sm:$0xf]
  %v133 = vld [vmem:[%s0 + $0x1e4] sm:$0xf]
  %v134 = vld [vmem:[%s0 + $0x1e8] sm:$0xf]
  %v135 = vld [vmem:[%s0 + $0x1ec] sm:$0xf]
  %v136 = vld [vmem:[%s0 + $0x1f0] sm:$0xf]
  %v137 = vld [vmem:[%s0 + $0x1f4] sm:$0xf]
  %v138 = vld [vmem:[%s0 + $0x1f8] sm:$0xf]
  %v139 = vld [vmem:[%s0 + $0x1fc] sm:$0xf]
  %v140 = vld [vmem:[%s0 + $0x200] sm:$0xf]
  %v141 = vld [vmem:[%s0 + $0x204] sm:$0xf]
  %v142 = vld [vmem:[%s0 + $0x208] sm:$0xf]
  %v143 = vld [vmem:[%s0 + $0x20c] sm:$0xf]
  %v144 = vld [vmem:[%s0 + $0x210] sm:$0xf]
  %v145 = vld [vmem:[%s0 + $0x214] sm:$0xf]
  %v146 = vld [vmem:[%s0 + $0x218] sm:$0xf]
  %v147 = vld [vmem:[%s0 + $0x21c] sm:$0xf]
  %v148 = vld [vmem:[%s0 + $0x220] sm:$0xf]
  %v149 = vld [vmem:[%s0 + $0x224] sm:$0xf]
  %v150 = vld [vmem:[%s0 + $0x228] sm:$0xf]
  %v151 = vld [vmem:[%s0 + $0x22c] sm:$0xf]
  %v152 = vld [vmem:[%s0 + $0x230] sm:$0xf]
  %v153 = vld [vmem:[%s0 + $0x234] sm:$0xf]
  %v154 = vld [vmem:[%s0 + $0x238] sm:$0xf]
  %v155 = vld [vmem:[%s0 + $0x23c] sm:$0xf]
  %v156 = vld [vmem:[%s0 + $0x240] sm:$0xf]
  %v157 = vld [vmem:[%s0 + $0x244] sm:$0xf]
  %v158 = vld [vmem:[%s0 + $0x248] sm:$0xf]
  %v159 = vld [vmem:[%s0 + $0x24c] sm:$0xf]
  %v160 = vld [vmem:[%s0 + $0x250] sm:$0xf]
  %v161 = vld [vmem:[%s0 + $0x254] sm:$0xf]
  %v162 = vld [vmem:[%s0 + $0x258] sm:$0xf]
  %v163 = vld [vmem:[%s0 + $0x25c] sm:$0xf]
  %v164 = vld [vmem:[%s0 + $0x260] sm:$0xf]
  %v165 = vld [vmem:[%s0 + $0x264] sm:$0xf]
  %v166 = vld [vmem:[%s0 + $0x268] sm:$0xf]
  %v167 = vld [vmem:[%s0 + $0x26c] sm:$0xf]
  %v168 = vld [vmem:[%s0 + $0x270] sm:$0xf]
  %v169 = vld [vmem:[%s0 + $0x274] sm:$0xf]
  %v170 = vld [vmem:[%s0 + $0x278] sm:$0xf]
  %v171 = vld [vmem:[%s0 + $0x27c] sm:$0xf]
  %v172 = vld [vmem:[%s0 + $0x280] sm:$0xf]
  %v173 = vld [vmem:[%s0 + $0x284] sm:$0xf]
  %v174 = vld [vmem:[%s0 + $0x288] sm:$0xf]
  %v175 = vld [vmem:[%s0 + $0x28c] sm:$0xf]
  %v176 = vld [vmem:[%s0 + $0x290] sm:$0xf]
  %v177 = vld [vmem:[%s0 + $0x294] sm:$0xf]
  %v178 = vld [vmem:[%s0 + $0x298] sm:$0xf]
  %v179 = vld [vmem:[%s0 + $0x29c] sm:$0xf]
  %v180 = vld [vmem:[%s0 + $0x2a0] sm:$0xf]
  %v181 = vld [vmem:[%s0 + $0x2a4] sm:$0xf]
  %v182 = vld [vmem:[%s0 + $0x2a8] sm:$0xf]
  %v183 = vld [vmem:[%s0 + $0x2ac] sm:$0xf]
  %v184 = vld [vmem:[%s0 + $0x2b0] sm:$0xf]
  %v185 = vld [vmem:[%s0 + $0x2b4] sm:$0xf]
  %v186 = vld [vmem:[%s0 + $0x2b8] sm:$0xf]
  %v187 = vld [vmem:[%s0 + $0x2bc] sm:$0xf]
  %v188 = vld [vmem:[%s0 + $0x2c0] sm:$0xf]
  %v189 = vld [vmem:[%s0 + $0x2c4] sm:$0xf]
  %v190 = vld [vmem:[%s0 + $0x2c8] sm:$0xf]
  %v191 = vld [vmem:[%s0 + $0x2cc] sm:$0xf]
  %v192 = vld [vmem:[%s0 + $0x2d0] sm:$0xf]
  %v193 = vld [vmem:[%s0 + $0x2d4] sm:$0xf]
  %v194 = vld [vmem:[%s0 + $0x2d8] sm:$0xf]
  %v195 = vld [vmem:[%s0 + $0x2dc] sm:$0xf]
  %v196 = vld [vmem:[%s0 + $0x2e0] sm:$0xf]
  %v197 = vld [vmem:[%s0 + $0x2e4] sm:$0xf]
  %v198 = vld [vmem:[%s0 + $0x2e8] sm:$0xf]
  %v199 = vld [vmem:[%s0 + $0x2ec] sm:$0xf]
  %v200 = vld [vmem:[%s0 + $0x2f0] sm:$0xf]
  %v201 = vld [vmem:[%s0 + $0x2f4] sm:$0xf]
  %v202 = vld [vmem:[%s0 + $0x2f8] sm:$0xf]
  %v203 = vld [vmem:[%s0 + $0x2fc] sm:$0xf]
  %v204 = vld [vmem:[%s0 + $0x300] sm:$0xf]
  %v205 = vld [vmem:[%s0 + $0x304] sm:$0xf]
  %v206 = vld [vmem:[%s0 + $0x308] sm:$0xf]
  %v207 = vld [vmem:[%s0 + $0x30c] sm:$0xf]
  %v208 = vld [vmem:[%s1] sm:$0xf]
  %v209 = vld [vmem:[%s1 + $0x4] sm:$0xf]
  %v210 = vld [vmem:[%s1 + $0x8] sm:$0xf]
  %v211 = vld [vmem:[%s1 + $0xc] sm:$0x1]
  %v408 = vunpack.c.l.b16 %v12
  %v409 = vunpack.c.l.b16 %v13
  %v410 = vunpack.c.l.b16 %v14
  %v411 = vunpack.c.l.b16 %v15
  %v412 = vunpack.c.l.b16 %v16
  %v413 = vunpack.c.l.b16 %v17
  %v414 = vunpack.c.l.b16 %v18
  %v415 = vunpack.c.l.b16 %v19
  %v416 = vunpack.c.l.b16 %v20
  %v417 = vunpack.c.l.b16 %v21
  %v418 = vunpack.c.l.b16 %v22
  %v419 = vunpack.c.l.b16 %v23
  %v420 = vunpack.c.l.b16 %v24
  %v421 = vunpack.c.l.b16 %v25
  %v422 = vunpack.c.l.b16 %v26
  %v423 = vunpack.c.l.b16 %v27
  %v424 = vunpack.c.l.b16 %v28
  %v425 = vunpack.c.l.b16 %v29
  %v426 = vunpack.c.l.b16 %v30
  %v427 = vunpack.c.l.b16 %v31
  %v428 = vunpack.c.l.b16 %v32
  %v429 = vunpack.c.l.b16 %v33
  %v430 = vunpack.c.l.b16 %v34
  %v431 = vunpack.c.l.b16 %v35
  %v432 = vunpack.c.l.b16 %v36
  %v433 = vunpack.c.l.b16 %v37
  %v434 = vunpack.c.l.b16 %v38
  %v435 = vunpack.c.l.b16 %v39
  %v436 = vunpack.c.l.b16 %v40
  %v437 = vunpack.c.l.b16 %v41
  %v438 = vunpack.c.l.b16 %v42
  %v439 = vunpack.c.l.b16 %v43
  %v440 = vunpack.c.l.b16 %v44
  %v441 = vunpack.c.l.b16 %v45
  %v442 = vunpack.c.l.b16 %v46
  %v443 = vunpack.c.l.b16 %v47
  %v444 = vunpack.c.l.b16 %v48
  %v445 = vunpack.c.l.b16 %v49
  %v446 = vunpack.c.l.b16 %v50
  %v447 = vunpack.c.l.b16 %v51
  %v448 = vunpack.c.l.b16 %v52
  %v449 = vunpack.c.l.b16 %v53
  %v450 = vunpack.c.l.b16 %v54
  %v451 = vunpack.c.l.b16 %v55
  %v452 = vunpack.c.l.b16 %v56
  %v453 = vunpack.c.l.b16 %v57
  %v454 = vunpack.c.l.b16 %v58
  %v455 = vunpack.c.l.b16 %v59
  %v456 = vunpack.c.l.b16 %v60
  %v457 = vunpack.c.l.b16 %v61
  %v458 = vunpack.c.l.b16 %v62
  %v459 = vunpack.c.l.b16 %v63
  %v460 = vunpack.c.l.b16 %v64
  %v461 = vunpack.c.l.b16 %v65
  %v462 = vunpack.c.l.b16 %v66
  %v463 = vunpack.c.l.b16 %v67
  %v464 = vunpack.c.l.b16 %v68
  %v465 = vunpack.c.l.b16 %v69
  %v466 = vunpack.c.l.b16 %v70
  %v467 = vunpack.c.l.b16 %v71
  %v468 = vunpack.c.l.b16 %v72
  %v469 = vunpack.c.l.b16 %v73
  %v470 = vunpack.c.l.b16 %v74
  %v471 = vunpack.c.l.b16 %v75
  %v472 = vunpack.c.l.b16 %v76
  %v473 = vunpack.c.l.b16 %v77
  %v474 = vunpack.c.l.b16 %v78
  %v475 = vunpack.c.l.b16 %v79
  %v476 = vunpack.c.l.b16 %v80
  %v477 = vunpack.c.l.b16 %v81
  %v478 = vunpack.c.l.b16 %v82
  %v479 = vunpack.c.l.b16 %v83
  %v480 = vunpack.c.l.b16 %v84
  %v481 = vunpack.c.l.b16 %v85
  %v482 = vunpack.c.l.b16 %v86
  %v483 = vunpack.c.l.b16 %v87
  %v484 = vunpack.c.l.b16 %v88
  %v485 = vunpack.c.l.b16 %v89
  %v486 = vunpack.c.l.b16 %v90
  %v487 = vunpack.c.l.b16 %v91
  %v488 = vunpack.c.l.b16 %v92
  %v489 = vunpack.c.l.b16 %v93
  %v490 = vunpack.c.l.b16 %v94
  %v491 = vunpack.c.l.b16 %v95
  %v492 = vunpack.c.l.b16 %v96
  %v493 = vunpack.c.l.b16 %v97
  %v494 = vunpack.c.l.b16 %v98
  %v495 = vunpack.c.l.b16 %v99
  %v496 = vunpack.c.l.b16 %v100
  %v497 = vunpack.c.l.b16 %v101
  %v498 = vunpack.c.l.b16 %v102
  %v499 = vunpack.c.l.b16 %v103
  %v500 = vunpack.c.l.b16 %v104
  %v501 = vunpack.c.l.b16 %v105
  %v502 = vunpack.c.l.b16 %v106
  %v503 = vunpack.c.l.b16 %v107
  %v504 = vunpack.c.l.b16 %v108
  %v505 = vunpack.c.l.b16 %v109
  %v506 = vunpack.c.l.b16 %v110
  %v507 = vunpack.c.l.b16 %v111
  %v508 = vunpack.c.l.b16 %v112
  %v509 = vunpack.c.l.b16 %v113
  %v510 = vunpack.c.l.b16 %v114
  %v511 = vunpack.c.l.b16 %v115
  %v512 = vunpack.c.l.b16 %v116
  %v513 = vunpack.c.l.b16 %v117
  %v514 = vunpack.c.l.b16 %v118
  %v515 = vunpack.c.l.b16 %v119
  %v516 = vunpack.c.l.b16 %v120
  %v517 = vunpack.c.l.b16 %v121
  %v518 = vunpack.c.l.b16 %v122
  %v519 = vunpack.c.l.b16 %v123
  %v520 = vunpack.c.l.b16 %v124
  %v521 = vunpack.c.l.b16 %v125
  %v522 = vunpack.c.l.b16 %v126
  %v523 = vunpack.c.l.b16 %v127
  %v524 = vunpack.c.l.b16 %v128
  %v525 = vunpack.c.l.b16 %v129
  %v526 = vunpack.c.l.b16 %v130
  %v527 = vunpack.c.l.b16 %v131
  %v528 = vunpack.c.l.b16 %v132
  %v529 = vunpack.c.l.b16 %v133
  %v530 = vunpack.c.l.b16 %v134
  %v531 = vunpack.c.l.b16 %v135
  %v532 = vunpack.c.l.b16 %v136
  %v533 = vunpack.c.l.b16 %v137
  %v534 = vunpack.c.l.b16 %v138
  %v535 = vunpack.c.l.b16 %v139
  %v536 = vunpack.c.l.b16 %v140
  %v537 = vunpack.c.l.b16 %v141
  %v538 = vunpack.c.l.b16 %v142
  %v539 = vunpack.c.l.b16 %v143
  %v540 = vunpack.c.l.b16 %v144
  %v541 = vunpack.c.l.b16 %v145
  %v542 = vunpack.c.l.b16 %v146
  %v543 = vunpack.c.l.b16 %v147
  %v544 = vunpack.c.l.b16 %v148
  %v545 = vunpack.c.l.b16 %v149
  %v546 = vunpack.c.l.b16 %v150
  %v547 = vunpack.c.l.b16 %v151
  %v548 = vunpack.c.l.b16 %v152
  %v549 = vunpack.c.l.b16 %v153
  %v550 = vunpack.c.l.b16 %v154
  %v551 = vunpack.c.l.b16 %v155
  %v552 = vunpack.c.l.b16 %v156
  %v553 = vunpack.c.l.b16 %v157
  %v554 = vunpack.c.l.b16 %v158
  %v555 = vunpack.c.l.b16 %v159
  %v556 = vunpack.c.l.b16 %v160
  %v557 = vunpack.c.l.b16 %v161
  %v558 = vunpack.c.l.b16 %v162
  %v559 = vunpack.c.l.b16 %v163
  %v560 = vunpack.c.l.b16 %v164
  %v561 = vunpack.c.l.b16 %v165
  %v562 = vunpack.c.l.b16 %v166
  %v563 = vunpack.c.l.b16 %v167
  %v564 = vunpack.c.l.b16 %v168
  %v565 = vunpack.c.l.b16 %v169
  %v566 = vunpack.c.l.b16 %v170
  %v567 = vunpack.c.l.b16 %v171
  %v568 = vunpack.c.l.b16 %v172
  %v569 = vunpack.c.l.b16 %v173
  %v570 = vunpack.c.l.b16 %v174
  %v571 = vunpack.c.l.b16 %v175
  %v572 = vunpack.c.l.b16 %v176
  %v573 = vunpack.c.l.b16 %v177
  %v574 = vunpack.c.l.b16 %v178
  %v575 = vunpack.c.l.b16 %v179
  %v576 = vunpack.c.l.b16 %v180
  %v577 = vunpack.c.l.b16 %v181
  %v578 = vunpack.c.l.b16 %v182
  %v579 = vunpack.c.l.b16 %v183
  %v580 = vunpack.c.l.b16 %v184
  %v581 = vunpack.c.l.b16 %v185
  %v582 = vunpack.c.l.b16 %v186
  %v583 = vunpack.c.l.b16 %v187
  %v584 = vunpack.c.l.b16 %v188
  %v585 = vunpack.c.l.b16 %v189
  %v586 = vunpack.c.l.b16 %v190
  %v587 = vunpack.c.l.b16 %v191
  %v588 = vunpack.c.l.b16 %v192
  %v589 = vunpack.c.l.b16 %v193
  %v590 = vunpack.c.l.b16 %v194
  %v591 = vunpack.c.l.b16 %v195
  %v592 = vunpack.c.l.b16 %v196
  %v593 = vunpack.c.l.b16 %v197
  %v594 = vunpack.c.l.b16 %v198
  %v595 = vunpack.c.l.b16 %v199
  %v596 = vunpack.c.l.b16 %v200
  %v597 = vunpack.c.l.b16 %v201
  %v598 = vunpack.c.l.b16 %v202
  %v599 = vunpack.c.l.b16 %v203
  %v600 = vunpack.c.l.b16 %v204
  %v601 = vunpack.c.l.b16 %v205
  %v602 = vunpack.c.l.b16 %v206
  %v603 = vunpack.c.l.b16 %v207
  %v604 = vpack.c.b16 %v409, %v408
  %v605 = vpack.c.b16 %v411, %v410
  %v606 = vpack.c.b16 %v413, %v412
  %v607 = vpack.c.b16 %v415, %v414
  %v608 = vpack.c.b16 %v417, %v416
  %v609 = vpack.c.b16 %v419, %v418
  %v610 = vpack.c.b16 %v421, %v420
  %v611 = vpack.c.b16 %v423, %v422
  %v612 = vpack.c.b16 %v425, %v424
  %v613 = vpack.c.b16 %v427, %v426
  %v614 = vpack.c.b16 %v429, %v428
  %v615 = vpack.c.b16 %v431, %v430
  %v616 = vpack.c.b16 %v433, %v432
  %v617 = vpack.c.b16 %v435, %v434
  %v618 = vpack.c.b16 %v437, %v436
  %v619 = vpack.c.b16 %v439, %v438
  %v620 = vpack.c.b16 %v441, %v440
  %v621 = vpack.c.b16 %v443, %v442
  %v622 = vpack.c.b16 %v445, %v444
  %v623 = vpack.c.b16 %v447, %v446
  %v624 = vpack.c.b16 %v449, %v448
  %v625 = vpack.c.b16 %v451, %v450
  %v626 = vpack.c.b16 %v453, %v452
  %v627 = vpack.c.b16 %v455, %v454
  %v628 = vpack.c.b16 %v457, %v456
  %v629 = vpack.c.b16 %v459, %v458
  %v630 = vpack.c.b16 %v461, %v460
  %v631 = vpack.c.b16 %v463, %v462
  %v632 = vpack.c.b16 %v465, %v464
  %v633 = vpack.c.b16 %v467, %v466
  %v634 = vpack.c.b16 %v469, %v468
  %v635 = vpack.c.b16 %v471, %v470
  %v636 = vpack.c.b16 %v473, %v472
  %v637 = vpack.c.b16 %v475, %v474
  %v638 = vpack.c.b16 %v477, %v476
  %v639 = vpack.c.b16 %v479, %v478
  %v640 = vpack.c.b16 %v481, %v480
  %v641 = vpack.c.b16 %v483, %v482
  %v642 = vpack.c.b16 %v485, %v484
  %v643 = vpack.c.b16 %v487, %v486
  %v644 = vpack.c.b16 %v489, %v488
  %v645 = vpack.c.b16 %v491, %v490
  %v646 = vpack.c.b16 %v493, %v492
  %v647 = vpack.c.b16 %v495, %v494
  %v648 = vpack.c.b16 %v497, %v496
  %v649 = vpack.c.b16 %v499, %v498
  %v650 = vpack.c.b16 %v501, %v500
  %v651 = vpack.c.b16 %v503, %v502
  %v652 = vpack.c.b16 %v505, %v504
  %v653 = vpack.c.b16 %v507, %v506
  %v654 = vpack.c.b16 %v509, %v508
  %v655 = vpack.c.b16 %v511, %v510
  %v656 = vpack.c.b16 %v513, %v512
  %v657 = vpack.c.b16 %v515, %v514
  %v658 = vpack.c.b16 %v517, %v516
  %v659 = vpack.c.b16 %v519, %v518
  %v660 = vpack.c.b16 %v521, %v520
  %v661 = vpack.c.b16 %v523, %v522
  %v662 = vpack.c.b16 %v525, %v524
  %v663 = vpack.c.b16 %v527, %v526
  %v664 = vpack.c.b16 %v529, %v528
  %v665 = vpack.c.b16 %v531, %v530
  %v666 = vpack.c.b16 %v533, %v532
  %v667 = vpack.c.b16 %v535, %v534
  %v668 = vpack.c.b16 %v537, %v536
  %v669 = vpack.c.b16 %v539, %v538
  %v670 = vpack.c.b16 %v541, %v540
  %v671 = vpack.c.b16 %v543, %v542
  %v672 = vpack.c.b16 %v545, %v544
  %v673 = vpack.c.b16 %v547, %v546
  %v674 = vpack.c.b16 %v549, %v548
  %v675 = vpack.c.b16 %v551, %v550
  %v676 = vpack.c.b16 %v553, %v552
  %v677 = vpack.c.b16 %v555, %v554
  %v678 = vpack.c.b16 %v557, %v556
  %v679 = vpack.c.b16 %v559, %v558
  %v680 = vpack.c.b16 %v561, %v560
  %v681 = vpack.c.b16 %v563, %v562
  %v682 = vpack.c.b16 %v565, %v564
  %v683 = vpack.c.b16 %v567, %v566
  %v684 = vpack.c.b16 %v569, %v568
  %v685 = vpack.c.b16 %v571, %v570
  %v686 = vpack.c.b16 %v573, %v572
  %v687 = vpack.c.b16 %v575, %v574
  %v688 = vpack.c.b16 %v577, %v576
  %v689 = vpack.c.b16 %v579, %v578
  %v690 = vpack.c.b16 %v581, %v580
  %v691 = vpack.c.b16 %v583, %v582
  %v692 = vpack.c.b16 %v585, %v584
  %v693 = vpack.c.b16 %v587, %v586
  %v694 = vpack.c.b16 %v589, %v588
  %v695 = vpack.c.b16 %v591, %v590
  %v696 = vpack.c.b16 %v593, %v592
  %v697 = vpack.c.b16 %v595, %v594
  %v698 = vpack.c.b16 %v597, %v596
  %v699 = vpack.c.b16 %v599, %v598
  %v700 = vpack.c.b16 %v601, %v600
  %v701 = vpack.c.b16 %v603, %v602
  %v706 = vunpack.c.l.b16 %v208
  %v707 = vunpack.c.l.b16 %v209
  %v708 = vunpack.c.l.b16 %v210
  %v709 = vunpack.c.l.b16 %v211
  %v710 = vpack.c.b16 %v707, %v706
  %v711 = vpack.c.b16 %v709, %v708
  %vm713 = vcmask 203776
  %v715 = vsel %vm713, %v604, 0
  %v718 = vsel %vm713, %v605, 0
  %v721 = vsel %vm713, %v606, 0
  %v724 = vsel %vm713, %v607, 0
  %v727 = vsel %vm713, %v608, 0
  %v730 = vsel %vm713, %v609, 0
  %v733 = vsel %vm713, %v610, 0
  %v736 = vsel %vm713, %v611, 0
  %v739 = vsel %vm713, %v612, 0
  %v742 = vsel %vm713, %v613, 0
  %v745 = vsel %vm713, %v614, 0
  %v748 = vsel %vm713, %v615, 0
  %v751 = vsel %vm713, %v616, 0
  %v754 = vsel %vm713, %v617, 0
  %v757 = vsel %vm713, %v618, 0
  %v760 = vsel %vm713, %v619, 0
  %v763 = vsel %vm713, %v620, 0
  %v766 = vsel %vm713, %v621, 0
  %v769 = vsel %vm713, %v622, 0
  %v772 = vsel %vm713, %v623, 0
  %v775 = vsel %vm713, %v624, 0
  %v778 = vsel %vm713, %v625, 0
  %v781 = vsel %vm713, %v626, 0
  %v784 = vsel %vm713, %v627, 0
  %v787 = vsel %vm713, %v628, 0
  %v790 = vsel %vm713, %v629, 0
  %v793 = vsel %vm713, %v630, 0
  %v796 = vsel %vm713, %v631, 0
  %v799 = vsel %vm713, %v632, 0
  %v802 = vsel %vm713, %v633, 0
  %v805 = vsel %vm713, %v634, 0
  %v808 = vsel %vm713, %v635, 0
  %v811 = vsel %vm713, %v636, 0
  %v814 = vsel %vm713, %v637, 0
  %v817 = vsel %vm713, %v638, 0
  %v820 = vsel %vm713, %v639, 0
  %v823 = vsel %vm713, %v640, 0
  %v826 = vsel %vm713, %v641, 0
  %v829 = vsel %vm713, %v642, 0
  %v832 = vsel %vm713, %v643, 0
  %v835 = vsel %vm713, %v644, 0
  %v838 = vsel %vm713, %v645, 0
  %v841 = vsel %vm713, %v646, 0
  %v844 = vsel %vm713, %v647, 0
  %v847 = vsel %vm713, %v648, 0
  %v850 = vsel %vm713, %v649, 0
  %v853 = vsel %vm713, %v650, 0
  %v856 = vsel %vm713, %v651, 0
  %v859 = vsel %vm713, %v652, 0
  %v862 = vsel %vm713, %v653, 0
  %v865 = vsel %vm713, %v654, 0
  %v868 = vsel %vm713, %v655, 0
  %v871 = vsel %vm713, %v656, 0
  %v874 = vsel %vm713, %v657, 0
  %v877 = vsel %vm713, %v658, 0
  %v880 = vsel %vm713, %v659, 0
  %v883 = vsel %vm713, %v660, 0
  %v886 = vsel %vm713, %v661, 0
  %v889 = vsel %vm713, %v662, 0
  %v892 = vsel %vm713, %v663, 0
  %v895 = vsel %vm713, %v664, 0
  %v898 = vsel %vm713, %v665, 0
  %v901 = vsel %vm713, %v666, 0
  %v904 = vsel %vm713, %v667, 0
  %v907 = vsel %vm713, %v668, 0
  %v910 = vsel %vm713, %v669, 0
  %v913 = vsel %vm713, %v670, 0
  %v916 = vsel %vm713, %v671, 0
  %v919 = vsel %vm713, %v672, 0
  %v922 = vsel %vm713, %v673, 0
  %v925 = vsel %vm713, %v674, 0
  %v928 = vsel %vm713, %v675, 0
  %v931 = vsel %vm713, %v676, 0
  %v934 = vsel %vm713, %v677, 0
  %v937 = vsel %vm713, %v678, 0
  %v940 = vsel %vm713, %v679, 0
  %v943 = vsel %vm713, %v680, 0
  %v946 = vsel %vm713, %v681, 0
  %v949 = vsel %vm713, %v682, 0
  %v952 = vsel %vm713, %v683, 0
  %v955 = vsel %vm713, %v684, 0
  %v958 = vsel %vm713, %v685, 0
  %v961 = vsel %vm713, %v686, 0
  %v964 = vsel %vm713, %v687, 0
  %v967 = vsel %vm713, %v688, 0
  %v970 = vsel %vm713, %v689, 0
  %v973 = vsel %vm713, %v690, 0
  %v976 = vsel %vm713, %v691, 0
  %v979 = vsel %vm713, %v692, 0
  %v982 = vsel %vm713, %v693, 0
  %v985 = vsel %vm713, %v694, 0
  %v988 = vsel %vm713, %v695, 0
  %v991 = vsel %vm713, %v696, 0
  %v994 = vsel %vm713, %v697, 0
  %v997 = vsel %vm713, %v698, 0
  %v1000 = vsel %vm713, %v699, 0
  %v1003 = vsel %vm713, %v700, 0
  %v1006 = vsel %vm713, %v701, 0
  %vm1008 = vcmask 1043456
  %vm1009 = vcmask 1044480
  %v1010 = vsel %vm1008, 4294967295, 65535
  %v1011 = vsel %vm1009, %v1010, 0
  %v1013 = vand.u32 %v711, %v1011
  %1015 = vmatprep.subr.bf16.mxu0 0
  %1016 = vmatpush1.bf16.msra.mxu0 0
  %1017 = vmatprep.subr.bf16.mxu0 0
  %1018 = vmatpush1.bf16.msra.mxu0 0
  %1019 = vmatprep.subr.bf16.mxu0 0
  %1020 = vmatpush1.bf16.msra.mxu0 0
  %1021 = vmatprep.subr.bf16.mxu0 0
  %1022 = vmatpush1.bf16.msra.mxu0 0
  %1023 = vmatprep.subr.bf16.mxu0 0
  %1024 = vmatpush1.bf16.msra.mxu0 0
  %1025 = vmatprep.subr.bf16.mxu0 0
  %1026 = vmatpush1.bf16.msra.mxu0 0
  %1027 = vmatprep.subr.bf16.mxu0 0
  %1028 = vmatpush1.bf16.msra.mxu0 %v1013
  %1029 = vmatprep.subr.bf16.mxu0 0
  %1030 = vmatpush1.bf16.msra.mxu0 %v710
  %1031 = vmatprep.subr.bf16.mxu0 0
  %1032 = vmatpush2.bf16.msra.mxu0 0
  %1033 = vmatprep.subr.bf16.mxu0 0
  %1034 = vmatpush2.bf16.msra.mxu0 0
  %1035 = vmatprep.subr.bf16.mxu0 0
  %1036 = vmatpush2.bf16.msra.mxu0 0
  %1037 = vmatprep.subr.bf16.mxu0 0
  %1038 = vmatpush2.bf16.msra.mxu0 0
  %1039 = vmatprep.subr.bf16.mxu0 0
  %1040 = vmatpush2.bf16.msra.mxu0 0
  %1041 = vmatprep.subr.bf16.mxu0 0
  %1042 = vmatpush2.bf16.msra.mxu0 0
  %1043 = vmatprep.subr.bf16.mxu0 0
  %1044 = vmatpush2.bf16.msra.mxu0 0
  %1045 = vmatprep.subr.bf16.mxu0 0
  %1046 = vmatpush2.bf16.msra.mxu0 0
  %1047 = vmatprep.mubr.bf16.mxu0 0
  %1048 = vmatmul.mubr.bf16.gmra.mxu0 %v715
  %v1049 = vpop.f32.mrf.mxu0
  %v1050 = vadd.f32 0.0, %v1049
  %v1051 = vpop.f32.mrf.mxu0
  %v1052 = vpop.f32.mrf.mxu0
  %v1053 = vadd.f32 0.0, %v1052
  %v1054 = vpop.f32.mrf.mxu0
  %1055 = vmatprep.mubr.bf16.mxu0 0
  %1056 = vmatmul.mubr.bf16.gmra.mxu0 %v718
  %v1057 = vpop.f32.mrf.mxu0
  %v1058 = vadd.f32 0.0, %v1057
  %v1059 = vpop.f32.mrf.mxu0
  %v1060 = vpop.f32.mrf.mxu0
  %v1061 = vadd.f32 0.0, %v1060
  %v1062 = vpop.f32.mrf.mxu0
  %1063 = vmatprep.mubr.bf16.mxu0 0
  %1064 = vmatmul.mubr.bf16.gmra.mxu0 %v721
  %v1065 = vpop.f32.mrf.mxu0
  %v1066 = vadd.f32 0.0, %v1065
  %v1067 = vpop.f32.mrf.mxu0
  %v1068 = vpop.f32.mrf.mxu0
  %v1069 = vadd.f32 0.0, %v1068
  %v1070 = vpop.f32.mrf.mxu0
  %1071 = vmatprep.mubr.bf16.mxu0 0
  %1072 = vmatmul.mubr.bf16.gmra.mxu0 %v724
  %v1073 = vpop.f32.mrf.mxu0
  %v1074 = vadd.f32 0.0, %v1073
  %v1075 = vpop.f32.mrf.mxu0
  %v1076 = vpop.f32.mrf.mxu0
  %v1077 = vadd.f32 0.0, %v1076
  %v1078 = vpop.f32.mrf.mxu0
  %1079 = vmatprep.mubr.bf16.mxu0 0
  %1080 = vmatmul.mubr.bf16.gmra.mxu0 %v727
  %v1081 = vpop.f32.mrf.mxu0
  %v1082 = vadd.f32 0.0, %v1081
  %v1083 = vpop.f32.mrf.mxu0
  %v1084 = vpop.f32.mrf.mxu0
  %v1085 = vadd.f32 0.0, %v1084
  %v1086 = vpop.f32.mrf.mxu0
  %1087 = vmatprep.mubr.bf16.mxu0 0
  %1088 = vmatmul.mubr.bf16.gmra.mxu0 %v730
  %v1089 = vpop.f32.mrf.mxu0
  %v1090 = vadd.f32 0.0, %v1089
  %v1091 = vpop.f32.mrf.mxu0
  %v1092 = vpop.f32.mrf.mxu0
  %v1093 = vadd.f32 0.0, %v1092
  %v1094 = vpop.f32.mrf.mxu0
  %1095 = vmatprep.mubr.bf16.mxu0 0
  %1096 = vmatmul.mubr.bf16.gmra.mxu0 %v733
  %v1097 = vpop.f32.mrf.mxu0
  %v1098 = vadd.f32 0.0, %v1097
  %v1099 = vpop.f32.mrf.mxu0
  %v1100 = vpop.f32.mrf.mxu0
  %v1101 = vadd.f32 0.0, %v1100
  %v1102 = vpop.f32.mrf.mxu0
  %1103 = vmatprep.mubr.bf16.mxu0 0
  %1104 = vmatmul.mubr.bf16.gmra.mxu0 %v736
  %v1105 = vpop.f32.mrf.mxu0
  %v1106 = vadd.f32 0.0, %v1105
  %v1107 = vpop.f32.mrf.mxu0
  %v1108 = vpop.f32.mrf.mxu0
  %v1109 = vadd.f32 0.0, %v1108
  %v1110 = vpop.f32.mrf.mxu0
  %1111 = vmatprep.mubr.bf16.mxu0 0
  %1112 = vmatmul.mubr.bf16.gmra.mxu0 %v739
  %v1113 = vpop.f32.mrf.mxu0
  %v1114 = vadd.f32 0.0, %v1113
  %v1115 = vpop.f32.mrf.mxu0
  %v1116 = vpop.f32.mrf.mxu0
  %v1117 = vadd.f32 0.0, %v1116
  %v1118 = vpop.f32.mrf.mxu0
  %1119 = vmatprep.mubr.bf16.mxu0 0
  %1120 = vmatmul.mubr.bf16.gmra.mxu0 %v742
  %v1121 = vpop.f32.mrf.mxu0
  %v1122 = vadd.f32 0.0, %v1121
  %v1123 = vpop.f32.mrf.mxu0
  %v1124 = vpop.f32.mrf.mxu0
  %v1125 = vadd.f32 0.0, %v1124
  %v1126 = vpop.f32.mrf.mxu0
  %1127 = vmatprep.mubr.bf16.mxu0 0
  %1128 = vmatmul.mubr.bf16.gmra.mxu0 %v745
  %v1129 = vpop.f32.mrf.mxu0
  %v1130 = vadd.f32 0.0, %v1129
  %v1131 = vpop.f32.mrf.mxu0
  %v1132 = vpop.f32.mrf.mxu0
  %v1133 = vadd.f32 0.0, %v1132
  %v1134 = vpop.f32.mrf.mxu0
  %1135 = vmatprep.mubr.bf16.mxu0 0
  %1136 = vmatmul.mubr.bf16.gmra.mxu0 %v748
  %v1137 = vpop.f32.mrf.mxu0
  %v1138 = vadd.f32 0.0, %v1137
  %v1139 = vpop.f32.mrf.mxu0
  %v1140 = vpop.f32.mrf.mxu0
  %v1141 = vadd.f32 0.0, %v1140
  %v1142 = vpop.f32.mrf.mxu0
  %1143 = vmatprep.mubr.bf16.mxu0 0
  %1144 = vmatmul.mubr.bf16.gmra.mxu0 %v751
  %v1145 = vpop.f32.mrf.mxu0
  %v1146 = vadd.f32 0.0, %v1145
  %v1147 = vpop.f32.mrf.mxu0
  %v1148 = vpop.f32.mrf.mxu0
  %v1149 = vadd.f32 0.0, %v1148
  %v1150 = vpop.f32.mrf.mxu0
  %1151 = vmatprep.mubr.bf16.mxu0 0
  %1152 = vmatmul.mubr.bf16.gmra.mxu0 %v754
  %v1153 = vpop.f32.mrf.mxu0
  %v1154 = vadd.f32 0.0, %v1153
  %v1155 = vpop.f32.mrf.mxu0
  %v1156 = vpop.f32.mrf.mxu0
  %v1157 = vadd.f32 0.0, %v1156
  %v1158 = vpop.f32.mrf.mxu0
  %1159 = vmatprep.mubr.bf16.mxu0 0
  %1160 = vmatmul.mubr.bf16.gmra.mxu0 %v757
  %v1161 = vpop.f32.mrf.mxu0
  %v1162 = vadd.f32 0.0, %v1161
  %v1163 = vpop.f32.mrf.mxu0
  %v1164 = vpop.f32.mrf.mxu0
  %v1165 = vadd.f32 0.0, %v1164
  %v1166 = vpop.f32.mrf.mxu0
  %1167 = vmatprep.mubr.bf16.mxu0 0
  %1168 = vmatmul.mubr.bf16.gmra.mxu0 %v760
  %v1169 = vpop.f32.mrf.mxu0
  %v1170 = vadd.f32 0.0, %v1169
  %v1171 = vpop.f32.mrf.mxu0
  %v1172 = vpop.f32.mrf.mxu0
  %v1173 = vadd.f32 0.0, %v1172
  %v1174 = vpop.f32.mrf.mxu0
  %1175 = vmatprep.mubr.bf16.mxu0 0
  %1176 = vmatmul.mubr.bf16.gmra.mxu0 %v763
  %v1177 = vpop.f32.mrf.mxu0
  %v1178 = vadd.f32 0.0, %v1177
  %v1179 = vpop.f32.mrf.mxu0
  %v1180 = vpop.f32.mrf.mxu0
  %v1181 = vadd.f32 0.0, %v1180
  %v1182 = vpop.f32.mrf.mxu0
  %1183 = vmatprep.mubr.bf16.mxu0 0
  %1184 = vmatmul.mubr.bf16.gmra.mxu0 %v766
  %v1185 = vpop.f32.mrf.mxu0
  %v1186 = vadd.f32 0.0, %v1185
  %v1187 = vpop.f32.mrf.mxu0
  %v1188 = vpop.f32.mrf.mxu0
  %v1189 = vadd.f32 0.0, %v1188
  %v1190 = vpop.f32.mrf.mxu0
  %1191 = vmatprep.mubr.bf16.mxu0 0
  %1192 = vmatmul.mubr.bf16.gmra.mxu0 %v769
  %v1193 = vpop.f32.mrf.mxu0
  %v1194 = vadd.f32 0.0, %v1193
  %v1195 = vpop.f32.mrf.mxu0
  %v1196 = vpop.f32.mrf.mxu0
  %v1197 = vadd.f32 0.0, %v1196
  %v1198 = vpop.f32.mrf.mxu0
  %1199 = vmatprep.mubr.bf16.mxu0 0
  %1200 = vmatmul.mubr.bf16.gmra.mxu0 %v772
  %v1201 = vpop.f32.mrf.mxu0
  %v1202 = vadd.f32 0.0, %v1201
  %v1203 = vpop.f32.mrf.mxu0
  %v1204 = vpop.f32.mrf.mxu0
  %v1205 = vadd.f32 0.0, %v1204
  %v1206 = vpop.f32.mrf.mxu0
  %1207 = vmatprep.mubr.bf16.mxu0 0
  %1208 = vmatmul.mubr.bf16.gmra.mxu0 %v775
  %v1209 = vpop.f32.mrf.mxu0
  %v1210 = vadd.f32 0.0, %v1209
  %v1211 = vpop.f32.mrf.mxu0
  %v1212 = vpop.f32.mrf.mxu0
  %v1213 = vadd.f32 0.0, %v1212
  %v1214 = vpop.f32.mrf.mxu0
  %1215 = vmatprep.mubr.bf16.mxu0 0
  %1216 = vmatmul.mubr.bf16.gmra.mxu0 %v778
  %v1217 = vpop.f32.mrf.mxu0
  %v1218 = vadd.f32 0.0, %v1217
  %v1219 = vpop.f32.mrf.mxu0
  %v1220 = vpop.f32.mrf.mxu0
  %v1221 = vadd.f32 0.0, %v1220
  %v1222 = vpop.f32.mrf.mxu0
  %1223 = vmatprep.mubr.bf16.mxu0 0
  %1224 = vmatmul.mubr.bf16.gmra.mxu0 %v781
  %v1225 = vpop.f32.mrf.mxu0
  %v1226 = vadd.f32 0.0, %v1225
  %v1227 = vpop.f32.mrf.mxu0
  %v1228 = vpop.f32.mrf.mxu0
  %v1229 = vadd.f32 0.0, %v1228
  %v1230 = vpop.f32.mrf.mxu0
  %1231 = vmatprep.mubr.bf16.mxu0 0
  %1232 = vmatmul.mubr.bf16.gmra.mxu0 %v784
  %v1233 = vpop.f32.mrf.mxu0
  %v1234 = vadd.f32 0.0, %v1233
  %v1235 = vpop.f32.mrf.mxu0
  %v1236 = vpop.f32.mrf.mxu0
  %v1237 = vadd.f32 0.0, %v1236
  %v1238 = vpop.f32.mrf.mxu0
  %1239 = vmatprep.mubr.bf16.mxu0 0
  %1240 = vmatmul.mubr.bf16.gmra.mxu0 %v787
  %v1241 = vpop.f32.mrf.mxu0
  %v1242 = vadd.f32 0.0, %v1241
  %v1243 = vpop.f32.mrf.mxu0
  %v1244 = vpop.f32.mrf.mxu0
  %v1245 = vadd.f32 0.0, %v1244
  %v1246 = vpop.f32.mrf.mxu0
  %1247 = vmatprep.mubr.bf16.mxu0 0
  %1248 = vmatmul.mubr.bf16.gmra.mxu0 %v790
  %v1249 = vpop.f32.mrf.mxu0
  %v1250 = vadd.f32 0.0, %v1249
  %v1251 = vpop.f32.mrf.mxu0
  %v1252 = vpop.f32.mrf.mxu0
  %v1253 = vadd.f32 0.0, %v1252
  %v1254 = vpop.f32.mrf.mxu0
  %1255 = vmatprep.mubr.bf16.mxu0 0
  %1256 = vmatmul.mubr.bf16.gmra.mxu0 %v793
  %v1257 = vpop.f32.mrf.mxu0
  %v1258 = vadd.f32 0.0, %v1257
  %v1259 = vpop.f32.mrf.mxu0
  %v1260 = vpop.f32.mrf.mxu0
  %v1261 = vadd.f32 0.0, %v1260
  %v1262 = vpop.f32.mrf.mxu0
  %1263 = vmatprep.mubr.bf16.mxu0 0
  %1264 = vmatmul.mubr.bf16.gmra.mxu0 %v796
  %v1265 = vpop.f32.mrf.mxu0
  %v1266 = vadd.f32 0.0, %v1265
  %v1267 = vpop.f32.mrf.mxu0
  %v1268 = vpop.f32.mrf.mxu0
  %v1269 = vadd.f32 0.0, %v1268
  %v1270 = vpop.f32.mrf.mxu0
  %1271 = vmatprep.mubr.bf16.mxu0 0
  %1272 = vmatmul.mubr.bf16.gmra.mxu0 %v799
  %v1273 = vpop.f32.mrf.mxu0
  %v1274 = vadd.f32 0.0, %v1273
  %v1275 = vpop.f32.mrf.mxu0
  %v1276 = vpop.f32.mrf.mxu0
  %v1277 = vadd.f32 0.0, %v1276
  %v1278 = vpop.f32.mrf.mxu0
  %1279 = vmatprep.mubr.bf16.mxu0 0
  %1280 = vmatmul.mubr.bf16.gmra.mxu0 %v802
  %v1281 = vpop.f32.mrf.mxu0
  %v1282 = vadd.f32 0.0, %v1281
  %v1283 = vpop.f32.mrf.mxu0
  %v1284 = vpop.f32.mrf.mxu0
  %v1285 = vadd.f32 0.0, %v1284
  %v1286 = vpop.f32.mrf.mxu0
  %1287 = vmatprep.mubr.bf16.mxu0 0
  %1288 = vmatmul.mubr.bf16.gmra.mxu0 %v805
  %v1289 = vpop.f32.mrf.mxu0
  %v1290 = vadd.f32 0.0, %v1289
  %v1291 = vpop.f32.mrf.mxu0
  %v1292 = vpop.f32.mrf.mxu0
  %v1293 = vadd.f32 0.0, %v1292
  %v1294 = vpop.f32.mrf.mxu0
  %1295 = vmatprep.mubr.bf16.mxu0 0
  %1296 = vmatmul.mubr.bf16.gmra.mxu0 %v808
  %v1297 = vpop.f32.mrf.mxu0
  %v1298 = vadd.f32 0.0, %v1297
  %v1299 = vpop.f32.mrf.mxu0
  %v1300 = vpop.f32.mrf.mxu0
  %v1301 = vadd.f32 0.0, %v1300
  %v1302 = vpop.f32.mrf.mxu0
  %1303 = vmatprep.mubr.bf16.mxu0 0
  %1304 = vmatmul.mubr.bf16.gmra.mxu0 %v811
  %v1305 = vpop.f32.mrf.mxu0
  %v1306 = vadd.f32 0.0, %v1305
  %v1307 = vpop.f32.mrf.mxu0
  %v1308 = vpop.f32.mrf.mxu0
  %v1309 = vadd.f32 0.0, %v1308
  %v1310 = vpop.f32.mrf.mxu0
  %1311 = vmatprep.mubr.bf16.mxu0 0
  %1312 = vmatmul.mubr.bf16.gmra.mxu0 %v814
  %v1313 = vpop.f32.mrf.mxu0
  %v1314 = vadd.f32 0.0, %v1313
  %v1315 = vpop.f32.mrf.mxu0
  %v1316 = vpop.f32.mrf.mxu0
  %v1317 = vadd.f32 0.0, %v1316
  %v1318 = vpop.f32.mrf.mxu0
  %1319 = vmatprep.mubr.bf16.mxu0 0
  %1320 = vmatmul.mubr.bf16.gmra.mxu0 %v817
  %v1321 = vpop.f32.mrf.mxu0
  %v1322 = vadd.f32 0.0, %v1321
  %v1323 = vpop.f32.mrf.mxu0
  %v1324 = vpop.f32.mrf.mxu0
  %v1325 = vadd.f32 0.0, %v1324
  %v1326 = vpop.f32.mrf.mxu0
  %1327 = vmatprep.mubr.bf16.mxu0 0
  %1328 = vmatmul.mubr.bf16.gmra.mxu0 %v820
  %v1329 = vpop.f32.mrf.mxu0
  %v1330 = vadd.f32 0.0, %v1329
  %v1331 = vpop.f32.mrf.mxu0
  %v1332 = vpop.f32.mrf.mxu0
  %v1333 = vadd.f32 0.0, %v1332
  %v1334 = vpop.f32.mrf.mxu0
  %1335 = vmatprep.mubr.bf16.mxu0 0
  %1336 = vmatmul.mubr.bf16.gmra.mxu0 %v823
  %v1337 = vpop.f32.mrf.mxu0
  %v1338 = vadd.f32 0.0, %v1337
  %v1339 = vpop.f32.mrf.mxu0
  %v1340 = vpop.f32.mrf.mxu0
  %v1341 = vadd.f32 0.0, %v1340
  %v1342 = vpop.f32.mrf.mxu0
  %1343 = vmatprep.mubr.bf16.mxu0 0
  %1344 = vmatmul.mubr.bf16.gmra.mxu0 %v826
  %v1345 = vpop.f32.mrf.mxu0
  %v1346 = vadd.f32 0.0, %v1345
  %v1347 = vpop.f32.mrf.mxu0
  %v1348 = vpop.f32.mrf.mxu0
  %v1349 = vadd.f32 0.0, %v1348
  %v1350 = vpop.f32.mrf.mxu0
  %1351 = vmatprep.mubr.bf16.mxu0 0
  %1352 = vmatmul.mubr.bf16.gmra.mxu0 %v829
  %v1353 = vpop.f32.mrf.mxu0
  %v1354 = vadd.f32 0.0, %v1353
  %v1355 = vpop.f32.mrf.mxu0
  %v1356 = vpop.f32.mrf.mxu0
  %v1357 = vadd.f32 0.0, %v1356
  %v1358 = vpop.f32.mrf.mxu0
  %1359 = vmatprep.mubr.bf16.mxu0 0
  %1360 = vmatmul.mubr.bf16.gmra.mxu0 %v832
  %v1361 = vpop.f32.mrf.mxu0
  %v1362 = vadd.f32 0.0, %v1361
  %v1363 = vpop.f32.mrf.mxu0
  %v1364 = vpop.f32.mrf.mxu0
  %v1365 = vadd.f32 0.0, %v1364
  %v1366 = vpop.f32.mrf.mxu0
  %1367 = vmatprep.mubr.bf16.mxu0 0
  %1368 = vmatmul.mubr.bf16.gmra.mxu0 %v835
  %v1369 = vpop.f32.mrf.mxu0
  %v1370 = vadd.f32 0.0, %v1369
  %v1371 = vpop.f32.mrf.mxu0
  %v1372 = vpop.f32.mrf.mxu0
  %v1373 = vadd.f32 0.0, %v1372
  %v1374 = vpop.f32.mrf.mxu0
  %1375 = vmatprep.mubr.bf16.mxu0 0
  %1376 = vmatmul.mubr.bf16.gmra.mxu0 %v838
  %v1377 = vpop.f32.mrf.mxu0
  %v1378 = vadd.f32 0.0, %v1377
  %v1379 = vpop.f32.mrf.mxu0
  %v1380 = vpop.f32.mrf.mxu0
  %v1381 = vadd.f32 0.0, %v1380
  %v1382 = vpop.f32.mrf.mxu0
  %1383 = vmatprep.mubr.bf16.mxu0 0
  %1384 = vmatmul.mubr.bf16.gmra.mxu0 %v841
  %v1385 = vpop.f32.mrf.mxu0
  %v1386 = vadd.f32 0.0, %v1385
  %v1387 = vpop.f32.mrf.mxu0
  %v1388 = vpop.f32.mrf.mxu0
  %v1389 = vadd.f32 0.0, %v1388
  %v1390 = vpop.f32.mrf.mxu0
  %1391 = vmatprep.mubr.bf16.mxu0 0
  %1392 = vmatmul.mubr.bf16.gmra.mxu0 %v844
  %v1393 = vpop.f32.mrf.mxu0
  %v1394 = vadd.f32 0.0, %v1393
  %v1395 = vpop.f32.mrf.mxu0
  %v1396 = vpop.f32.mrf.mxu0
  %v1397 = vadd.f32 0.0, %v1396
  %v1398 = vpop.f32.mrf.mxu0
  %1399 = vmatprep.mubr.bf16.mxu0 0
  %1400 = vmatmul.mubr.bf16.gmra.mxu0 %v847
  %v1401 = vpop.f32.mrf.mxu0
  %v1402 = vadd.f32 0.0, %v1401
  %v1403 = vpop.f32.mrf.mxu0
  %v1404 = vpop.f32.mrf.mxu0
  %v1405 = vadd.f32 0.0, %v1404
  %v1406 = vpop.f32.mrf.mxu0
  %1407 = vmatprep.mubr.bf16.mxu0 0
  %1408 = vmatmul.mubr.bf16.gmra.mxu0 %v850
  %v1409 = vpop.f32.mrf.mxu0
  %v1410 = vadd.f32 0.0, %v1409
  %v1411 = vpop.f32.mrf.mxu0
  %v1412 = vpop.f32.mrf.mxu0
  %v1413 = vadd.f32 0.0, %v1412
  %v1414 = vpop.f32.mrf.mxu0
  %1415 = vmatprep.mubr.bf16.mxu0 0
  %1416 = vmatmul.mubr.bf16.gmra.mxu0 %v853
  %v1417 = vpop.f32.mrf.mxu0
  %v1418 = vadd.f32 0.0, %v1417
  %v1419 = vpop.f32.mrf.mxu0
  %v1420 = vpop.f32.mrf.mxu0
  %v1421 = vadd.f32 0.0, %v1420
  %v1422 = vpop.f32.mrf.mxu0
  %1423 = vmatprep.mubr.bf16.mxu0 0
  %1424 = vmatmul.mubr.bf16.gmra.mxu0 %v856
  %v1425 = vpop.f32.mrf.mxu0
  %v1426 = vadd.f32 0.0, %v1425
  %v1427 = vpop.f32.mrf.mxu0
  %v1428 = vpop.f32.mrf.mxu0
  %v1429 = vadd.f32 0.0, %v1428
  %v1430 = vpop.f32.mrf.mxu0
  %1431 = vmatprep.mubr.bf16.mxu0 0
  %1432 = vmatmul.mubr.bf16.gmra.mxu0 %v859
  %v1433 = vpop.f32.mrf.mxu0
  %v1434 = vadd.f32 0.0, %v1433
  %v1435 = vpop.f32.mrf.mxu0
  %v1436 = vpop.f32.mrf.mxu0
  %v1437 = vadd.f32 0.0, %v1436
  %v1438 = vpop.f32.mrf.mxu0
  %1439 = vmatprep.mubr.bf16.mxu0 0
  %1440 = vmatmul.mubr.bf16.gmra.mxu0 %v862
  %v1441 = vpop.f32.mrf.mxu0
  %v1442 = vadd.f32 0.0, %v1441
  %v1443 = vpop.f32.mrf.mxu0
  %v1444 = vpop.f32.mrf.mxu0
  %v1445 = vadd.f32 0.0, %v1444
  %v1446 = vpop.f32.mrf.mxu0
  %1447 = vmatprep.mubr.bf16.mxu0 0
  %1448 = vmatmul.mubr.bf16.gmra.mxu0 %v865
  %v1449 = vpop.f32.mrf.mxu0
  %v1450 = vadd.f32 0.0, %v1449
  %v1451 = vpop.f32.mrf.mxu0
  %v1452 = vpop.f32.mrf.mxu0
  %v1453 = vadd.f32 0.0, %v1452
  %v1454 = vpop.f32.mrf.mxu0
  %1455 = vmatprep.mubr.bf16.mxu0 0
  %1456 = vmatmul.mubr.bf16.gmra.mxu0 %v868
  %v1457 = vpop.f32.mrf.mxu0
  %v1458 = vadd.f32 0.0, %v1457
  %v1459 = vpop.f32.mrf.mxu0
  %v1460 = vpop.f32.mrf.mxu0
  %v1461 = vadd.f32 0.0, %v1460
  %v1462 = vpop.f32.mrf.mxu0
  %1463 = vmatprep.mubr.bf16.mxu0 0
  %1464 = vmatmul.mubr.bf16.gmra.mxu0 %v871
  %v1465 = vpop.f32.mrf.mxu0
  %v1466 = vadd.f32 0.0, %v1465
  %v1467 = vpop.f32.mrf.mxu0
  %v1468 = vpop.f32.mrf.mxu0
  %v1469 = vadd.f32 0.0, %v1468
  %v1470 = vpop.f32.mrf.mxu0
  %1471 = vmatprep.mubr.bf16.mxu0 0
  %1472 = vmatmul.mubr.bf16.gmra.mxu0 %v874
  %v1473 = vpop.f32.mrf.mxu0
  %v1474 = vadd.f32 0.0, %v1473
  %v1475 = vpop.f32.mrf.mxu0
  %v1476 = vpop.f32.mrf.mxu0
  %v1477 = vadd.f32 0.0, %v1476
  %v1478 = vpop.f32.mrf.mxu0
  %1479 = vmatprep.mubr.bf16.mxu0 0
  %1480 = vmatmul.mubr.bf16.gmra.mxu0 %v877
  %v1481 = vpop.f32.mrf.mxu0
  %v1482 = vadd.f32 0.0, %v1481
  %v1483 = vpop.f32.mrf.mxu0
  %v1484 = vpop.f32.mrf.mxu0
  %v1485 = vadd.f32 0.0, %v1484
  %v1486 = vpop.f32.mrf.mxu0
  %1487 = vmatprep.mubr.bf16.mxu0 0
  %1488 = vmatmul.mubr.bf16.gmra.mxu0 %v880
  %v1489 = vpop.f32.mrf.mxu0
  %v1490 = vadd.f32 0.0, %v1489
  %v1491 = vpop.f32.mrf.mxu0
  %v1492 = vpop.f32.mrf.mxu0
  %v1493 = vadd.f32 0.0, %v1492
  %v1494 = vpop.f32.mrf.mxu0
  %1495 = vmatprep.mubr.bf16.mxu0 0
  %1496 = vmatmul.mubr.bf16.gmra.mxu0 %v883
  %v1497 = vpop.f32.mrf.mxu0
  %v1498 = vadd.f32 0.0, %v1497
  %v1499 = vpop.f32.mrf.mxu0
  %v1500 = vpop.f32.mrf.mxu0
  %v1501 = vadd.f32 0.0, %v1500
  %v1502 = vpop.f32.mrf.mxu0
  %1503 = vmatprep.mubr.bf16.mxu0 0
  %1504 = vmatmul.mubr.bf16.gmra.mxu0 %v886
  %v1505 = vpop.f32.mrf.mxu0
  %v1506 = vadd.f32 0.0, %v1505
  %v1507 = vpop.f32.mrf.mxu0
  %v1508 = vpop.f32.mrf.mxu0
  %v1509 = vadd.f32 0.0, %v1508
  %v1510 = vpop.f32.mrf.mxu0
  %1511 = vmatprep.mubr.bf16.mxu0 0
  %1512 = vmatmul.mubr.bf16.gmra.mxu0 %v889
  %v1513 = vpop.f32.mrf.mxu0
  %v1514 = vadd.f32 0.0, %v1513
  %v1515 = vpop.f32.mrf.mxu0
  %v1516 = vpop.f32.mrf.mxu0
  %v1517 = vadd.f32 0.0, %v1516
  %v1518 = vpop.f32.mrf.mxu0
  %1519 = vmatprep.mubr.bf16.mxu0 0
  %1520 = vmatmul.mubr.bf16.gmra.mxu0 %v892
  %v1521 = vpop.f32.mrf.mxu0
  %v1522 = vadd.f32 0.0, %v1521
  %v1523 = vpop.f32.mrf.mxu0
  %v1524 = vpop.f32.mrf.mxu0
  %v1525 = vadd.f32 0.0, %v1524
  %v1526 = vpop.f32.mrf.mxu0
  %1527 = vmatprep.mubr.bf16.mxu0 0
  %1528 = vmatmul.mubr.bf16.gmra.mxu0 %v895
  %v1529 = vpop.f32.mrf.mxu0
  %v1530 = vadd.f32 0.0, %v1529
  %v1531 = vpop.f32.mrf.mxu0
  %v1532 = vpop.f32.mrf.mxu0
  %v1533 = vadd.f32 0.0, %v1532
  %v1534 = vpop.f32.mrf.mxu0
  %1535 = vmatprep.mubr.bf16.mxu0 0
  %1536 = vmatmul.mubr.bf16.gmra.mxu0 %v898
  %v1537 = vpop.f32.mrf.mxu0
  %v1538 = vadd.f32 0.0, %v1537
  %v1539 = vpop.f32.mrf.mxu0
  %v1540 = vpop.f32.mrf.mxu0
  %v1541 = vadd.f32 0.0, %v1540
  %v1542 = vpop.f32.mrf.mxu0
  %1543 = vmatprep.mubr.bf16.mxu0 0
  %1544 = vmatmul.mubr.bf16.gmra.mxu0 %v901
  %v1545 = vpop.f32.mrf.mxu0
  %v1546 = vadd.f32 0.0, %v1545
  %v1547 = vpop.f32.mrf.mxu0
  %v1548 = vpop.f32.mrf.mxu0
  %v1549 = vadd.f32 0.0, %v1548
  %v1550 = vpop.f32.mrf.mxu0
  %1551 = vmatprep.mubr.bf16.mxu0 0
  %1552 = vmatmul.mubr.bf16.gmra.mxu0 %v904
  %v1553 = vpop.f32.mrf.mxu0
  %v1554 = vadd.f32 0.0, %v1553
  %v1555 = vpop.f32.mrf.mxu0
  %v1556 = vpop.f32.mrf.mxu0
  %v1557 = vadd.f32 0.0, %v1556
  %v1558 = vpop.f32.mrf.mxu0
  %1559 = vmatprep.mubr.bf16.mxu0 0
  %1560 = vmatmul.mubr.bf16.gmra.mxu0 %v907
  %v1561 = vpop.f32.mrf.mxu0
  %v1562 = vadd.f32 0.0, %v1561
  %v1563 = vpop.f32.mrf.mxu0
  %v1564 = vpop.f32.mrf.mxu0
  %v1565 = vadd.f32 0.0, %v1564
  %v1566 = vpop.f32.mrf.mxu0
  %1567 = vmatprep.mubr.bf16.mxu0 0
  %1568 = vmatmul.mubr.bf16.gmra.mxu0 %v910
  %v1569 = vpop.f32.mrf.mxu0
  %v1570 = vadd.f32 0.0, %v1569
  %v1571 = vpop.f32.mrf.mxu0
  %v1572 = vpop.f32.mrf.mxu0
  %v1573 = vadd.f32 0.0, %v1572
  %v1574 = vpop.f32.mrf.mxu0
  %1575 = vmatprep.mubr.bf16.mxu0 0
  %1576 = vmatmul.mubr.bf16.gmra.mxu0 %v913
  %v1577 = vpop.f32.mrf.mxu0
  %v1578 = vadd.f32 0.0, %v1577
  %v1579 = vpop.f32.mrf.mxu0
  %v1580 = vpop.f32.mrf.mxu0
  %v1581 = vadd.f32 0.0, %v1580
  %v1582 = vpop.f32.mrf.mxu0
  %1583 = vmatprep.mubr.bf16.mxu0 0
  %1584 = vmatmul.mubr.bf16.gmra.mxu0 %v916
  %v1585 = vpop.f32.mrf.mxu0
  %v1586 = vadd.f32 0.0, %v1585
  %v1587 = vpop.f32.mrf.mxu0
  %v1588 = vpop.f32.mrf.mxu0
  %v1589 = vadd.f32 0.0, %v1588
  %v1590 = vpop.f32.mrf.mxu0
  %1591 = vmatprep.mubr.bf16.mxu0 0
  %1592 = vmatmul.mubr.bf16.gmra.mxu0 %v919
  %v1593 = vpop.f32.mrf.mxu0
  %v1594 = vadd.f32 0.0, %v1593
  %v1595 = vpop.f32.mrf.mxu0
  %v1596 = vpop.f32.mrf.mxu0
  %v1597 = vadd.f32 0.0, %v1596
  %v1598 = vpop.f32.mrf.mxu0
  %1599 = vmatprep.mubr.bf16.mxu0 0
  %1600 = vmatmul.mubr.bf16.gmra.mxu0 %v922
  %v1601 = vpop.f32.mrf.mxu0
  %v1602 = vadd.f32 0.0, %v1601
  %v1603 = vpop.f32.mrf.mxu0
  %v1604 = vpop.f32.mrf.mxu0
  %v1605 = vadd.f32 0.0, %v1604
  %v1606 = vpop.f32.mrf.mxu0
  %1607 = vmatprep.mubr.bf16.mxu0 0
  %1608 = vmatmul.mubr.bf16.gmra.mxu0 %v925
  %v1609 = vpop.f32.mrf.mxu0
  %v1610 = vadd.f32 0.0, %v1609
  %v1611 = vpop.f32.mrf.mxu0
  %v1612 = vpop.f32.mrf.mxu0
  %v1613 = vadd.f32 0.0, %v1612
  %v1614 = vpop.f32.mrf.mxu0
  %1615 = vmatprep.mubr.bf16.mxu0 0
  %1616 = vmatmul.mubr.bf16.gmra.mxu0 %v928
  %v1617 = vpop.f32.mrf.mxu0
  %v1618 = vadd.f32 0.0, %v1617
  %v1619 = vpop.f32.mrf.mxu0
  %v1620 = vpop.f32.mrf.mxu0
  %v1621 = vadd.f32 0.0, %v1620
  %v1622 = vpop.f32.mrf.mxu0
  %1623 = vmatprep.mubr.bf16.mxu0 0
  %1624 = vmatmul.mubr.bf16.gmra.mxu0 %v931
  %v1625 = vpop.f32.mrf.mxu0
  %v1626 = vadd.f32 0.0, %v1625
  %v1627 = vpop.f32.mrf.mxu0
  %v1628 = vpop.f32.mrf.mxu0
  %v1629 = vadd.f32 0.0, %v1628
  %v1630 = vpop.f32.mrf.mxu0
  %1631 = vmatprep.mubr.bf16.mxu0 0
  %1632 = vmatmul.mubr.bf16.gmra.mxu0 %v934
  %v1633 = vpop.f32.mrf.mxu0
  %v1634 = vadd.f32 0.0, %v1633
  %v1635 = vpop.f32.mrf.mxu0
  %v1636 = vpop.f32.mrf.mxu0
  %v1637 = vadd.f32 0.0, %v1636
  %v1638 = vpop.f32.mrf.mxu0
  %1639 = vmatprep.mubr.bf16.mxu0 0
  %1640 = vmatmul.mubr.bf16.gmra.mxu0 %v937
  %v1641 = vpop.f32.mrf.mxu0
  %v1642 = vadd.f32 0.0, %v1641
  %v1643 = vpop.f32.mrf.mxu0
  %v1644 = vpop.f32.mrf.mxu0
  %v1645 = vadd.f32 0.0, %v1644
  %v1646 = vpop.f32.mrf.mxu0
  %1647 = vmatprep.mubr.bf16.mxu0 0
  %1648 = vmatmul.mubr.bf16.gmra.mxu0 %v940
  %v1649 = vpop.f32.mrf.mxu0
  %v1650 = vadd.f32 0.0, %v1649
  %v1651 = vpop.f32.mrf.mxu0
  %v1652 = vpop.f32.mrf.mxu0
  %v1653 = vadd.f32 0.0, %v1652
  %v1654 = vpop.f32.mrf.mxu0
  %1655 = vmatprep.mubr.bf16.mxu0 0
  %1656 = vmatmul.mubr.bf16.gmra.mxu0 %v943
  %v1657 = vpop.f32.mrf.mxu0
  %v1658 = vadd.f32 0.0, %v1657
  %v1659 = vpop.f32.mrf.mxu0
  %v1660 = vpop.f32.mrf.mxu0
  %v1661 = vadd.f32 0.0, %v1660
  %v1662 = vpop.f32.mrf.mxu0
  %1663 = vmatprep.mubr.bf16.mxu0 0
  %1664 = vmatmul.mubr.bf16.gmra.mxu0 %v946
  %v1665 = vpop.f32.mrf.mxu0
  %v1666 = vadd.f32 0.0, %v1665
  %v1667 = vpop.f32.mrf.mxu0
  %v1668 = vpop.f32.mrf.mxu0
  %v1669 = vadd.f32 0.0, %v1668
  %v1670 = vpop.f32.mrf.mxu0
  %1671 = vmatprep.mubr.bf16.mxu0 0
  %1672 = vmatmul.mubr.bf16.gmra.mxu0 %v949
  %v1673 = vpop.f32.mrf.mxu0
  %v1674 = vadd.f32 0.0, %v1673
  %v1675 = vpop.f32.mrf.mxu0
  %v1676 = vpop.f32.mrf.mxu0
  %v1677 = vadd.f32 0.0, %v1676
  %v1678 = vpop.f32.mrf.mxu0
  %1679 = vmatprep.mubr.bf16.mxu0 0
  %1680 = vmatmul.mubr.bf16.gmra.mxu0 %v952
  %v1681 = vpop.f32.mrf.mxu0
  %v1682 = vadd.f32 0.0, %v1681
  %v1683 = vpop.f32.mrf.mxu0
  %v1684 = vpop.f32.mrf.mxu0
  %v1685 = vadd.f32 0.0, %v1684
  %v1686 = vpop.f32.mrf.mxu0
  %1687 = vmatprep.mubr.bf16.mxu0 0
  %1688 = vmatmul.mubr.bf16.gmra.mxu0 %v955
  %v1689 = vpop.f32.mrf.mxu0
  %v1690 = vadd.f32 0.0, %v1689
  %v1691 = vpop.f32.mrf.mxu0
  %v1692 = vpop.f32.mrf.mxu0
  %v1693 = vadd.f32 0.0, %v1692
  %v1694 = vpop.f32.mrf.mxu0
  %1695 = vmatprep.mubr.bf16.mxu0 0
  %1696 = vmatmul.mubr.bf16.gmra.mxu0 %v958
  %v1697 = vpop.f32.mrf.mxu0
  %v1698 = vadd.f32 0.0, %v1697
  %v1699 = vpop.f32.mrf.mxu0
  %v1700 = vpop.f32.mrf.mxu0
  %v1701 = vadd.f32 0.0, %v1700
  %v1702 = vpop.f32.mrf.mxu0
  %1703 = vmatprep.mubr.bf16.mxu0 0
  %1704 = vmatmul.mubr.bf16.gmra.mxu0 %v961
  %v1705 = vpop.f32.mrf.mxu0
  %v1706 = vadd.f32 0.0, %v1705
  %v1707 = vpop.f32.mrf.mxu0
  %v1708 = vpop.f32.mrf.mxu0
  %v1709 = vadd.f32 0.0, %v1708
  %v1710 = vpop.f32.mrf.mxu0
  %1711 = vmatprep.mubr.bf16.mxu0 0
  %1712 = vmatmul.mubr.bf16.gmra.mxu0 %v964
  %v1713 = vpop.f32.mrf.mxu0
  %v1714 = vadd.f32 0.0, %v1713
  %v1715 = vpop.f32.mrf.mxu0
  %v1716 = vpop.f32.mrf.mxu0
  %v1717 = vadd.f32 0.0, %v1716
  %v1718 = vpop.f32.mrf.mxu0
  %1719 = vmatprep.mubr.bf16.mxu0 0
  %1720 = vmatmul.mubr.bf16.gmra.mxu0 %v967
  %v1721 = vpop.f32.mrf.mxu0
  %v1722 = vadd.f32 0.0, %v1721
  %v1723 = vpop.f32.mrf.mxu0
  %v1724 = vpop.f32.mrf.mxu0
  %v1725 = vadd.f32 0.0, %v1724
  %v1726 = vpop.f32.mrf.mxu0
  %1727 = vmatprep.mubr.bf16.mxu0 0
  %1728 = vmatmul.mubr.bf16.gmra.mxu0 %v970
  %v1729 = vpop.f32.mrf.mxu0
  %v1730 = vadd.f32 0.0, %v1729
  %v1731 = vpop.f32.mrf.mxu0
  %v1732 = vpop.f32.mrf.mxu0
  %v1733 = vadd.f32 0.0, %v1732
  %v1734 = vpop.f32.mrf.mxu0
  %1735 = vmatprep.mubr.bf16.mxu0 0
  %1736 = vmatmul.mubr.bf16.gmra.mxu0 %v973
  %v1737 = vpop.f32.mrf.mxu0
  %v1738 = vadd.f32 0.0, %v1737
  %v1739 = vpop.f32.mrf.mxu0
  %v1740 = vpop.f32.mrf.mxu0
  %v1741 = vadd.f32 0.0, %v1740
  %v1742 = vpop.f32.mrf.mxu0
  %1743 = vmatprep.mubr.bf16.mxu0 0
  %1744 = vmatmul.mubr.bf16.gmra.mxu0 %v976
  %v1745 = vpop.f32.mrf.mxu0
  %v1746 = vadd.f32 0.0, %v1745
  %v1747 = vpop.f32.mrf.mxu0
  %v1748 = vpop.f32.mrf.mxu0
  %v1749 = vadd.f32 0.0, %v1748
  %v1750 = vpop.f32.mrf.mxu0
  %1751 = vmatprep.mubr.bf16.mxu0 0
  %1752 = vmatmul.mubr.bf16.gmra.mxu0 %v979
  %v1753 = vpop.f32.mrf.mxu0
  %v1754 = vadd.f32 0.0, %v1753
  %v1755 = vpop.f32.mrf.mxu0
  %v1756 = vpop.f32.mrf.mxu0
  %v1757 = vadd.f32 0.0, %v1756
  %v1758 = vpop.f32.mrf.mxu0
  %1759 = vmatprep.mubr.bf16.mxu0 0
  %1760 = vmatmul.mubr.bf16.gmra.mxu0 %v982
  %v1761 = vpop.f32.mrf.mxu0
  %v1762 = vadd.f32 0.0, %v1761
  %v1763 = vpop.f32.mrf.mxu0
  %v1764 = vpop.f32.mrf.mxu0
  %v1765 = vadd.f32 0.0, %v1764
  %v1766 = vpop.f32.mrf.mxu0
  %1767 = vmatprep.mubr.bf16.mxu0 0
  %1768 = vmatmul.mubr.bf16.gmra.mxu0 %v985
  %v1769 = vpop.f32.mrf.mxu0
  %v1770 = vadd.f32 0.0, %v1769
  %v1771 = vpop.f32.mrf.mxu0
  %v1772 = vpop.f32.mrf.mxu0
  %v1773 = vadd.f32 0.0, %v1772
  %v1774 = vpop.f32.mrf.mxu0
  %1775 = vmatprep.mubr.bf16.mxu0 0
  %1776 = vmatmul.mubr.bf16.gmra.mxu0 %v988
  %v1777 = vpop.f32.mrf.mxu0
  %v1778 = vadd.f32 0.0, %v1777
  %v1779 = vpop.f32.mrf.mxu0
  %v1780 = vpop.f32.mrf.mxu0
  %v1781 = vadd.f32 0.0, %v1780
  %v1782 = vpop.f32.mrf.mxu0
  %1783 = vmatprep.mubr.bf16.mxu0 0
  %1784 = vmatmul.mubr.bf16.gmra.mxu0 %v991
  %v1785 = vpop.f32.mrf.mxu0
  %v1786 = vadd.f32 0.0, %v1785
  %v1787 = vpop.f32.mrf.mxu0
  %v1788 = vpop.f32.mrf.mxu0
  %v1789 = vadd.f32 0.0, %v1788
  %v1790 = vpop.f32.mrf.mxu0
  %1791 = vmatprep.mubr.bf16.mxu0 0
  %1792 = vmatmul.mubr.bf16.gmra.mxu0 %v994
  %v1793 = vpop.f32.mrf.mxu0
  %v1794 = vadd.f32 0.0, %v1793
  %v1795 = vpop.f32.mrf.mxu0
  %v1796 = vpop.f32.mrf.mxu0
  %v1797 = vadd.f32 0.0, %v1796
  %v1798 = vpop.f32.mrf.mxu0
  %1799 = vmatprep.mubr.bf16.mxu0 0
  %1800 = vmatmul.mubr.bf16.gmra.mxu0 %v997
  %v1801 = vpop.f32.mrf.mxu0
  %v1802 = vadd.f32 0.0, %v1801
  %v1803 = vpop.f32.mrf.mxu0
  %v1804 = vpop.f32.mrf.mxu0
  %v1805 = vadd.f32 0.0, %v1804
  %v1806 = vpop.f32.mrf.mxu0
  %1807 = vmatprep.mubr.bf16.mxu0 0
  %1808 = vmatmul.mubr.bf16.gmra.mxu0 %v1000
  %v1809 = vpop.f32.mrf.mxu0
  %v1810 = vadd.f32 0.0, %v1809
  %v1811 = vpop.f32.mrf.mxu0
  %v1812 = vpop.f32.mrf.mxu0
  %v1813 = vadd.f32 0.0, %v1812
  %v1814 = vpop.f32.mrf.mxu0
  %1815 = vmatprep.mubr.bf16.mxu0 0
  %1816 = vmatmul.mubr.bf16.gmra.mxu0 %v1003
  %v1817 = vpop.f32.mrf.mxu0
  %v1818 = vadd.f32 0.0, %v1817
  %v1819 = vpop.f32.mrf.mxu0
  %v1820 = vpop.f32.mrf.mxu0
  %v1821 = vadd.f32 0.0, %v1820
  %v1822 = vpop.f32.mrf.mxu0
  %1823 = vmatprep.mubr.bf16.mxu0 0
  %1824 = vmatmul.mubr.bf16.gmra.mxu0 %v1006
  %v1825 = vpop.f32.mrf.mxu0
  %v1826 = vadd.f32 0.0, %v1825
  %v1827 = vpop.f32.mrf.mxu0
  %v1828 = vpop.f32.mrf.mxu0
  %v1829 = vadd.f32 0.0, %v1828
  %v1830 = vpop.f32.mrf.mxu0
  %1831 = vdwg.mxu0
  %v1832 = vpack.c.bf16 %v1053, %v1050
  %v1833 = vpack.c.bf16 %v1061, %v1058
  %v1834 = vpack.c.bf16 %v1069, %v1066
  %v1835 = vpack.c.bf16 %v1077, %v1074
  %v1836 = vpack.c.bf16 %v1085, %v1082
  %v1837 = vpack.c.bf16 %v1093, %v1090
  %v1838 = vpack.c.bf16 %v1101, %v1098
  %v1839 = vpack.c.bf16 %v1109, %v1106
  %v1840 = vpack.c.bf16 %v1117, %v1114
  %v1841 = vpack.c.bf16 %v1125, %v1122
  %v1842 = vpack.c.bf16 %v1133, %v1130
  %v1843 = vpack.c.bf16 %v1141, %v1138
  %v1844 = vpack.c.bf16 %v1149, %v1146
  %v1845 = vpack.c.bf16 %v1157, %v1154
  %v1846 = vpack.c.bf16 %v1165, %v1162
  %v1847 = vpack.c.bf16 %v1173, %v1170
  %v1848 = vpack.c.bf16 %v1181, %v1178
  %v1849 = vpack.c.bf16 %v1189, %v1186
  %v1850 = vpack.c.bf16 %v1197, %v1194
  %v1851 = vpack.c.bf16 %v1205, %v1202
  %v1852 = vpack.c.bf16 %v1213, %v1210
  %v1853 = vpack.c.bf16 %v1221, %v1218
  %v1854 = vpack.c.bf16 %v1229, %v1226
  %v1855 = vpack.c.bf16 %v1237, %v1234
  %v1856 = vpack.c.bf16 %v1245, %v1242
  %v1857 = vpack.c.bf16 %v1253, %v1250
  %v1858 = vpack.c.bf16 %v1261, %v1258
  %v1859 = vpack.c.bf16 %v1269, %v1266
  %v1860 = vpack.c.bf16 %v1277, %v1274
  %v1861 = vpack.c.bf16 %v1285, %v1282
  %v1862 = vpack.c.bf16 %v1293, %v1290
  %v1863 = vpack.c.bf16 %v1301, %v1298
  %v1864 = vpack.c.bf16 %v1309, %v1306
  %v1865 = vpack.c.bf16 %v1317, %v1314
  %v1866 = vpack.c.bf16 %v1325, %v1322
  %v1867 = vpack.c.bf16 %v1333, %v1330
  %v1868 = vpack.c.bf16 %v1341, %v1338
  %v1869 = vpack.c.bf16 %v1349, %v1346
  %v1870 = vpack.c.bf16 %v1357, %v1354
  %v1871 = vpack.c.bf16 %v1365, %v1362
  %v1872 = vpack.c.bf16 %v1373, %v1370
  %v1873 = vpack.c.bf16 %v1381, %v1378
  %v1874 = vpack.c.bf16 %v1389, %v1386
  %v1875 = vpack.c.bf16 %v1397, %v1394
  %v1876 = vpack.c.bf16 %v1405, %v1402
  %v1877 = vpack.c.bf16 %v1413, %v1410
  %v1878 = vpack.c.bf16 %v1421, %v1418
  %v1879 = vpack.c.bf16 %v1429, %v1426
  %v1880 = vpack.c.bf16 %v1437, %v1434
  %v1881 = vpack.c.bf16 %v1445, %v1442
  %v1882 = vpack.c.bf16 %v1453, %v1450
  %v1883 = vpack.c.bf16 %v1461, %v1458
  %v1884 = vpack.c.bf16 %v1469, %v1466
  %v1885 = vpack.c.bf16 %v1477, %v1474
  %v1886 = vpack.c.bf16 %v1485, %v1482
  %v1887 = vpack.c.bf16 %v1493, %v1490
  %v1888 = vpack.c.bf16 %v1501, %v1498
  %v1889 = vpack.c.bf16 %v1509, %v1506
  %v1890 = vpack.c.bf16 %v1517, %v1514
  %v1891 = vpack.c.bf16 %v1525, %v1522
  %v1892 = vpack.c.bf16 %v1533, %v1530
  %v1893 = vpack.c.bf16 %v1541, %v1538
  %v1894 = vpack.c.bf16 %v1549, %v1546
  %v1895 = vpack.c.bf16 %v1557, %v1554
  %v1896 = vpack.c.bf16 %v1565, %v1562
  %v1897 = vpack.c.bf16 %v1573, %v1570
  %v1898 = vpack.c.bf16 %v1581, %v1578
  %v1899 = vpack.c.bf16 %v1589, %v1586
  %v1900 = vpack.c.bf16 %v1597, %v1594
  %v1901 = vpack.c.bf16 %v1605, %v1602
  %v1902 = vpack.c.bf16 %v1613, %v1610
  %v1903 = vpack.c.bf16 %v1621, %v1618
  %v1904 = vpack.c.bf16 %v1629, %v1626
  %v1905 = vpack.c.bf16 %v1637, %v1634
  %v1906 = vpack.c.bf16 %v1645, %v1642
  %v1907 = vpack.c.bf16 %v1653, %v1650
  %v1908 = vpack.c.bf16 %v1661, %v1658
  %v1909 = vpack.c.bf16 %v1669, %v1666
  %v1910 = vpack.c.bf16 %v1677, %v1674
  %v1911 = vpack.c.bf16 %v1685, %v1682
  %v1912 = vpack.c.bf16 %v1693, %v1690
  %v1913 = vpack.c.bf16 %v1701, %v1698
  %v1914 = vpack.c.bf16 %v1709, %v1706
  %v1915 = vpack.c.bf16 %v1717, %v1714
  %v1916 = vpack.c.bf16 %v1725, %v1722
  %v1917 = vpack.c.bf16 %v1733, %v1730
  %v1918 = vpack.c.bf16 %v1741, %v1738
  %v1919 = vpack.c.bf16 %v1749, %v1746
  %v1920 = vpack.c.bf16 %v1757, %v1754
  %v1921 = vpack.c.bf16 %v1765, %v1762
  %v1922 = vpack.c.bf16 %v1773, %v1770
  %v1923 = vpack.c.bf16 %v1781, %v1778
  %v1924 = vpack.c.bf16 %v1789, %v1786
  %v1925 = vpack.c.bf16 %v1797, %v1794
  %v1926 = vpack.c.bf16 %v1805, %v1802
  %v1927 = vpack.c.bf16 %v1813, %v1810
  %v1928 = vpack.c.bf16 %v1821, %v1818
  %v1929 = vpack.c.bf16 %v1829, %v1826
  %v1930 = vunpack.c.l.bf16 %v1832
  %v1931 = vunpack.c.h.bf16 %v1832
  %v1932 = vunpack.c.l.bf16 %v1833
  %v1933 = vunpack.c.h.bf16 %v1833
  %v1934 = vunpack.c.l.bf16 %v1834
  %v1935 = vunpack.c.h.bf16 %v1834
  %v1936 = vunpack.c.l.bf16 %v1835
  %v1937 = vunpack.c.h.bf16 %v1835
  %v1938 = vunpack.c.l.bf16 %v1836
  %v1939 = vunpack.c.h.bf16 %v1836
  %v1940 = vunpack.c.l.bf16 %v1837
  %v1941 = vunpack.c.h.bf16 %v1837
  %v1942 = vunpack.c.l.bf16 %v1838
  %v1943 = vunpack.c.h.bf16 %v1838
  %v1944 = vunpack.c.l.bf16 %v1839
  %v1945 = vunpack.c.h.bf16 %v1839
  %v1946 = vunpack.c.l.bf16 %v1840
  %v1947 = vunpack.c.h.bf16 %v1840
  %v1948 = vunpack.c.l.bf16 %v1841
  %v1949 = vunpack.c.h.bf16 %v1841
  %v1950 = vunpack.c.l.bf16 %v1842
  %v1951 = vunpack.c.h.bf16 %v1842
  %v1952 = vunpack.c.l.bf16 %v1843
  %v1953 = vunpack.c.h.bf16 %v1843
  %v1954 = vunpack.c.l.bf16 %v1844
  %v1955 = vunpack.c.h.bf16 %v1844
  %v1956 = vunpack.c.l.bf16 %v1845
  %v1957 = vunpack.c.h.bf16 %v1845
  %v1958 = vunpack.c.l.bf16 %v1846
  %v1959 = vunpack.c.h.bf16 %v1846
  %v1960 = vunpack.c.l.bf16 %v1847
  %v1961 = vunpack.c.h.bf16 %v1847
  %v1962 = vunpack.c.l.bf16 %v1848
  %v1963 = vunpack.c.h.bf16 %v1848
  %v1964 = vunpack.c.l.bf16 %v1849
  %v1965 = vunpack.c.h.bf16 %v1849
  %v1966 = vunpack.c.l.bf16 %v1850
  %v1967 = vunpack.c.h.bf16 %v1850
  %v1968 = vunpack.c.l.bf16 %v1851
  %v1969 = vunpack.c.h.bf16 %v1851
  %v1970 = vunpack.c.l.bf16 %v1852
  %v1971 = vunpack.c.h.bf16 %v1852
  %v1972 = vunpack.c.l.bf16 %v1853
  %v1973 = vunpack.c.h.bf16 %v1853
  %v1974 = vunpack.c.l.bf16 %v1854
  %v1975 = vunpack.c.h.bf16 %v1854
  %v1976 = vunpack.c.l.bf16 %v1855
  %v1977 = vunpack.c.h.bf16 %v1855
  %v1978 = vunpack.c.l.bf16 %v1856
  %v1979 = vunpack.c.h.bf16 %v1856
  %v1980 = vunpack.c.l.bf16 %v1857
  %v1981 = vunpack.c.h.bf16 %v1857
  %v1982 = vunpack.c.l.bf16 %v1858
  %v1983 = vunpack.c.h.bf16 %v1858
  %v1984 = vunpack.c.l.bf16 %v1859
  %v1985 = vunpack.c.h.bf16 %v1859
  %v1986 = vunpack.c.l.bf16 %v1860
  %v1987 = vunpack.c.h.bf16 %v1860
  %v1988 = vunpack.c.l.bf16 %v1861
  %v1989 = vunpack.c.h.bf16 %v1861
  %v1990 = vunpack.c.l.bf16 %v1862
  %v1991 = vunpack.c.h.bf16 %v1862
  %v1992 = vunpack.c.l.bf16 %v1863
  %v1993 = vunpack.c.h.bf16 %v1863
  %v1994 = vunpack.c.l.bf16 %v1864
  %v1995 = vunpack.c.h.bf16 %v1864
  %v1996 = vunpack.c.l.bf16 %v1865
  %v1997 = vunpack.c.h.bf16 %v1865
  %v1998 = vunpack.c.l.bf16 %v1866
  %v1999 = vunpack.c.h.bf16 %v1866
  %v2000 = vunpack.c.l.bf16 %v1867
  %v2001 = vunpack.c.h.bf16 %v1867
  %v2002 = vunpack.c.l.bf16 %v1868
  %v2003 = vunpack.c.h.bf16 %v1868
  %v2004 = vunpack.c.l.bf16 %v1869
  %v2005 = vunpack.c.h.bf16 %v1869
  %v2006 = vunpack.c.l.bf16 %v1870
  %v2007 = vunpack.c.h.bf16 %v1870
  %v2008 = vunpack.c.l.bf16 %v1871
  %v2009 = vunpack.c.h.bf16 %v1871
  %v2010 = vunpack.c.l.bf16 %v1872
  %v2011 = vunpack.c.h.bf16 %v1872
  %v2012 = vunpack.c.l.bf16 %v1873
  %v2013 = vunpack.c.h.bf16 %v1873
  %v2014 = vunpack.c.l.bf16 %v1874
  %v2015 = vunpack.c.h.bf16 %v1874
  %v2016 = vunpack.c.l.bf16 %v1875
  %v2017 = vunpack.c.h.bf16 %v1875
  %v2018 = vunpack.c.l.bf16 %v1876
  %v2019 = vunpack.c.h.bf16 %v1876
  %v2020 = vunpack.c.l.bf16 %v1877
  %v2021 = vunpack.c.h.bf16 %v1877
  %v2022 = vunpack.c.l.bf16 %v1878
  %v2023 = vunpack.c.h.bf16 %v1878
  %v2024 = vunpack.c.l.bf16 %v1879
  %v2025 = vunpack.c.h.bf16 %v1879
  %v2026 = vunpack.c.l.bf16 %v1880
  %v2027 = vunpack.c.h.bf16 %v1880
  %v2028 = vunpack.c.l.bf16 %v1881
  %v2029 = vunpack.c.h.bf16 %v1881
  %v2030 = vunpack.c.l.bf16 %v1882
  %v2031 = vunpack.c.h.bf16 %v1882
  %v2032 = vunpack.c.l.bf16 %v1883
  %v2033 = vunpack.c.h.bf16 %v1883
  %v2034 = vunpack.c.l.bf16 %v1884
  %v2035 = vunpack.c.h.bf16 %v1884
  %v2036 = vunpack.c.l.bf16 %v1885
  %v2037 = vunpack.c.h.bf16 %v1885
  %v2038 = vunpack.c.l.bf16 %v1886
  %v2039 = vunpack.c.h.bf16 %v1886
  %v2040 = vunpack.c.l.bf16 %v1887
  %v2041 = vunpack.c.h.bf16 %v1887
  %v2042 = vunpack.c.l.bf16 %v1888
  %v2043 = vunpack.c.h.bf16 %v1888
  %v2044 = vunpack.c.l.bf16 %v1889
  %v2045 = vunpack.c.h.bf16 %v1889
  %v2046 = vunpack.c.l.bf16 %v1890
  %v2047 = vunpack.c.h.bf16 %v1890
  %v2048 = vunpack.c.l.bf16 %v1891
  %v2049 = vunpack.c.h.bf16 %v1891
  %v2050 = vunpack.c.l.bf16 %v1892
  %v2051 = vunpack.c.h.bf16 %v1892
  %v2052 = vunpack.c.l.bf16 %v1893
  %v2053 = vunpack.c.h.bf16 %v1893
  %v2054 = vunpack.c.l.bf16 %v1894
  %v2055 = vunpack.c.h.bf16 %v1894
  %v2056 = vunpack.c.l.bf16 %v1895
  %v2057 = vunpack.c.h.bf16 %v1895
  %v2058 = vunpack.c.l.bf16 %v1896
  %v2059 = vunpack.c.h.bf16 %v1896
  %v2060 = vunpack.c.l.bf16 %v1897
  %v2061 = vunpack.c.h.bf16 %v1897
  %v2062 = vunpack.c.l.bf16 %v1898
  %v2063 = vunpack.c.h.bf16 %v1898
  %v2064 = vunpack.c.l.bf16 %v1899
  %v2065 = vunpack.c.h.bf16 %v1899
  %v2066 = vunpack.c.l.bf16 %v1900
  %v2067 = vunpack.c.h.bf16 %v1900
  %v2068 = vunpack.c.l.bf16 %v1901
  %v2069 = vunpack.c.h.bf16 %v1901
  %v2070 = vunpack.c.l.bf16 %v1902
  %v2071 = vunpack.c.h.bf16 %v1902
  %v2072 = vunpack.c.l.bf16 %v1903
  %v2073 = vunpack.c.h.bf16 %v1903
  %v2074 = vunpack.c.l.bf16 %v1904
  %v2075 = vunpack.c.h.bf16 %v1904
  %v2076 = vunpack.c.l.bf16 %v1905
  %v2077 = vunpack.c.h.bf16 %v1905
  %v2078 = vunpack.c.l.bf16 %v1906
  %v2079 = vunpack.c.h.bf16 %v1906
  %v2080 = vunpack.c.l.bf16 %v1907
  %v2081 = vunpack.c.h.bf16 %v1907
  %v2082 = vunpack.c.l.bf16 %v1908
  %v2083 = vunpack.c.h.bf16 %v1908
  %v2084 = vunpack.c.l.bf16 %v1909
  %v2085 = vunpack.c.h.bf16 %v1909
  %v2086 = vunpack.c.l.bf16 %v1910
  %v2087 = vunpack.c.h.bf16 %v1910
  %v2088 = vunpack.c.l.bf16 %v1911
  %v2089 = vunpack.c.h.bf16 %v1911
  %v2090 = vunpack.c.l.bf16 %v1912
  %v2091 = vunpack.c.h.bf16 %v1912
  %v2092 = vunpack.c.l.bf16 %v1913
  %v2093 = vunpack.c.h.bf16 %v1913
  %v2094 = vunpack.c.l.bf16 %v1914
  %v2095 = vunpack.c.h.bf16 %v1914
  %v2096 = vunpack.c.l.bf16 %v1915
  %v2097 = vunpack.c.h.bf16 %v1915
  %v2098 = vunpack.c.l.bf16 %v1916
  %v2099 = vunpack.c.h.bf16 %v1916
  %v2100 = vunpack.c.l.bf16 %v1917
  %v2101 = vunpack.c.h.bf16 %v1917
  %v2102 = vunpack.c.l.bf16 %v1918
  %v2103 = vunpack.c.h.bf16 %v1918
  %v2104 = vunpack.c.l.bf16 %v1919
  %v2105 = vunpack.c.h.bf16 %v1919
  %v2106 = vunpack.c.l.bf16 %v1920
  %v2107 = vunpack.c.h.bf16 %v1920
  %v2108 = vunpack.c.l.bf16 %v1921
  %v2109 = vunpack.c.h.bf16 %v1921
  %v2110 = vunpack.c.l.bf16 %v1922
  %v2111 = vunpack.c.h.bf16 %v1922
  %v2112 = vunpack.c.l.bf16 %v1923
  %v2113 = vunpack.c.h.bf16 %v1923
  %v2114 = vunpack.c.l.bf16 %v1924
  %v2115 = vunpack.c.h.bf16 %v1924
  %v2116 = vunpack.c.l.bf16 %v1925
  %v2117 = vunpack.c.h.bf16 %v1925
  %v2118 = vunpack.c.l.bf16 %v1926
  %v2119 = vunpack.c.h.bf16 %v1926
  %v2120 = vunpack.c.l.bf16 %v1927
  %v2121 = vunpack.c.h.bf16 %v1927
  %v2122 = vunpack.c.l.bf16 %v1928
  %v2123 = vunpack.c.h.bf16 %v1928
  %v2124 = vunpack.c.l.bf16 %v1929
  %v2125 = vunpack.c.h.bf16 %v1929
  %vm2126 = vcmask 48128
  %v2127 = vsel %vm2126, %v1930, 0.0
  %v2128 = vsel %vm2126, %v1931, 0.0
  %v2129 = vadd.f32 %v2127, %v2128
  %v2130 = vsel %vm2126, %v1932, 0.0
  %v2131 = vadd.f32 %v2129, %v2130
  %v2132 = vsel %vm2126, %v1933, 0.0
  %v2133 = vadd.f32 %v2131, %v2132
  %v2134 = vsel %vm2126, %v1934, 0.0
  %v2135 = vadd.f32 %v2133, %v2134
  %v2136 = vsel %vm2126, %v1935, 0.0
  %v2137 = vadd.f32 %v2135, %v2136
  %v2138 = vsel %vm2126, %v1936, 0.0
  %v2139 = vadd.f32 %v2137, %v2138
  %v2140 = vsel %vm2126, %v1937, 0.0
  %v2141 = vadd.f32 %v2139, %v2140
  %v2142 = vsel %vm2126, %v1938, 0.0
  %v2143 = vadd.f32 %v2141, %v2142
  %v2144 = vsel %vm2126, %v1939, 0.0
  %v2145 = vadd.f32 %v2143, %v2144
  %v2146 = vsel %vm2126, %v1940, 0.0
  %v2147 = vadd.f32 %v2145, %v2146
  %v2148 = vsel %vm2126, %v1941, 0.0
  %v2149 = vadd.f32 %v2147, %v2148
  %v2150 = vsel %vm2126, %v1942, 0.0
  %v2151 = vadd.f32 %v2149, %v2150
  %v2152 = vsel %vm2126, %v1943, 0.0
  %v2153 = vadd.f32 %v2151, %v2152
  %v2154 = vsel %vm2126, %v1944, 0.0
  %v2155 = vadd.f32 %v2153, %v2154
  %v2156 = vsel %vm2126, %v1945, 0.0
  %v2157 = vadd.f32 %v2155, %v2156
  %v2158 = vsel %vm2126, %v1946, 0.0
  %v2159 = vadd.f32 %v2157, %v2158
  %v2160 = vsel %vm2126, %v1947, 0.0
  %v2161 = vadd.f32 %v2159, %v2160
  %v2162 = vsel %vm2126, %v1948, 0.0
  %v2163 = vadd.f32 %v2161, %v2162
  %v2164 = vsel %vm2126, %v1949, 0.0
  %v2165 = vadd.f32 %v2163, %v2164
  %v2166 = vsel %vm2126, %v1950, 0.0
  %v2167 = vadd.f32 %v2165, %v2166
  %v2168 = vsel %vm2126, %v1951, 0.0
  %v2169 = vadd.f32 %v2167, %v2168
  %v2170 = vsel %vm2126, %v1952, 0.0
  %v2171 = vadd.f32 %v2169, %v2170
  %v2172 = vsel %vm2126, %v1953, 0.0
  %v2173 = vadd.f32 %v2171, %v2172
  %v2174 = vsel %vm2126, %v1954, 0.0
  %v2175 = vadd.f32 %v2173, %v2174
  %v2176 = vsel %vm2126, %v1955, 0.0
  %v2177 = vadd.f32 %v2175, %v2176
  %v2178 = vsel %vm2126, %v1956, 0.0
  %v2179 = vadd.f32 %v2177, %v2178
  %v2180 = vsel %vm2126, %v1957, 0.0
  %v2181 = vadd.f32 %v2179, %v2180
  %v2182 = vsel %vm2126, %v1958, 0.0
  %v2183 = vadd.f32 %v2181, %v2182
  %v2184 = vsel %vm2126, %v1959, 0.0
  %v2185 = vadd.f32 %v2183, %v2184
  %v2186 = vsel %vm2126, %v1960, 0.0
  %v2187 = vadd.f32 %v2185, %v2186
  %v2188 = vsel %vm2126, %v1961, 0.0
  %v2189 = vadd.f32 %v2187, %v2188
  %v2190 = vsel %vm2126, %v1962, 0.0
  %v2191 = vadd.f32 %v2189, %v2190
  %v2192 = vsel %vm2126, %v1963, 0.0
  %v2193 = vadd.f32 %v2191, %v2192
  %v2194 = vsel %vm2126, %v1964, 0.0
  %v2195 = vadd.f32 %v2193, %v2194
  %v2196 = vsel %vm2126, %v1965, 0.0
  %v2197 = vadd.f32 %v2195, %v2196
  %v2198 = vsel %vm2126, %v1966, 0.0
  %v2199 = vadd.f32 %v2197, %v2198
  %v2200 = vsel %vm2126, %v1967, 0.0
  %v2201 = vadd.f32 %v2199, %v2200
  %v2202 = vsel %vm2126, %v1968, 0.0
  %v2203 = vadd.f32 %v2201, %v2202
  %v2204 = vsel %vm2126, %v1969, 0.0
  %v2205 = vadd.f32 %v2203, %v2204
  %v2206 = vsel %vm2126, %v1970, 0.0
  %v2207 = vadd.f32 %v2205, %v2206
  %v2208 = vsel %vm2126, %v1971, 0.0
  %v2209 = vadd.f32 %v2207, %v2208
  %v2210 = vsel %vm2126, %v1972, 0.0
  %v2211 = vadd.f32 %v2209, %v2210
  %v2212 = vsel %vm2126, %v1973, 0.0
  %v2213 = vadd.f32 %v2211, %v2212
  %v2214 = vsel %vm2126, %v1974, 0.0
  %v2215 = vadd.f32 %v2213, %v2214
  %v2216 = vsel %vm2126, %v1975, 0.0
  %v2217 = vadd.f32 %v2215, %v2216
  %v2218 = vsel %vm2126, %v1976, 0.0
  %v2219 = vadd.f32 %v2217, %v2218
  %v2220 = vsel %vm2126, %v1977, 0.0
  %v2221 = vadd.f32 %v2219, %v2220
  %v2222 = vsel %vm2126, %v1978, 0.0
  %v2223 = vadd.f32 %v2221, %v2222
  %v2224 = vsel %vm2126, %v1979, 0.0
  %v2225 = vadd.f32 %v2223, %v2224
  %v2226 = vsel %vm2126, %v1980, 0.0
  %v2227 = vadd.f32 %v2225, %v2226
  %v2228 = vsel %vm2126, %v1981, 0.0
  %v2229 = vadd.f32 %v2227, %v2228
  %v2230 = vsel %vm2126, %v1982, 0.0
  %v2231 = vadd.f32 %v2229, %v2230
  %v2232 = vsel %vm2126, %v1983, 0.0
  %v2233 = vadd.f32 %v2231, %v2232
  %v2234 = vsel %vm2126, %v1984, 0.0
  %v2235 = vadd.f32 %v2233, %v2234
  %v2236 = vsel %vm2126, %v1985, 0.0
  %v2237 = vadd.f32 %v2235, %v2236
  %v2238 = vsel %vm2126, %v1986, 0.0
  %v2239 = vadd.f32 %v2237, %v2238
  %v2240 = vsel %vm2126, %v1987, 0.0
  %v2241 = vadd.f32 %v2239, %v2240
  %v2242 = vsel %vm2126, %v1988, 0.0
  %v2243 = vadd.f32 %v2241, %v2242
  %v2244 = vsel %vm2126, %v1989, 0.0
  %v2245 = vadd.f32 %v2243, %v2244
  %v2246 = vsel %vm2126, %v1990, 0.0
  %v2247 = vadd.f32 %v2245, %v2246
  %v2248 = vsel %vm2126, %v1991, 0.0
  %v2249 = vadd.f32 %v2247, %v2248
  %v2250 = vsel %vm2126, %v1992, 0.0
  %v2251 = vadd.f32 %v2249, %v2250
  %v2252 = vsel %vm2126, %v1993, 0.0
  %v2253 = vadd.f32 %v2251, %v2252
  %v2254 = vsel %vm2126, %v1994, 0.0
  %v2255 = vadd.f32 %v2253, %v2254
  %v2256 = vsel %vm2126, %v1995, 0.0
  %v2257 = vadd.f32 %v2255, %v2256
  %v2258 = vsel %vm2126, %v1996, 0.0
  %v2259 = vadd.f32 %v2257, %v2258
  %v2260 = vsel %vm2126, %v1997, 0.0
  %v2261 = vadd.f32 %v2259, %v2260
  %v2262 = vsel %vm2126, %v1998, 0.0
  %v2263 = vadd.f32 %v2261, %v2262
  %v2264 = vsel %vm2126, %v1999, 0.0
  %v2265 = vadd.f32 %v2263, %v2264
  %v2266 = vsel %vm2126, %v2000, 0.0
  %v2267 = vadd.f32 %v2265, %v2266
  %v2268 = vsel %vm2126, %v2001, 0.0
  %v2269 = vadd.f32 %v2267, %v2268
  %v2270 = vsel %vm2126, %v2002, 0.0
  %v2271 = vadd.f32 %v2269, %v2270
  %v2272 = vsel %vm2126, %v2003, 0.0
  %v2273 = vadd.f32 %v2271, %v2272
  %v2274 = vsel %vm2126, %v2004, 0.0
  %v2275 = vadd.f32 %v2273, %v2274
  %v2276 = vsel %vm2126, %v2005, 0.0
  %v2277 = vadd.f32 %v2275, %v2276
  %v2278 = vsel %vm2126, %v2006, 0.0
  %v2279 = vadd.f32 %v2277, %v2278
  %v2280 = vsel %vm2126, %v2007, 0.0
  %v2281 = vadd.f32 %v2279, %v2280
  %v2282 = vsel %vm2126, %v2008, 0.0
  %v2283 = vadd.f32 %v2281, %v2282
  %v2284 = vsel %vm2126, %v2009, 0.0
  %v2285 = vadd.f32 %v2283, %v2284
  %v2286 = vsel %vm2126, %v2010, 0.0
  %v2287 = vadd.f32 %v2285, %v2286
  %v2288 = vsel %vm2126, %v2011, 0.0
  %v2289 = vadd.f32 %v2287, %v2288
  %v2290 = vsel %vm2126, %v2012, 0.0
  %v2291 = vadd.f32 %v2289, %v2290
  %v2292 = vsel %vm2126, %v2013, 0.0
  %v2293 = vadd.f32 %v2291, %v2292
  %v2294 = vsel %vm2126, %v2014, 0.0
  %v2295 = vadd.f32 %v2293, %v2294
  %v2296 = vsel %vm2126, %v2015, 0.0
  %v2297 = vadd.f32 %v2295, %v2296
  %v2298 = vsel %vm2126, %v2016, 0.0
  %v2299 = vadd.f32 %v2297, %v2298
  %v2300 = vsel %vm2126, %v2017, 0.0
  %v2301 = vadd.f32 %v2299, %v2300
  %v2302 = vsel %vm2126, %v2018, 0.0
  %v2303 = vadd.f32 %v2301, %v2302
  %v2304 = vsel %vm2126, %v2019, 0.0
  %v2305 = vadd.f32 %v2303, %v2304
  %v2306 = vsel %vm2126, %v2020, 0.0
  %v2307 = vadd.f32 %v2305, %v2306
  %v2308 = vsel %vm2126, %v2021, 0.0
  %v2309 = vadd.f32 %v2307, %v2308
  %v2310 = vsel %vm2126, %v2022, 0.0
  %v2311 = vadd.f32 %v2309, %v2310
  %v2312 = vsel %vm2126, %v2023, 0.0
  %v2313 = vadd.f32 %v2311, %v2312
  %v2314 = vsel %vm2126, %v2024, 0.0
  %v2315 = vadd.f32 %v2313, %v2314
  %v2316 = vsel %vm2126, %v2025, 0.0
  %v2317 = vadd.f32 %v2315, %v2316
  %v2318 = vsel %vm2126, %v2026, 0.0
  %v2319 = vadd.f32 %v2317, %v2318
  %v2320 = vsel %vm2126, %v2027, 0.0
  %v2321 = vadd.f32 %v2319, %v2320
  %v2322 = vsel %vm2126, %v2028, 0.0
  %v2323 = vadd.f32 %v2321, %v2322
  %v2324 = vsel %vm2126, %v2029, 0.0
  %v2325 = vadd.f32 %v2323, %v2324
  %v2326 = vsel %vm2126, %v2030, 0.0
  %v2327 = vadd.f32 %v2325, %v2326
  %v2328 = vsel %vm2126, %v2031, 0.0
  %v2329 = vadd.f32 %v2327, %v2328
  %v2330 = vsel %vm2126, %v2032, 0.0
  %v2331 = vadd.f32 %v2329, %v2330
  %v2332 = vsel %vm2126, %v2033, 0.0
  %v2333 = vadd.f32 %v2331, %v2332
  %v2334 = vsel %vm2126, %v2034, 0.0
  %v2335 = vadd.f32 %v2333, %v2334
  %v2336 = vsel %vm2126, %v2035, 0.0
  %v2337 = vadd.f32 %v2335, %v2336
  %v2338 = vsel %vm2126, %v2036, 0.0
  %v2339 = vadd.f32 %v2337, %v2338
  %v2340 = vsel %vm2126, %v2037, 0.0
  %v2341 = vadd.f32 %v2339, %v2340
  %v2342 = vsel %vm2126, %v2038, 0.0
  %v2343 = vadd.f32 %v2341, %v2342
  %v2344 = vsel %vm2126, %v2039, 0.0
  %v2345 = vadd.f32 %v2343, %v2344
  %v2346 = vsel %vm2126, %v2040, 0.0
  %v2347 = vadd.f32 %v2345, %v2346
  %v2348 = vsel %vm2126, %v2041, 0.0
  %v2349 = vadd.f32 %v2347, %v2348
  %v2350 = vsel %vm2126, %v2042, 0.0
  %v2351 = vadd.f32 %v2349, %v2350
  %v2352 = vsel %vm2126, %v2043, 0.0
  %v2353 = vadd.f32 %v2351, %v2352
  %v2354 = vsel %vm2126, %v2044, 0.0
  %v2355 = vadd.f32 %v2353, %v2354
  %v2356 = vsel %vm2126, %v2045, 0.0
  %v2357 = vadd.f32 %v2355, %v2356
  %v2358 = vsel %vm2126, %v2046, 0.0
  %v2359 = vadd.f32 %v2357, %v2358
  %v2360 = vsel %vm2126, %v2047, 0.0
  %v2361 = vadd.f32 %v2359, %v2360
  %v2362 = vsel %vm2126, %v2048, 0.0
  %v2363 = vadd.f32 %v2361, %v2362
  %v2364 = vsel %vm2126, %v2049, 0.0
  %v2365 = vadd.f32 %v2363, %v2364
  %v2366 = vsel %vm2126, %v2050, 0.0
  %v2367 = vadd.f32 %v2365, %v2366
  %v2368 = vsel %vm2126, %v2051, 0.0
  %v2369 = vadd.f32 %v2367, %v2368
  %v2370 = vsel %vm2126, %v2052, 0.0
  %v2371 = vadd.f32 %v2369, %v2370
  %v2372 = vsel %vm2126, %v2053, 0.0
  %v2373 = vadd.f32 %v2371, %v2372
  %v2374 = vsel %vm2126, %v2054, 0.0
  %v2375 = vadd.f32 %v2373, %v2374
  %v2376 = vsel %vm2126, %v2055, 0.0
  %v2377 = vadd.f32 %v2375, %v2376
  %v2378 = vsel %vm2126, %v2056, 0.0
  %v2379 = vadd.f32 %v2377, %v2378
  %v2380 = vsel %vm2126, %v2057, 0.0
  %v2381 = vadd.f32 %v2379, %v2380
  %v2382 = vsel %vm2126, %v2058, 0.0
  %v2383 = vadd.f32 %v2381, %v2382
  %v2384 = vsel %vm2126, %v2059, 0.0
  %v2385 = vadd.f32 %v2383, %v2384
  %v2386 = vsel %vm2126, %v2060, 0.0
  %v2387 = vadd.f32 %v2385, %v2386
  %v2388 = vsel %vm2126, %v2061, 0.0
  %v2389 = vadd.f32 %v2387, %v2388
  %v2390 = vsel %vm2126, %v2062, 0.0
  %v2391 = vadd.f32 %v2389, %v2390
  %v2392 = vsel %vm2126, %v2063, 0.0
  %v2393 = vadd.f32 %v2391, %v2392
  %v2394 = vsel %vm2126, %v2064, 0.0
  %v2395 = vadd.f32 %v2393, %v2394
  %v2396 = vsel %vm2126, %v2065, 0.0
  %v2397 = vadd.f32 %v2395, %v2396
  %v2398 = vsel %vm2126, %v2066, 0.0
  %v2399 = vadd.f32 %v2397, %v2398
  %v2400 = vsel %vm2126, %v2067, 0.0
  %v2401 = vadd.f32 %v2399, %v2400
  %v2402 = vsel %vm2126, %v2068, 0.0
  %v2403 = vadd.f32 %v2401, %v2402
  %v2404 = vsel %vm2126, %v2069, 0.0
  %v2405 = vadd.f32 %v2403, %v2404
  %v2406 = vsel %vm2126, %v2070, 0.0
  %v2407 = vadd.f32 %v2405, %v2406
  %v2408 = vsel %vm2126, %v2071, 0.0
  %v2409 = vadd.f32 %v2407, %v2408
  %v2410 = vsel %vm2126, %v2072, 0.0
  %v2411 = vadd.f32 %v2409, %v2410
  %v2412 = vsel %vm2126, %v2073, 0.0
  %v2413 = vadd.f32 %v2411, %v2412
  %v2414 = vsel %vm2126, %v2074, 0.0
  %v2415 = vadd.f32 %v2413, %v2414
  %v2416 = vsel %vm2126, %v2075, 0.0
  %v2417 = vadd.f32 %v2415, %v2416
  %v2418 = vsel %vm2126, %v2076, 0.0
  %v2419 = vadd.f32 %v2417, %v2418
  %v2420 = vsel %vm2126, %v2077, 0.0
  %v2421 = vadd.f32 %v2419, %v2420
  %v2422 = vsel %vm2126, %v2078, 0.0
  %v2423 = vadd.f32 %v2421, %v2422
  %v2424 = vsel %vm2126, %v2079, 0.0
  %v2425 = vadd.f32 %v2423, %v2424
  %v2426 = vsel %vm2126, %v2080, 0.0
  %v2427 = vadd.f32 %v2425, %v2426
  %v2428 = vsel %vm2126, %v2081, 0.0
  %v2429 = vadd.f32 %v2427, %v2428
  %v2430 = vsel %vm2126, %v2082, 0.0
  %v2431 = vadd.f32 %v2429, %v2430
  %v2432 = vsel %vm2126, %v2083, 0.0
  %v2433 = vadd.f32 %v2431, %v2432
  %v2434 = vsel %vm2126, %v2084, 0.0
  %v2435 = vadd.f32 %v2433, %v2434
  %v2436 = vsel %vm2126, %v2085, 0.0
  %v2437 = vadd.f32 %v2435, %v2436
  %v2438 = vsel %vm2126, %v2086, 0.0
  %v2439 = vadd.f32 %v2437, %v2438
  %v2440 = vsel %vm2126, %v2087, 0.0
  %v2441 = vadd.f32 %v2439, %v2440
  %v2442 = vsel %vm2126, %v2088, 0.0
  %v2443 = vadd.f32 %v2441, %v2442
  %v2444 = vsel %vm2126, %v2089, 0.0
  %v2445 = vadd.f32 %v2443, %v2444
  %v2446 = vsel %vm2126, %v2090, 0.0
  %v2447 = vadd.f32 %v2445, %v2446
  %v2448 = vsel %vm2126, %v2091, 0.0
  %v2449 = vadd.f32 %v2447, %v2448
  %v2450 = vsel %vm2126, %v2092, 0.0
  %v2451 = vadd.f32 %v2449, %v2450
  %v2452 = vsel %vm2126, %v2093, 0.0
  %v2453 = vadd.f32 %v2451, %v2452
  %v2454 = vsel %vm2126, %v2094, 0.0
  %v2455 = vadd.f32 %v2453, %v2454
  %v2456 = vsel %vm2126, %v2095, 0.0
  %v2457 = vadd.f32 %v2455, %v2456
  %v2458 = vsel %vm2126, %v2096, 0.0
  %v2459 = vadd.f32 %v2457, %v2458
  %v2460 = vsel %vm2126, %v2097, 0.0
  %v2461 = vadd.f32 %v2459, %v2460
  %v2462 = vsel %vm2126, %v2098, 0.0
  %v2463 = vadd.f32 %v2461, %v2462
  %v2464 = vsel %vm2126, %v2099, 0.0
  %v2465 = vadd.f32 %v2463, %v2464
  %v2466 = vsel %vm2126, %v2100, 0.0
  %v2467 = vadd.f32 %v2465, %v2466
  %v2468 = vsel %vm2126, %v2101, 0.0
  %v2469 = vadd.f32 %v2467, %v2468
  %v2470 = vsel %vm2126, %v2102, 0.0
  %v2471 = vadd.f32 %v2469, %v2470
  %v2472 = vsel %vm2126, %v2103, 0.0
  %v2473 = vadd.f32 %v2471, %v2472
  %v2474 = vsel %vm2126, %v2104, 0.0
  %v2475 = vadd.f32 %v2473, %v2474
  %v2476 = vsel %vm2126, %v2105, 0.0
  %v2477 = vadd.f32 %v2475, %v2476
  %v2478 = vsel %vm2126, %v2106, 0.0
  %v2479 = vadd.f32 %v2477, %v2478
  %v2480 = vsel %vm2126, %v2107, 0.0
  %v2481 = vadd.f32 %v2479, %v2480
  %v2482 = vsel %vm2126, %v2108, 0.0
  %v2483 = vadd.f32 %v2481, %v2482
  %v2484 = vsel %vm2126, %v2109, 0.0
  %v2485 = vadd.f32 %v2483, %v2484
  %v2486 = vsel %vm2126, %v2110, 0.0
  %v2487 = vadd.f32 %v2485, %v2486
  %v2488 = vsel %vm2126, %v2111, 0.0
  %v2489 = vadd.f32 %v2487, %v2488
  %v2490 = vsel %vm2126, %v2112, 0.0
  %v2491 = vadd.f32 %v2489, %v2490
  %v2492 = vsel %vm2126, %v2113, 0.0
  %v2493 = vadd.f32 %v2491, %v2492
  %v2494 = vsel %vm2126, %v2114, 0.0
  %v2495 = vadd.f32 %v2493, %v2494
  %v2496 = vsel %vm2126, %v2115, 0.0
  %v2497 = vadd.f32 %v2495, %v2496
  %v2498 = vsel %vm2126, %v2116, 0.0
  %v2499 = vadd.f32 %v2497, %v2498
  %v2500 = vsel %vm2126, %v2117, 0.0
  %v2501 = vadd.f32 %v2499, %v2500
  %v2502 = vsel %vm2126, %v2118, 0.0
  %v2503 = vadd.f32 %v2501, %v2502
  %v2504 = vsel %vm2126, %v2119, 0.0
  %v2505 = vadd.f32 %v2503, %v2504
  %v2506 = vsel %vm2126, %v2120, 0.0
  %v2507 = vadd.f32 %v2505, %v2506
  %v2508 = vsel %vm2126, %v2121, 0.0
  %v2509 = vadd.f32 %v2507, %v2508
  %v2510 = vsel %vm2126, %v2122, 0.0
  %v2511 = vadd.f32 %v2509, %v2510
  %v2512 = vsel %vm2126, %v2123, 0.0
  %v2513 = vadd.f32 %v2511, %v2512
  %v2514 = vsel %vm2126, %v2124, 0.0
  %v2515 = vadd.f32 %v2513, %v2514
  %v2516 = vsel %vm2126, %v2125, 0.0
  %v2517 = vadd.f32 %v2515, %v2516
  %v2518 = vrot.slane %v2517, 4
  %v2519 = vadd.f32 %v2517, %v2518
  %v2520 = vrot.slane %v2519, 2
  %v2521 = vadd.f32 %v2519, %v2520
  %v2522 = vrot.slane %v2521, 1
  %v2523 = vadd.f32 %v2521, %v2522
  %v2524 = vmul.f32 %v1930, %v1930
  %v2525 = vmul.f32 %v1931, %v1931
  %v2526 = vmul.f32 %v1932, %v1932
  %v2527 = vmul.f32 %v1933, %v1933
  %v2528 = vmul.f32 %v1934, %v1934
  %v2529 = vmul.f32 %v1935, %v1935
  %v2530 = vmul.f32 %v1936, %v1936
  %v2531 = vmul.f32 %v1937, %v1937
  %v2532 = vmul.f32 %v1938, %v1938
  %v2533 = vmul.f32 %v1939, %v1939
  %v2534 = vmul.f32 %v1940, %v1940
  %v2535 = vmul.f32 %v1941, %v1941
  %v2536 = vmul.f32 %v1942, %v1942
  %v2537 = vmul.f32 %v1943, %v1943
  %v2538 = vmul.f32 %v1944, %v1944
  %v2539 = vmul.f32 %v1945, %v1945
  %v2540 = vmul.f32 %v1946, %v1946
  %v2541 = vmul.f32 %v1947, %v1947
  %v2542 = vmul.f32 %v1948, %v1948
  %v2543 = vmul.f32 %v1949, %v1949
  %v2544 = vmul.f32 %v1950, %v1950
  %v2545 = vmul.f32 %v1951, %v1951
  %v2546 = vmul.f32 %v1952, %v1952
  %v2547 = vmul.f32 %v1953, %v1953
  %v2548 = vmul.f32 %v1954, %v1954
  %v2549 = vmul.f32 %v1955, %v1955
  %v2550 = vmul.f32 %v1956, %v1956
  %v2551 = vmul.f32 %v1957, %v1957
  %v2552 = vmul.f32 %v1958, %v1958
  %v2553 = vmul.f32 %v1959, %v1959
  %v2554 = vmul.f32 %v1960, %v1960
  %v2555 = vmul.f32 %v1961, %v1961
  %v2556 = vmul.f32 %v1962, %v1962
  %v2557 = vmul.f32 %v1963, %v1963
  %v2558 = vmul.f32 %v1964, %v1964
  %v2559 = vmul.f32 %v1965, %v1965
  %v2560 = vmul.f32 %v1966, %v1966
  %v2561 = vmul.f32 %v1967, %v1967
  %v2562 = vmul.f32 %v1968, %v1968
  %v2563 = vmul.f32 %v1969, %v1969
  %v2564 = vmul.f32 %v1970, %v1970
  %v2565 = vmul.f32 %v1971, %v1971
  %v2566 = vmul.f32 %v1972, %v1972
  %v2567 = vmul.f32 %v1973, %v1973
  %v2568 = vmul.f32 %v1974, %v1974
  %v2569 = vmul.f32 %v1975, %v1975
  %v2570 = vmul.f32 %v1976, %v1976
  %v2571 = vmul.f32 %v1977, %v1977
  %v2572 = vmul.f32 %v1978, %v1978
  %v2573 = vmul.f32 %v1979, %v1979
  %v2574 = vmul.f32 %v1980, %v1980
  %v2575 = vmul.f32 %v1981, %v1981
  %v2576 = vmul.f32 %v1982, %v1982
  %v2577 = vmul.f32 %v1983, %v1983
  %v2578 = vmul.f32 %v1984, %v1984
  %v2579 = vmul.f32 %v1985, %v1985
  %v2580 = vmul.f32 %v1986, %v1986
  %v2581 = vmul.f32 %v1987, %v1987
  %v2582 = vmul.f32 %v1988, %v1988
  %v2583 = vmul.f32 %v1989, %v1989
  %v2584 = vmul.f32 %v1990, %v1990
  %v2585 = vmul.f32 %v1991, %v1991
  %v2586 = vmul.f32 %v1992, %v1992
  %v2587 = vmul.f32 %v1993, %v1993
  %v2588 = vmul.f32 %v1994, %v1994
  %v2589 = vmul.f32 %v1995, %v1995
  %v2590 = vmul.f32 %v1996, %v1996
  %v2591 = vmul.f32 %v1997, %v1997
  %v2592 = vmul.f32 %v1998, %v1998
  %v2593 = vmul.f32 %v1999, %v1999
  %v2594 = vmul.f32 %v2000, %v2000
  %v2595 = vmul.f32 %v2001, %v2001
  %v2596 = vmul.f32 %v2002, %v2002
  %v2597 = vmul.f32 %v2003, %v2003
  %v2598 = vmul.f32 %v2004, %v2004
  %v2599 = vmul.f32 %v2005, %v2005
  %v2600 = vmul.f32 %v2006, %v2006
  %v2601 = vmul.f32 %v2007, %v2007
  %v2602 = vmul.f32 %v2008, %v2008
  %v2603 = vmul.f32 %v2009, %v2009
  %v2604 = vmul.f32 %v2010, %v2010
  %v2605 = vmul.f32 %v2011, %v2011
  %v2606 = vmul.f32 %v2012, %v2012
  %v2607 = vmul.f32 %v2013, %v2013
  %v2608 = vmul.f32 %v2014, %v2014
  %v2609 = vmul.f32 %v2015, %v2015
  %v2610 = vmul.f32 %v2016, %v2016
  %v2611 = vmul.f32 %v2017, %v2017
  %v2612 = vmul.f32 %v2018, %v2018
  %v2613 = vmul.f32 %v2019, %v2019
  %v2614 = vmul.f32 %v2020, %v2020
  %v2615 = vmul.f32 %v2021, %v2021
  %v2616 = vmul.f32 %v2022, %v2022
  %v2617 = vmul.f32 %v2023, %v2023
  %v2618 = vmul.f32 %v2024, %v2024
  %v2619 = vmul.f32 %v2025, %v2025
  %v2620 = vmul.f32 %v2026, %v2026
  %v2621 = vmul.f32 %v2027, %v2027
  %v2622 = vmul.f32 %v2028, %v2028
  %v2623 = vmul.f32 %v2029, %v2029
  %v2624 = vmul.f32 %v2030, %v2030
  %v2625 = vmul.f32 %v2031, %v2031
  %v2626 = vmul.f32 %v2032, %v2032
  %v2627 = vmul.f32 %v2033, %v2033
  %v2628 = vmul.f32 %v2034, %v2034
  %v2629 = vmul.f32 %v2035, %v2035
  %v2630 = vmul.f32 %v2036, %v2036
  %v2631 = vmul.f32 %v2037, %v2037
  %v2632 = vmul.f32 %v2038, %v2038
  %v2633 = vmul.f32 %v2039, %v2039
  %v2634 = vmul.f32 %v2040, %v2040
  %v2635 = vmul.f32 %v2041, %v2041
  %v2636 = vmul.f32 %v2042, %v2042
  %v2637 = vmul.f32 %v2043, %v2043
  %v2638 = vmul.f32 %v2044, %v2044
  %v2639 = vmul.f32 %v2045, %v2045
  %v2640 = vmul.f32 %v2046, %v2046
  %v2641 = vmul.f32 %v2047, %v2047
  %v2642 = vmul.f32 %v2048, %v2048
  %v2643 = vmul.f32 %v2049, %v2049
  %v2644 = vmul.f32 %v2050, %v2050
  %v2645 = vmul.f32 %v2051, %v2051
  %v2646 = vmul.f32 %v2052, %v2052
  %v2647 = vmul.f32 %v2053, %v2053
  %v2648 = vmul.f32 %v2054, %v2054
  %v2649 = vmul.f32 %v2055, %v2055
  %v2650 = vmul.f32 %v2056, %v2056
  %v2651 = vmul.f32 %v2057, %v2057
  %v2652 = vmul.f32 %v2058, %v2058
  %v2653 = vmul.f32 %v2059, %v2059
  %v2654 = vmul.f32 %v2060, %v2060
  %v2655 = vmul.f32 %v2061, %v2061
  %v2656 = vmul.f32 %v2062, %v2062
  %v2657 = vmul.f32 %v2063, %v2063
  %v2658 = vmul.f32 %v2064, %v2064
  %v2659 = vmul.f32 %v2065, %v2065
  %v2660 = vmul.f32 %v2066, %v2066
  %v2661 = vmul.f32 %v2067, %v2067
  %v2662 = vmul.f32 %v2068, %v2068
  %v2663 = vmul.f32 %v2069, %v2069
  %v2664 = vmul.f32 %v2070, %v2070
  %v2665 = vmul.f32 %v2071, %v2071
  %v2666 = vmul.f32 %v2072, %v2072
  %v2667 = vmul.f32 %v2073, %v2073
  %v2668 = vmul.f32 %v2074, %v2074
  %v2669 = vmul.f32 %v2075, %v2075
  %v2670 = vmul.f32 %v2076, %v2076
  %v2671 = vmul.f32 %v2077, %v2077
  %v2672 = vmul.f32 %v2078, %v2078
  %v2673 = vmul.f32 %v2079, %v2079
  %v2674 = vmul.f32 %v2080, %v2080
  %v2675 = vmul.f32 %v2081, %v2081
  %v2676 = vmul.f32 %v2082, %v2082
  %v2677 = vmul.f32 %v2083, %v2083
  %v2678 = vmul.f32 %v2084, %v2084
  %v2679 = vmul.f32 %v2085, %v2085
  %v2680 = vmul.f32 %v2086, %v2086
  %v2681 = vmul.f32 %v2087, %v2087
  %v2682 = vmul.f32 %v2088, %v2088
  %v2683 = vmul.f32 %v2089, %v2089
  %v2684 = vmul.f32 %v2090, %v2090
  %v2685 = vmul.f32 %v2091, %v2091
  %v2686 = vmul.f32 %v2092, %v2092
  %v2687 = vmul.f32 %v2093, %v2093
  %v2688 = vmul.f32 %v2094, %v2094
  %v2689 = vmul.f32 %v2095, %v2095
  %v2690 = vmul.f32 %v2096, %v2096
  %v2691 = vmul.f32 %v2097, %v2097
  %v2692 = vmul.f32 %v2098, %v2098
  %v2693 = vmul.f32 %v2099, %v2099
  %v2694 = vmul.f32 %v2100, %v2100
  %v2695 = vmul.f32 %v2101, %v2101
  %v2696 = vmul.f32 %v2102, %v2102
  %v2697 = vmul.f32 %v2103, %v2103
  %v2698 = vmul.f32 %v2104, %v2104
  %v2699 = vmul.f32 %v2105, %v2105
  %v2700 = vmul.f32 %v2106, %v2106
  %v2701 = vmul.f32 %v2107, %v2107
  %v2702 = vmul.f32 %v2108, %v2108
  %v2703 = vmul.f32 %v2109, %v2109
  %v2704 = vmul.f32 %v2110, %v2110
  %v2705 = vmul.f32 %v2111, %v2111
  %v2706 = vmul.f32 %v2112, %v2112
  %v2707 = vmul.f32 %v2113, %v2113
  %v2708 = vmul.f32 %v2114, %v2114
  %v2709 = vmul.f32 %v2115, %v2115
  %v2710 = vmul.f32 %v2116, %v2116
  %v2711 = vmul.f32 %v2117, %v2117
  %v2712 = vmul.f32 %v2118, %v2118
  %v2713 = vmul.f32 %v2119, %v2119
  %v2714 = vmul.f32 %v2120, %v2120
  %v2715 = vmul.f32 %v2121, %v2121
  %v2716 = vmul.f32 %v2122, %v2122
  %v2717 = vmul.f32 %v2123, %v2123
  %v2718 = vmul.f32 %v2124, %v2124
  %v2719 = vmul.f32 %v2125, %v2125
  %v2720 = vsel %vm2126, %v2524, 0.0
  %v2721 = vsel %vm2126, %v2525, 0.0
  %v2722 = vadd.f32 %v2720, %v2721
  %v2723 = vsel %vm2126, %v2526, 0.0
  %v2724 = vadd.f32 %v2722, %v2723
  %v2725 = vsel %vm2126, %v2527, 0.0
  %v2726 = vadd.f32 %v2724, %v2725
  %v2727 = vsel %vm2126, %v2528, 0.0
  %v2728 = vadd.f32 %v2726, %v2727
  %v2729 = vsel %vm2126, %v2529, 0.0
  %v2730 = vadd.f32 %v2728, %v2729
  %v2731 = vsel %vm2126, %v2530, 0.0
  %v2732 = vadd.f32 %v2730, %v2731
  %v2733 = vsel %vm2126, %v2531, 0.0
  %v2734 = vadd.f32 %v2732, %v2733
  %v2735 = vsel %vm2126, %v2532, 0.0
  %v2736 = vadd.f32 %v2734, %v2735
  %v2737 = vsel %vm2126, %v2533, 0.0
  %v2738 = vadd.f32 %v2736, %v2737
  %v2739 = vsel %vm2126, %v2534, 0.0
  %v2740 = vadd.f32 %v2738, %v2739
  %v2741 = vsel %vm2126, %v2535, 0.0
  %v2742 = vadd.f32 %v2740, %v2741
  %v2743 = vsel %vm2126, %v2536, 0.0
  %v2744 = vadd.f32 %v2742, %v2743
  %v2745 = vsel %vm2126, %v2537, 0.0
  %v2746 = vadd.f32 %v2744, %v2745
  %v2747 = vsel %vm2126, %v2538, 0.0
  %v2748 = vadd.f32 %v2746, %v2747
  %v2749 = vsel %vm2126, %v2539, 0.0
  %v2750 = vadd.f32 %v2748, %v2749
  %v2751 = vsel %vm2126, %v2540, 0.0
  %v2752 = vadd.f32 %v2750, %v2751
  %v2753 = vsel %vm2126, %v2541, 0.0
  %v2754 = vadd.f32 %v2752, %v2753
  %v2755 = vsel %vm2126, %v2542, 0.0
  %v2756 = vadd.f32 %v2754, %v2755
  %v2757 = vsel %vm2126, %v2543, 0.0
  %v2758 = vadd.f32 %v2756, %v2757
  %v2759 = vsel %vm2126, %v2544, 0.0
  %v2760 = vadd.f32 %v2758, %v2759
  %v2761 = vsel %vm2126, %v2545, 0.0
  %v2762 = vadd.f32 %v2760, %v2761
  %v2763 = vsel %vm2126, %v2546, 0.0
  %v2764 = vadd.f32 %v2762, %v2763
  %v2765 = vsel %vm2126, %v2547, 0.0
  %v2766 = vadd.f32 %v2764, %v2765
  %v2767 = vsel %vm2126, %v2548, 0.0
  %v2768 = vadd.f32 %v2766, %v2767
  %v2769 = vsel %vm2126, %v2549, 0.0
  %v2770 = vadd.f32 %v2768, %v2769
  %v2771 = vsel %vm2126, %v2550, 0.0
  %v2772 = vadd.f32 %v2770, %v2771
  %v2773 = vsel %vm2126, %v2551, 0.0
  %v2774 = vadd.f32 %v2772, %v2773
  %v2775 = vsel %vm2126, %v2552, 0.0
  %v2776 = vadd.f32 %v2774, %v2775
  %v2777 = vsel %vm2126, %v2553, 0.0
  %v2778 = vadd.f32 %v2776, %v2777
  %v2779 = vsel %vm2126, %v2554, 0.0
  %v2780 = vadd.f32 %v2778, %v2779
  %v2781 = vsel %vm2126, %v2555, 0.0
  %v2782 = vadd.f32 %v2780, %v2781
  %v2783 = vsel %vm2126, %v2556, 0.0
  %v2784 = vadd.f32 %v2782, %v2783
  %v2785 = vsel %vm2126, %v2557, 0.0
  %v2786 = vadd.f32 %v2784, %v2785
  %v2787 = vsel %vm2126, %v2558, 0.0
  %v2788 = vadd.f32 %v2786, %v2787
  %v2789 = vsel %vm2126, %v2559, 0.0
  %v2790 = vadd.f32 %v2788, %v2789
  %v2791 = vsel %vm2126, %v2560, 0.0
  %v2792 = vadd.f32 %v2790, %v2791
  %v2793 = vsel %vm2126, %v2561, 0.0
  %v2794 = vadd.f32 %v2792, %v2793
  %v2795 = vsel %vm2126, %v2562, 0.0
  %v2796 = vadd.f32 %v2794, %v2795
  %v2797 = vsel %vm2126, %v2563, 0.0
  %v2798 = vadd.f32 %v2796, %v2797
  %v2799 = vsel %vm2126, %v2564, 0.0
  %v2800 = vadd.f32 %v2798, %v2799
  %v2801 = vsel %vm2126, %v2565, 0.0
  %v2802 = vadd.f32 %v2800, %v2801
  %v2803 = vsel %vm2126, %v2566, 0.0
  %v2804 = vadd.f32 %v2802, %v2803
  %v2805 = vsel %vm2126, %v2567, 0.0
  %v2806 = vadd.f32 %v2804, %v2805
  %v2807 = vsel %vm2126, %v2568, 0.0
  %v2808 = vadd.f32 %v2806, %v2807
  %v2809 = vsel %vm2126, %v2569, 0.0
  %v2810 = vadd.f32 %v2808, %v2809
  %v2811 = vsel %vm2126, %v2570, 0.0
  %v2812 = vadd.f32 %v2810, %v2811
  %v2813 = vsel %vm2126, %v2571, 0.0
  %v2814 = vadd.f32 %v2812, %v2813
  %v2815 = vsel %vm2126, %v2572, 0.0
  %v2816 = vadd.f32 %v2814, %v2815
  %v2817 = vsel %vm2126, %v2573, 0.0
  %v2818 = vadd.f32 %v2816, %v2817
  %v2819 = vsel %vm2126, %v2574, 0.0
  %v2820 = vadd.f32 %v2818, %v2819
  %v2821 = vsel %vm2126, %v2575, 0.0
  %v2822 = vadd.f32 %v2820, %v2821
  %v2823 = vsel %vm2126, %v2576, 0.0
  %v2824 = vadd.f32 %v2822, %v2823
  %v2825 = vsel %vm2126, %v2577, 0.0
  %v2826 = vadd.f32 %v2824, %v2825
  %v2827 = vsel %vm2126, %v2578, 0.0
  %v2828 = vadd.f32 %v2826, %v2827
  %v2829 = vsel %vm2126, %v2579, 0.0
  %v2830 = vadd.f32 %v2828, %v2829
  %v2831 = vsel %vm2126, %v2580, 0.0
  %v2832 = vadd.f32 %v2830, %v2831
  %v2833 = vsel %vm2126, %v2581, 0.0
  %v2834 = vadd.f32 %v2832, %v2833
  %v2835 = vsel %vm2126, %v2582, 0.0
  %v2836 = vadd.f32 %v2834, %v2835
  %v2837 = vsel %vm2126, %v2583, 0.0
  %v2838 = vadd.f32 %v2836, %v2837
  %v2839 = vsel %vm2126, %v2584, 0.0
  %v2840 = vadd.f32 %v2838, %v2839
  %v2841 = vsel %vm2126, %v2585, 0.0
  %v2842 = vadd.f32 %v2840, %v2841
  %v2843 = vsel %vm2126, %v2586, 0.0
  %v2844 = vadd.f32 %v2842, %v2843
  %v2845 = vsel %vm2126, %v2587, 0.0
  %v2846 = vadd.f32 %v2844, %v2845
  %v2847 = vsel %vm2126, %v2588, 0.0
  %v2848 = vadd.f32 %v2846, %v2847
  %v2849 = vsel %vm2126, %v2589, 0.0
  %v2850 = vadd.f32 %v2848, %v2849
  %v2851 = vsel %vm2126, %v2590, 0.0
  %v2852 = vadd.f32 %v2850, %v2851
  %v2853 = vsel %vm2126, %v2591, 0.0
  %v2854 = vadd.f32 %v2852, %v2853
  %v2855 = vsel %vm2126, %v2592, 0.0
  %v2856 = vadd.f32 %v2854, %v2855
  %v2857 = vsel %vm2126, %v2593, 0.0
  %v2858 = vadd.f32 %v2856, %v2857
  %v2859 = vsel %vm2126, %v2594, 0.0
  %v2860 = vadd.f32 %v2858, %v2859
  %v2861 = vsel %vm2126, %v2595, 0.0
  %v2862 = vadd.f32 %v2860, %v2861
  %v2863 = vsel %vm2126, %v2596, 0.0
  %v2864 = vadd.f32 %v2862, %v2863
  %v2865 = vsel %vm2126, %v2597, 0.0
  %v2866 = vadd.f32 %v2864, %v2865
  %v2867 = vsel %vm2126, %v2598, 0.0
  %v2868 = vadd.f32 %v2866, %v2867
  %v2869 = vsel %vm2126, %v2599, 0.0
  %v2870 = vadd.f32 %v2868, %v2869
  %v2871 = vsel %vm2126, %v2600, 0.0
  %v2872 = vadd.f32 %v2870, %v2871
  %v2873 = vsel %vm2126, %v2601, 0.0
  %v2874 = vadd.f32 %v2872, %v2873
  %v2875 = vsel %vm2126, %v2602, 0.0
  %v2876 = vadd.f32 %v2874, %v2875
  %v2877 = vsel %vm2126, %v2603, 0.0
  %v2878 = vadd.f32 %v2876, %v2877
  %v2879 = vsel %vm2126, %v2604, 0.0
  %v2880 = vadd.f32 %v2878, %v2879
  %v2881 = vsel %vm2126, %v2605, 0.0
  %v2882 = vadd.f32 %v2880, %v2881
  %v2883 = vsel %vm2126, %v2606, 0.0
  %v2884 = vadd.f32 %v2882, %v2883
  %v2885 = vsel %vm2126, %v2607, 0.0
  %v2886 = vadd.f32 %v2884, %v2885
  %v2887 = vsel %vm2126, %v2608, 0.0
  %v2888 = vadd.f32 %v2886, %v2887
  %v2889 = vsel %vm2126, %v2609, 0.0
  %v2890 = vadd.f32 %v2888, %v2889
  %v2891 = vsel %vm2126, %v2610, 0.0
  %v2892 = vadd.f32 %v2890, %v2891
  %v2893 = vsel %vm2126, %v2611, 0.0
  %v2894 = vadd.f32 %v2892, %v2893
  %v2895 = vsel %vm2126, %v2612, 0.0
  %v2896 = vadd.f32 %v2894, %v2895
  %v2897 = vsel %vm2126, %v2613, 0.0
  %v2898 = vadd.f32 %v2896, %v2897
  %v2899 = vsel %vm2126, %v2614, 0.0
  %v2900 = vadd.f32 %v2898, %v2899
  %v2901 = vsel %vm2126, %v2615, 0.0
  %v2902 = vadd.f32 %v2900, %v2901
  %v2903 = vsel %vm2126, %v2616, 0.0
  %v2904 = vadd.f32 %v2902, %v2903
  %v2905 = vsel %vm2126, %v2617, 0.0
  %v2906 = vadd.f32 %v2904, %v2905
  %v2907 = vsel %vm2126, %v2618, 0.0
  %v2908 = vadd.f32 %v2906, %v2907
  %v2909 = vsel %vm2126, %v2619, 0.0
  %v2910 = vadd.f32 %v2908, %v2909
  %v2911 = vsel %vm2126, %v2620, 0.0
  %v2912 = vadd.f32 %v2910, %v2911
  %v2913 = vsel %vm2126, %v2621, 0.0
  %v2914 = vadd.f32 %v2912, %v2913
  %v2915 = vsel %vm2126, %v2622, 0.0
  %v2916 = vadd.f32 %v2914, %v2915
  %v2917 = vsel %vm2126, %v2623, 0.0
  %v2918 = vadd.f32 %v2916, %v2917
  %v2919 = vsel %vm2126, %v2624, 0.0
  %v2920 = vadd.f32 %v2918, %v2919
  %v2921 = vsel %vm2126, %v2625, 0.0
  %v2922 = vadd.f32 %v2920, %v2921
  %v2923 = vsel %vm2126, %v2626, 0.0
  %v2924 = vadd.f32 %v2922, %v2923
  %v2925 = vsel %vm2126, %v2627, 0.0
  %v2926 = vadd.f32 %v2924, %v2925
  %v2927 = vsel %vm2126, %v2628, 0.0
  %v2928 = vadd.f32 %v2926, %v2927
  %v2929 = vsel %vm2126, %v2629, 0.0
  %v2930 = vadd.f32 %v2928, %v2929
  %v2931 = vsel %vm2126, %v2630, 0.0
  %v2932 = vadd.f32 %v2930, %v2931
  %v2933 = vsel %vm2126, %v2631, 0.0
  %v2934 = vadd.f32 %v2932, %v2933
  %v2935 = vsel %vm2126, %v2632, 0.0
  %v2936 = vadd.f32 %v2934, %v2935
  %v2937 = vsel %vm2126, %v2633, 0.0
  %v2938 = vadd.f32 %v2936, %v2937
  %v2939 = vsel %vm2126, %v2634, 0.0
  %v2940 = vadd.f32 %v2938, %v2939
  %v2941 = vsel %vm2126, %v2635, 0.0
  %v2942 = vadd.f32 %v2940, %v2941
  %v2943 = vsel %vm2126, %v2636, 0.0
  %v2944 = vadd.f32 %v2942, %v2943
  %v2945 = vsel %vm2126, %v2637, 0.0
  %v2946 = vadd.f32 %v2944, %v2945
  %v2947 = vsel %vm2126, %v2638, 0.0
  %v2948 = vadd.f32 %v2946, %v2947
  %v2949 = vsel %vm2126, %v2639, 0.0
  %v2950 = vadd.f32 %v2948, %v2949
  %v2951 = vsel %vm2126, %v2640, 0.0
  %v2952 = vadd.f32 %v2950, %v2951
  %v2953 = vsel %vm2126, %v2641, 0.0
  %v2954 = vadd.f32 %v2952, %v2953
  %v2955 = vsel %vm2126, %v2642, 0.0
  %v2956 = vadd.f32 %v2954, %v2955
  %v2957 = vsel %vm2126, %v2643, 0.0
  %v2958 = vadd.f32 %v2956, %v2957
  %v2959 = vsel %vm2126, %v2644, 0.0
  %v2960 = vadd.f32 %v2958, %v2959
  %v2961 = vsel %vm2126, %v2645, 0.0
  %v2962 = vadd.f32 %v2960, %v2961
  %v2963 = vsel %vm2126, %v2646, 0.0
  %v2964 = vadd.f32 %v2962, %v2963
  %v2965 = vsel %vm2126, %v2647, 0.0
  %v2966 = vadd.f32 %v2964, %v2965
  %v2967 = vsel %vm2126, %v2648, 0.0
  %v2968 = vadd.f32 %v2966, %v2967
  %v2969 = vsel %vm2126, %v2649, 0.0
  %v2970 = vadd.f32 %v2968, %v2969
  %v2971 = vsel %vm2126, %v2650, 0.0
  %v2972 = vadd.f32 %v2970, %v2971
  %v2973 = vsel %vm2126, %v2651, 0.0
  %v2974 = vadd.f32 %v2972, %v2973
  %v2975 = vsel %vm2126, %v2652, 0.0
  %v2976 = vadd.f32 %v2974, %v2975
  %v2977 = vsel %vm2126, %v2653, 0.0
  %v2978 = vadd.f32 %v2976, %v2977
  %v2979 = vsel %vm2126, %v2654, 0.0
  %v2980 = vadd.f32 %v2978, %v2979
  %v2981 = vsel %vm2126, %v2655, 0.0
  %v2982 = vadd.f32 %v2980, %v2981
  %v2983 = vsel %vm2126, %v2656, 0.0
  %v2984 = vadd.f32 %v2982, %v2983
  %v2985 = vsel %vm2126, %v2657, 0.0
  %v2986 = vadd.f32 %v2984, %v2985
  %v2987 = vsel %vm2126, %v2658, 0.0
  %v2988 = vadd.f32 %v2986, %v2987
  %v2989 = vsel %vm2126, %v2659, 0.0
  %v2990 = vadd.f32 %v2988, %v2989
  %v2991 = vsel %vm2126, %v2660, 0.0
  %v2992 = vadd.f32 %v2990, %v2991
  %v2993 = vsel %vm2126, %v2661, 0.0
  %v2994 = vadd.f32 %v2992, %v2993
  %v2995 = vsel %vm2126, %v2662, 0.0
  %v2996 = vadd.f32 %v2994, %v2995
  %v2997 = vsel %vm2126, %v2663, 0.0
  %v2998 = vadd.f32 %v2996, %v2997
  %v2999 = vsel %vm2126, %v2664, 0.0
  %v3000 = vadd.f32 %v2998, %v2999
  %v3001 = vsel %vm2126, %v2665, 0.0
  %v3002 = vadd.f32 %v3000, %v3001
  %v3003 = vsel %vm2126, %v2666, 0.0
  %v3004 = vadd.f32 %v3002, %v3003
  %v3005 = vsel %vm2126, %v2667, 0.0
  %v3006 = vadd.f32 %v3004, %v3005
  %v3007 = vsel %vm2126, %v2668, 0.0
  %v3008 = vadd.f32 %v3006, %v3007
  %v3009 = vsel %vm2126, %v2669, 0.0
  %v3010 = vadd.f32 %v3008, %v3009
  %v3011 = vsel %vm2126, %v2670, 0.0
  %v3012 = vadd.f32 %v3010, %v3011
  %v3013 = vsel %vm2126, %v2671, 0.0
  %v3014 = vadd.f32 %v3012, %v3013
  %v3015 = vsel %vm2126, %v2672, 0.0
  %v3016 = vadd.f32 %v3014, %v3015
  %v3017 = vsel %vm2126, %v2673, 0.0
  %v3018 = vadd.f32 %v3016, %v3017
  %v3019 = vsel %vm2126, %v2674, 0.0
  %v3020 = vadd.f32 %v3018, %v3019
  %v3021 = vsel %vm2126, %v2675, 0.0
  %v3022 = vadd.f32 %v3020, %v3021
  %v3023 = vsel %vm2126, %v2676, 0.0
  %v3024 = vadd.f32 %v3022, %v3023
  %v3025 = vsel %vm2126, %v2677, 0.0
  %v3026 = vadd.f32 %v3024, %v3025
  %v3027 = vsel %vm2126, %v2678, 0.0
  %v3028 = vadd.f32 %v3026, %v3027
  %v3029 = vsel %vm2126, %v2679, 0.0
  %v3030 = vadd.f32 %v3028, %v3029
  %v3031 = vsel %vm2126, %v2680, 0.0
  %v3032 = vadd.f32 %v3030, %v3031
  %v3033 = vsel %vm2126, %v2681, 0.0
  %v3034 = vadd.f32 %v3032, %v3033
  %v3035 = vsel %vm2126, %v2682, 0.0
  %v3036 = vadd.f32 %v3034, %v3035
  %v3037 = vsel %vm2126, %v2683, 0.0
  %v3038 = vadd.f32 %v3036, %v3037
  %v3039 = vsel %vm2126, %v2684, 0.0
  %v3040 = vadd.f32 %v3038, %v3039
  %v3041 = vsel %vm2126, %v2685, 0.0
  %v3042 = vadd.f32 %v3040, %v3041
  %v3043 = vsel %vm2126, %v2686, 0.0
  %v3044 = vadd.f32 %v3042, %v3043
  %v3045 = vsel %vm2126, %v2687, 0.0
  %v3046 = vadd.f32 %v3044, %v3045
  %v3047 = vsel %vm2126, %v2688, 0.0
  %v3048 = vadd.f32 %v3046, %v3047
  %v3049 = vsel %vm2126, %v2689, 0.0
  %v3050 = vadd.f32 %v3048, %v3049
  %v3051 = vsel %vm2126, %v2690, 0.0
  %v3052 = vadd.f32 %v3050, %v3051
  %v3053 = vsel %vm2126, %v2691, 0.0
  %v3054 = vadd.f32 %v3052, %v3053
  %v3055 = vsel %vm2126, %v2692, 0.0
  %v3056 = vadd.f32 %v3054, %v3055
  %v3057 = vsel %vm2126, %v2693, 0.0
  %v3058 = vadd.f32 %v3056, %v3057
  %v3059 = vsel %vm2126, %v2694, 0.0
  %v3060 = vadd.f32 %v3058, %v3059
  %v3061 = vsel %vm2126, %v2695, 0.0
  %v3062 = vadd.f32 %v3060, %v3061
  %v3063 = vsel %vm2126, %v2696, 0.0
  %v3064 = vadd.f32 %v3062, %v3063
  %v3065 = vsel %vm2126, %v2697, 0.0
  %v3066 = vadd.f32 %v3064, %v3065
  %v3067 = vsel %vm2126, %v2698, 0.0
  %v3068 = vadd.f32 %v3066, %v3067
  %v3069 = vsel %vm2126, %v2699, 0.0
  %v3070 = vadd.f32 %v3068, %v3069
  %v3071 = vsel %vm2126, %v2700, 0.0
  %v3072 = vadd.f32 %v3070, %v3071
  %v3073 = vsel %vm2126, %v2701, 0.0
  %v3074 = vadd.f32 %v3072, %v3073
  %v3075 = vsel %vm2126, %v2702, 0.0
  %v3076 = vadd.f32 %v3074, %v3075
  %v3077 = vsel %vm2126, %v2703, 0.0
  %v3078 = vadd.f32 %v3076, %v3077
  %v3079 = vsel %vm2126, %v2704, 0.0
  %v3080 = vadd.f32 %v3078, %v3079
  %v3081 = vsel %vm2126, %v2705, 0.0
  %v3082 = vadd.f32 %v3080, %v3081
  %v3083 = vsel %vm2126, %v2706, 0.0
  %v3084 = vadd.f32 %v3082, %v3083
  %v3085 = vsel %vm2126, %v2707, 0.0
  %v3086 = vadd.f32 %v3084, %v3085
  %v3087 = vsel %vm2126, %v2708, 0.0
  %v3088 = vadd.f32 %v3086, %v3087
  %v3089 = vsel %vm2126, %v2709, 0.0
  %v3090 = vadd.f32 %v3088, %v3089
  %v3091 = vsel %vm2126, %v2710, 0.0
  %v3092 = vadd.f32 %v3090, %v3091
  %v3093 = vsel %vm2126, %v2711, 0.0
  %v3094 = vadd.f32 %v3092, %v3093
  %v3095 = vsel %vm2126, %v2712, 0.0
  %v3096 = vadd.f32 %v3094, %v3095
  %v3097 = vsel %vm2126, %v2713, 0.0
  %v3098 = vadd.f32 %v3096, %v3097
  %v3099 = vsel %vm2126, %v2714, 0.0
  %v3100 = vadd.f32 %v3098, %v3099
  %v3101 = vsel %vm2126, %v2715, 0.0
  %v3102 = vadd.f32 %v3100, %v3101
  %v3103 = vsel %vm2126, %v2716, 0.0
  %v3104 = vadd.f32 %v3102, %v3103
  %v3105 = vsel %vm2126, %v2717, 0.0
  %v3106 = vadd.f32 %v3104, %v3105
  %v3107 = vsel %vm2126, %v2718, 0.0
  %v3108 = vadd.f32 %v3106, %v3107
  %v3109 = vsel %vm2126, %v2719, 0.0
  %v3110 = vadd.f32 %v3108, %v3109
  %v3111 = vrot.slane %v3110, 4
  %v3112 = vadd.f32 %v3110, %v3111
  %v3113 = vrot.slane %v3112, 2
  %v3114 = vadd.f32 %v3112, %v3113
  %v3115 = vrot.slane %v3114, 1
  %v3116 = vadd.f32 %v3114, %v3115
  %v3117 = vmul.f32 %v2523, 0.0006377551
  %v3118 = vmul.f32 %v3116, 0.0006377551
  %v3119 = vmul.f32 %v3117, %v3117
  %v3120 = vsub.f32 %v3118, %v3119
  %v3121 = vsub.f32 %v1930, %v3117
  %v3122 = vsub.f32 %v1931, %v3117
  %v3123 = vsub.f32 %v1932, %v3117
  %v3124 = vsub.f32 %v1933, %v3117
  %v3125 = vsub.f32 %v1934, %v3117
  %v3126 = vsub.f32 %v1935, %v3117
  %v3127 = vsub.f32 %v1936, %v3117
  %v3128 = vsub.f32 %v1937, %v3117
  %v3129 = vsub.f32 %v1938, %v3117
  %v3130 = vsub.f32 %v1939, %v3117
  %v3131 = vsub.f32 %v1940, %v3117
  %v3132 = vsub.f32 %v1941, %v3117
  %v3133 = vsub.f32 %v1942, %v3117
  %v3134 = vsub.f32 %v1943, %v3117
  %v3135 = vsub.f32 %v1944, %v3117
  %v3136 = vsub.f32 %v1945, %v3117
  %v3137 = vsub.f32 %v1946, %v3117
  %v3138 = vsub.f32 %v1947, %v3117
  %v3139 = vsub.f32 %v1948, %v3117
  %v3140 = vsub.f32 %v1949, %v3117
  %v3141 = vsub.f32 %v1950, %v3117
  %v3142 = vsub.f32 %v1951, %v3117
  %v3143 = vsub.f32 %v1952, %v3117
  %v3144 = vsub.f32 %v1953, %v3117
  %v3145 = vsub.f32 %v1954, %v3117
  %v3146 = vsub.f32 %v1955, %v3117
  %v3147 = vsub.f32 %v1956, %v3117
  %v3148 = vsub.f32 %v1957, %v3117
  %v3149 = vsub.f32 %v1958, %v3117
  %v3150 = vsub.f32 %v1959, %v3117
  %v3151 = vsub.f32 %v1960, %v3117
  %v3152 = vsub.f32 %v1961, %v3117
  %v3153 = vsub.f32 %v1962, %v3117
  %v3154 = vsub.f32 %v1963, %v3117
  %v3155 = vsub.f32 %v1964, %v3117
  %v3156 = vsub.f32 %v1965, %v3117
  %v3157 = vsub.f32 %v1966, %v3117
  %v3158 = vsub.f32 %v1967, %v3117
  %v3159 = vsub.f32 %v1968, %v3117
  %v3160 = vsub.f32 %v1969, %v3117
  %v3161 = vsub.f32 %v1970, %v3117
  %v3162 = vsub.f32 %v1971, %v3117
  %v3163 = vsub.f32 %v1972, %v3117
  %v3164 = vsub.f32 %v1973, %v3117
  %v3165 = vsub.f32 %v1974, %v3117
  %v3166 = vsub.f32 %v1975, %v3117
  %v3167 = vsub.f32 %v1976, %v3117
  %v3168 = vsub.f32 %v1977, %v3117
  %v3169 = vsub.f32 %v1978, %v3117
  %v3170 = vsub.f32 %v1979, %v3117
  %v3171 = vsub.f32 %v1980, %v3117
  %v3172 = vsub.f32 %v1981, %v3117
  %v3173 = vsub.f32 %v1982, %v3117
  %v3174 = vsub.f32 %v1983, %v3117
  %v3175 = vsub.f32 %v1984, %v3117
  %v3176 = vsub.f32 %v1985, %v3117
  %v3177 = vsub.f32 %v1986, %v3117
  %v3178 = vsub.f32 %v1987, %v3117
  %v3179 = vsub.f32 %v1988, %v3117
  %v3180 = vsub.f32 %v1989, %v3117
  %v3181 = vsub.f32 %v1990, %v3117
  %v3182 = vsub.f32 %v1991, %v3117
  %v3183 = vsub.f32 %v1992, %v3117
  %v3184 = vsub.f32 %v1993, %v3117
  %v3185 = vsub.f32 %v1994, %v3117
  %v3186 = vsub.f32 %v1995, %v3117
  %v3187 = vsub.f32 %v1996, %v3117
  %v3188 = vsub.f32 %v1997, %v3117
  %v3189 = vsub.f32 %v1998, %v3117
  %v3190 = vsub.f32 %v1999, %v3117
  %v3191 = vsub.f32 %v2000, %v3117
  %v3192 = vsub.f32 %v2001, %v3117
  %v3193 = vsub.f32 %v2002, %v3117
  %v3194 = vsub.f32 %v2003, %v3117
  %v3195 = vsub.f32 %v2004, %v3117
  %v3196 = vsub.f32 %v2005, %v3117
  %v3197 = vsub.f32 %v2006, %v3117
  %v3198 = vsub.f32 %v2007, %v3117
  %v3199 = vsub.f32 %v2008, %v3117
  %v3200 = vsub.f32 %v2009, %v3117
  %v3201 = vsub.f32 %v2010, %v3117
  %v3202 = vsub.f32 %v2011, %v3117
  %v3203 = vsub.f32 %v2012, %v3117
  %v3204 = vsub.f32 %v2013, %v3117
  %v3205 = vsub.f32 %v2014, %v3117
  %v3206 = vsub.f32 %v2015, %v3117
  %v3207 = vsub.f32 %v2016, %v3117
  %v3208 = vsub.f32 %v2017, %v3117
  %v3209 = vsub.f32 %v2018, %v3117
  %v3210 = vsub.f32 %v2019, %v3117
  %v3211 = vsub.f32 %v2020, %v3117
  %v3212 = vsub.f32 %v2021, %v3117
  %v3213 = vsub.f32 %v2022, %v3117
  %v3214 = vsub.f32 %v2023, %v3117
  %v3215 = vsub.f32 %v2024, %v3117
  %v3216 = vsub.f32 %v2025, %v3117
  %v3217 = vsub.f32 %v2026, %v3117
  %v3218 = vsub.f32 %v2027, %v3117
  %v3219 = vsub.f32 %v2028, %v3117
  %v3220 = vsub.f32 %v2029, %v3117
  %v3221 = vsub.f32 %v2030, %v3117
  %v3222 = vsub.f32 %v2031, %v3117
  %v3223 = vsub.f32 %v2032, %v3117
  %v3224 = vsub.f32 %v2033, %v3117
  %v3225 = vsub.f32 %v2034, %v3117
  %v3226 = vsub.f32 %v2035, %v3117
  %v3227 = vsub.f32 %v2036, %v3117
  %v3228 = vsub.f32 %v2037, %v3117
  %v3229 = vsub.f32 %v2038, %v3117
  %v3230 = vsub.f32 %v2039, %v3117
  %v3231 = vsub.f32 %v2040, %v3117
  %v3232 = vsub.f32 %v2041, %v3117
  %v3233 = vsub.f32 %v2042, %v3117
  %v3234 = vsub.f32 %v2043, %v3117
  %v3235 = vsub.f32 %v2044, %v3117
  %v3236 = vsub.f32 %v2045, %v3117
  %v3237 = vsub.f32 %v2046, %v3117
  %v3238 = vsub.f32 %v2047, %v3117
  %v3239 = vsub.f32 %v2048, %v3117
  %v3240 = vsub.f32 %v2049, %v3117
  %v3241 = vsub.f32 %v2050, %v3117
  %v3242 = vsub.f32 %v2051, %v3117
  %v3243 = vsub.f32 %v2052, %v3117
  %v3244 = vsub.f32 %v2053, %v3117
  %v3245 = vsub.f32 %v2054, %v3117
  %v3246 = vsub.f32 %v2055, %v3117
  %v3247 = vsub.f32 %v2056, %v3117
  %v3248 = vsub.f32 %v2057, %v3117
  %v3249 = vsub.f32 %v2058, %v3117
  %v3250 = vsub.f32 %v2059, %v3117
  %v3251 = vsub.f32 %v2060, %v3117
  %v3252 = vsub.f32 %v2061, %v3117
  %v3253 = vsub.f32 %v2062, %v3117
  %v3254 = vsub.f32 %v2063, %v3117
  %v3255 = vsub.f32 %v2064, %v3117
  %v3256 = vsub.f32 %v2065, %v3117
  %v3257 = vsub.f32 %v2066, %v3117
  %v3258 = vsub.f32 %v2067, %v3117
  %v3259 = vsub.f32 %v2068, %v3117
  %v3260 = vsub.f32 %v2069, %v3117
  %v3261 = vsub.f32 %v2070, %v3117
  %v3262 = vsub.f32 %v2071, %v3117
  %v3263 = vsub.f32 %v2072, %v3117
  %v3264 = vsub.f32 %v2073, %v3117
  %v3265 = vsub.f32 %v2074, %v3117
  %v3266 = vsub.f32 %v2075, %v3117
  %v3267 = vsub.f32 %v2076, %v3117
  %v3268 = vsub.f32 %v2077, %v3117
  %v3269 = vsub.f32 %v2078, %v3117
  %v3270 = vsub.f32 %v2079, %v3117
  %v3271 = vsub.f32 %v2080, %v3117
  %v3272 = vsub.f32 %v2081, %v3117
  %v3273 = vsub.f32 %v2082, %v3117
  %v3274 = vsub.f32 %v2083, %v3117
  %v3275 = vsub.f32 %v2084, %v3117
  %v3276 = vsub.f32 %v2085, %v3117
  %v3277 = vsub.f32 %v2086, %v3117
  %v3278 = vsub.f32 %v2087, %v3117
  %v3279 = vsub.f32 %v2088, %v3117
  %v3280 = vsub.f32 %v2089, %v3117
  %v3281 = vsub.f32 %v2090, %v3117
  %v3282 = vsub.f32 %v2091, %v3117
  %v3283 = vsub.f32 %v2092, %v3117
  %v3284 = vsub.f32 %v2093, %v3117
  %v3285 = vsub.f32 %v2094, %v3117
  %v3286 = vsub.f32 %v2095, %v3117
  %v3287 = vsub.f32 %v2096, %v3117
  %v3288 = vsub.f32 %v2097, %v3117
  %v3289 = vsub.f32 %v2098, %v3117
  %v3290 = vsub.f32 %v2099, %v3117
  %v3291 = vsub.f32 %v2100, %v3117
  %v3292 = vsub.f32 %v2101, %v3117
  %v3293 = vsub.f32 %v2102, %v3117
  %v3294 = vsub.f32 %v2103, %v3117
  %v3295 = vsub.f32 %v2104, %v3117
  %v3296 = vsub.f32 %v2105, %v3117
  %v3297 = vsub.f32 %v2106, %v3117
  %v3298 = vsub.f32 %v2107, %v3117
  %v3299 = vsub.f32 %v2108, %v3117
  %v3300 = vsub.f32 %v2109, %v3117
  %v3301 = vsub.f32 %v2110, %v3117
  %v3302 = vsub.f32 %v2111, %v3117
  %v3303 = vsub.f32 %v2112, %v3117
  %v3304 = vsub.f32 %v2113, %v3117
  %v3305 = vsub.f32 %v2114, %v3117
  %v3306 = vsub.f32 %v2115, %v3117
  %v3307 = vsub.f32 %v2116, %v3117
  %v3308 = vsub.f32 %v2117, %v3117
  %v3309 = vsub.f32 %v2118, %v3117
  %v3310 = vsub.f32 %v2119, %v3117
  %v3311 = vsub.f32 %v2120, %v3117
  %v3312 = vsub.f32 %v2121, %v3117
  %v3313 = vsub.f32 %v2122, %v3117
  %v3314 = vsub.f32 %v2123, %v3117
  %v3315 = vsub.f32 %v2124, %v3117
  %v3316 = vsub.f32 %v2125, %v3117
  %v3317 = vadd.f32 %v3120, 1e-05
  %v3318 = vrsqrt.pop %v3317
  %v3319 = vmul.f32 %v3121, %v3318
  %v3320 = vmul.f32 %v3122, %v3318
  %v3321 = vmul.f32 %v3123, %v3318
  %v3322 = vmul.f32 %v3124, %v3318
  %v3323 = vmul.f32 %v3125, %v3318
  %v3324 = vmul.f32 %v3126, %v3318
  %v3325 = vmul.f32 %v3127, %v3318
  %v3326 = vmul.f32 %v3128, %v3318
  %v3327 = vmul.f32 %v3129, %v3318
  %v3328 = vmul.f32 %v3130, %v3318
  %v3329 = vmul.f32 %v3131, %v3318
  %v3330 = vmul.f32 %v3132, %v3318
  %v3331 = vmul.f32 %v3133, %v3318
  %v3332 = vmul.f32 %v3134, %v3318
  %v3333 = vmul.f32 %v3135, %v3318
  %v3334 = vmul.f32 %v3136, %v3318
  %v3335 = vmul.f32 %v3137, %v3318
  %v3336 = vmul.f32 %v3138, %v3318
  %v3337 = vmul.f32 %v3139, %v3318
  %v3338 = vmul.f32 %v3140, %v3318
  %v3339 = vmul.f32 %v3141, %v3318
  %v3340 = vmul.f32 %v3142, %v3318
  %v3341 = vmul.f32 %v3143, %v3318
  %v3342 = vmul.f32 %v3144, %v3318
  %v3343 = vmul.f32 %v3145, %v3318
  %v3344 = vmul.f32 %v3146, %v3318
  %v3345 = vmul.f32 %v3147, %v3318
  %v3346 = vmul.f32 %v3148, %v3318
  %v3347 = vmul.f32 %v3149, %v3318
  %v3348 = vmul.f32 %v3150, %v3318
  %v3349 = vmul.f32 %v3151, %v3318
  %v3350 = vmul.f32 %v3152, %v3318
  %v3351 = vmul.f32 %v3153, %v3318
  %v3352 = vmul.f32 %v3154, %v3318
  %v3353 = vmul.f32 %v3155, %v3318
  %v3354 = vmul.f32 %v3156, %v3318
  %v3355 = vmul.f32 %v3157, %v3318
  %v3356 = vmul.f32 %v3158, %v3318
  %v3357 = vmul.f32 %v3159, %v3318
  %v3358 = vmul.f32 %v3160, %v3318
  %v3359 = vmul.f32 %v3161, %v3318
  %v3360 = vmul.f32 %v3162, %v3318
  %v3361 = vmul.f32 %v3163, %v3318
  %v3362 = vmul.f32 %v3164, %v3318
  %v3363 = vmul.f32 %v3165, %v3318
  %v3364 = vmul.f32 %v3166, %v3318
  %v3365 = vmul.f32 %v3167, %v3318
  %v3366 = vmul.f32 %v3168, %v3318
  %v3367 = vmul.f32 %v3169, %v3318
  %v3368 = vmul.f32 %v3170, %v3318
  %v3369 = vmul.f32 %v3171, %v3318
  %v3370 = vmul.f32 %v3172, %v3318
  %v3371 = vmul.f32 %v3173, %v3318
  %v3372 = vmul.f32 %v3174, %v3318
  %v3373 = vmul.f32 %v3175, %v3318
  %v3374 = vmul.f32 %v3176, %v3318
  %v3375 = vmul.f32 %v3177, %v3318
  %v3376 = vmul.f32 %v3178, %v3318
  %v3377 = vmul.f32 %v3179, %v3318
  %v3378 = vmul.f32 %v3180, %v3318
  %v3379 = vmul.f32 %v3181, %v3318
  %v3380 = vmul.f32 %v3182, %v3318
  %v3381 = vmul.f32 %v3183, %v3318
  %v3382 = vmul.f32 %v3184, %v3318
  %v3383 = vmul.f32 %v3185, %v3318
  %v3384 = vmul.f32 %v3186, %v3318
  %v3385 = vmul.f32 %v3187, %v3318
  %v3386 = vmul.f32 %v3188, %v3318
  %v3387 = vmul.f32 %v3189, %v3318
  %v3388 = vmul.f32 %v3190, %v3318
  %v3389 = vmul.f32 %v3191, %v3318
  %v3390 = vmul.f32 %v3192, %v3318
  %v3391 = vmul.f32 %v3193, %v3318
  %v3392 = vmul.f32 %v3194, %v3318
  %v3393 = vmul.f32 %v3195, %v3318
  %v3394 = vmul.f32 %v3196, %v3318
  %v3395 = vmul.f32 %v3197, %v3318
  %v3396 = vmul.f32 %v3198, %v3318
  %v3397 = vmul.f32 %v3199, %v3318
  %v3398 = vmul.f32 %v3200, %v3318
  %v3399 = vmul.f32 %v3201, %v3318
  %v3400 = vmul.f32 %v3202, %v3318
  %v3401 = vmul.f32 %v3203, %v3318
  %v3402 = vmul.f32 %v3204, %v3318
  %v3403 = vmul.f32 %v3205, %v3318
  %v3404 = vmul.f32 %v3206, %v3318
  %v3405 = vmul.f32 %v3207, %v3318
  %v3406 = vmul.f32 %v3208, %v3318
  %v3407 = vmul.f32 %v3209, %v3318
  %v3408 = vmul.f32 %v3210, %v3318
  %v3409 = vmul.f32 %v3211, %v3318
  %v3410 = vmul.f32 %v3212, %v3318
  %v3411 = vmul.f32 %v3213, %v3318
  %v3412 = vmul.f32 %v3214, %v3318
  %v3413 = vmul.f32 %v3215, %v3318
  %v3414 = vmul.f32 %v3216, %v3318
  %v3415 = vmul.f32 %v3217, %v3318
  %v3416 = vmul.f32 %v3218, %v3318
  %v3417 = vmul.f32 %v3219, %v3318
  %v3418 = vmul.f32 %v3220, %v3318
  %v3419 = vmul.f32 %v3221, %v3318
  %v3420 = vmul.f32 %v3222, %v3318
  %v3421 = vmul.f32 %v3223, %v3318
  %v3422 = vmul.f32 %v3224, %v3318
  %v3423 = vmul.f32 %v3225, %v3318
  %v3424 = vmul.f32 %v3226, %v3318
  %v3425 = vmul.f32 %v3227, %v3318
  %v3426 = vmul.f32 %v3228, %v3318
  %v3427 = vmul.f32 %v3229, %v3318
  %v3428 = vmul.f32 %v3230, %v3318
  %v3429 = vmul.f32 %v3231, %v3318
  %v3430 = vmul.f32 %v3232, %v3318
  %v3431 = vmul.f32 %v3233, %v3318
  %v3432 = vmul.f32 %v3234, %v3318
  %v3433 = vmul.f32 %v3235, %v3318
  %v3434 = vmul.f32 %v3236, %v3318
  %v3435 = vmul.f32 %v3237, %v3318
  %v3436 = vmul.f32 %v3238, %v3318
  %v3437 = vmul.f32 %v3239, %v3318
  %v3438 = vmul.f32 %v3240, %v3318
  %v3439 = vmul.f32 %v3241, %v3318
  %v3440 = vmul.f32 %v3242, %v3318
  %v3441 = vmul.f32 %v3243, %v3318
  %v3442 = vmul.f32 %v3244, %v3318
  %v3443 = vmul.f32 %v3245, %v3318
  %v3444 = vmul.f32 %v3246, %v3318
  %v3445 = vmul.f32 %v3247, %v3318
  %v3446 = vmul.f32 %v3248, %v3318
  %v3447 = vmul.f32 %v3249, %v3318
  %v3448 = vmul.f32 %v3250, %v3318
  %v3449 = vmul.f32 %v3251, %v3318
  %v3450 = vmul.f32 %v3252, %v3318
  %v3451 = vmul.f32 %v3253, %v3318
  %v3452 = vmul.f32 %v3254, %v3318
  %v3453 = vmul.f32 %v3255, %v3318
  %v3454 = vmul.f32 %v3256, %v3318
  %v3455 = vmul.f32 %v3257, %v3318
  %v3456 = vmul.f32 %v3258, %v3318
  %v3457 = vmul.f32 %v3259, %v3318
  %v3458 = vmul.f32 %v3260, %v3318
  %v3459 = vmul.f32 %v3261, %v3318
  %v3460 = vmul.f32 %v3262, %v3318
  %v3461 = vmul.f32 %v3263, %v3318
  %v3462 = vmul.f32 %v3264, %v3318
  %v3463 = vmul.f32 %v3265, %v3318
  %v3464 = vmul.f32 %v3266, %v3318
  %v3465 = vmul.f32 %v3267, %v3318
  %v3466 = vmul.f32 %v3268, %v3318
  %v3467 = vmul.f32 %v3269, %v3318
  %v3468 = vmul.f32 %v3270, %v3318
  %v3469 = vmul.f32 %v3271, %v3318
  %v3470 = vmul.f32 %v3272, %v3318
  %v3471 = vmul.f32 %v3273, %v3318
  %v3472 = vmul.f32 %v3274, %v3318
  %v3473 = vmul.f32 %v3275, %v3318
  %v3474 = vmul.f32 %v3276, %v3318
  %v3475 = vmul.f32 %v3277, %v3318
  %v3476 = vmul.f32 %v3278, %v3318
  %v3477 = vmul.f32 %v3279, %v3318
  %v3478 = vmul.f32 %v3280, %v3318
  %v3479 = vmul.f32 %v3281, %v3318
  %v3480 = vmul.f32 %v3282, %v3318
  %v3481 = vmul.f32 %v3283, %v3318
  %v3482 = vmul.f32 %v3284, %v3318
  %v3483 = vmul.f32 %v3285, %v3318
  %v3484 = vmul.f32 %v3286, %v3318
  %v3485 = vmul.f32 %v3287, %v3318
  %v3486 = vmul.f32 %v3288, %v3318
  %v3487 = vmul.f32 %v3289, %v3318
  %v3488 = vmul.f32 %v3290, %v3318
  %v3489 = vmul.f32 %v3291, %v3318
  %v3490 = vmul.f32 %v3292, %v3318
  %v3491 = vmul.f32 %v3293, %v3318
  %v3492 = vmul.f32 %v3294, %v3318
  %v3493 = vmul.f32 %v3295, %v3318
  %v3494 = vmul.f32 %v3296, %v3318
  %v3495 = vmul.f32 %v3297, %v3318
  %v3496 = vmul.f32 %v3298, %v3318
  %v3497 = vmul.f32 %v3299, %v3318
  %v3498 = vmul.f32 %v3300, %v3318
  %v3499 = vmul.f32 %v3301, %v3318
  %v3500 = vmul.f32 %v3302, %v3318
  %v3501 = vmul.f32 %v3303, %v3318
  %v3502 = vmul.f32 %v3304, %v3318
  %v3503 = vmul.f32 %v3305, %v3318
  %v3504 = vmul.f32 %v3306, %v3318
  %v3505 = vmul.f32 %v3307, %v3318
  %v3506 = vmul.f32 %v3308, %v3318
  %v3507 = vmul.f32 %v3309, %v3318
  %v3508 = vmul.f32 %v3310, %v3318
  %v3509 = vmul.f32 %v3311, %v3318
  %v3510 = vmul.f32 %v3312, %v3318
  %v3511 = vmul.f32 %v3313, %v3318
  %v3512 = vmul.f32 %v3314, %v3318
  %v3513 = vmul.f32 %v3315, %v3318
  %v3514 = vmul.f32 %v3316, %v3318
  %v3515 = vpack.c.bf16 %v3320, %v3319
  %v3516 = vpack.c.bf16 %v3322, %v3321
  %v3517 = vpack.c.bf16 %v3324, %v3323
  %v3518 = vpack.c.bf16 %v3326, %v3325
  %v3519 = vpack.c.bf16 %v3328, %v3327
  %v3520 = vpack.c.bf16 %v3330, %v3329
  %v3521 = vpack.c.bf16 %v3332, %v3331
  %v3522 = vpack.c.bf16 %v3334, %v3333
  %v3523 = vpack.c.bf16 %v3336, %v3335
  %v3524 = vpack.c.bf16 %v3338, %v3337
  %v3525 = vpack.c.bf16 %v3340, %v3339
  %v3526 = vpack.c.bf16 %v3342, %v3341
  %v3527 = vpack.c.bf16 %v3344, %v3343
  %v3528 = vpack.c.bf16 %v3346, %v3345
  %v3529 = vpack.c.bf16 %v3348, %v3347
  %v3530 = vpack.c.bf16 %v3350, %v3349
  %v3531 = vpack.c.bf16 %v3352, %v3351
  %v3532 = vpack.c.bf16 %v3354, %v3353
  %v3533 = vpack.c.bf16 %v3356, %v3355
  %v3534 = vpack.c.bf16 %v3358, %v3357
  %v3535 = vpack.c.bf16 %v3360, %v3359
  %v3536 = vpack.c.bf16 %v3362, %v3361
  %v3537 = vpack.c.bf16 %v3364, %v3363
  %v3538 = vpack.c.bf16 %v3366, %v3365
  %v3539 = vpack.c.bf16 %v3368, %v3367
  %v3540 = vpack.c.bf16 %v3370, %v3369
  %v3541 = vpack.c.bf16 %v3372, %v3371
  %v3542 = vpack.c.bf16 %v3374, %v3373
  %v3543 = vpack.c.bf16 %v3376, %v3375
  %v3544 = vpack.c.bf16 %v3378, %v3377
  %v3545 = vpack.c.bf16 %v3380, %v3379
  %v3546 = vpack.c.bf16 %v3382, %v3381
  %v3547 = vpack.c.bf16 %v3384, %v3383
  %v3548 = vpack.c.bf16 %v3386, %v3385
  %v3549 = vpack.c.bf16 %v3388, %v3387
  %v3550 = vpack.c.bf16 %v3390, %v3389
  %v3551 = vpack.c.bf16 %v3392, %v3391
  %v3552 = vpack.c.bf16 %v3394, %v3393
  %v3553 = vpack.c.bf16 %v3396, %v3395
  %v3554 = vpack.c.bf16 %v3398, %v3397
  %v3555 = vpack.c.bf16 %v3400, %v3399
  %v3556 = vpack.c.bf16 %v3402, %v3401
  %v3557 = vpack.c.bf16 %v3404, %v3403
  %v3558 = vpack.c.bf16 %v3406, %v3405
  %v3559 = vpack.c.bf16 %v3408, %v3407
  %v3560 = vpack.c.bf16 %v3410, %v3409
  %v3561 = vpack.c.bf16 %v3412, %v3411
  %v3562 = vpack.c.bf16 %v3414, %v3413
  %v3563 = vpack.c.bf16 %v3416, %v3415
  %v3564 = vpack.c.bf16 %v3418, %v3417
  %v3565 = vpack.c.bf16 %v3420, %v3419
  %v3566 = vpack.c.bf16 %v3422, %v3421
  %v3567 = vpack.c.bf16 %v3424, %v3423
  %v3568 = vpack.c.bf16 %v3426, %v3425
  %v3569 = vpack.c.bf16 %v3428, %v3427
  %v3570 = vpack.c.bf16 %v3430, %v3429
  %v3571 = vpack.c.bf16 %v3432, %v3431
  %v3572 = vpack.c.bf16 %v3434, %v3433
  %v3573 = vpack.c.bf16 %v3436, %v3435
  %v3574 = vpack.c.bf16 %v3438, %v3437
  %v3575 = vpack.c.bf16 %v3440, %v3439
  %v3576 = vpack.c.bf16 %v3442, %v3441
  %v3577 = vpack.c.bf16 %v3444, %v3443
  %v3578 = vpack.c.bf16 %v3446, %v3445
  %v3579 = vpack.c.bf16 %v3448, %v3447
  %v3580 = vpack.c.bf16 %v3450, %v3449
  %v3581 = vpack.c.bf16 %v3452, %v3451
  %v3582 = vpack.c.bf16 %v3454, %v3453
  %v3583 = vpack.c.bf16 %v3456, %v3455
  %v3584 = vpack.c.bf16 %v3458, %v3457
  %v3585 = vpack.c.bf16 %v3460, %v3459
  %v3586 = vpack.c.bf16 %v3462, %v3461
  %v3587 = vpack.c.bf16 %v3464, %v3463
  %v3588 = vpack.c.bf16 %v3466, %v3465
  %v3589 = vpack.c.bf16 %v3468, %v3467
  %v3590 = vpack.c.bf16 %v3470, %v3469
  %v3591 = vpack.c.bf16 %v3472, %v3471
  %v3592 = vpack.c.bf16 %v3474, %v3473
  %v3593 = vpack.c.bf16 %v3476, %v3475
  %v3594 = vpack.c.bf16 %v3478, %v3477
  %v3595 = vpack.c.bf16 %v3480, %v3479
  %v3596 = vpack.c.bf16 %v3482, %v3481
  %v3597 = vpack.c.bf16 %v3484, %v3483
  %v3598 = vpack.c.bf16 %v3486, %v3485
  %v3599 = vpack.c.bf16 %v3488, %v3487
  %v3600 = vpack.c.bf16 %v3490, %v3489
  %v3601 = vpack.c.bf16 %v3492, %v3491
  %v3602 = vpack.c.bf16 %v3494, %v3493
  %v3603 = vpack.c.bf16 %v3496, %v3495
  %v3604 = vpack.c.bf16 %v3498, %v3497
  %v3605 = vpack.c.bf16 %v3500, %v3499
  %v3606 = vpack.c.bf16 %v3502, %v3501
  %v3607 = vpack.c.bf16 %v3504, %v3503
  %v3608 = vpack.c.bf16 %v3506, %v3505
  %v3609 = vpack.c.bf16 %v3508, %v3507
  %v3610 = vpack.c.bf16 %v3510, %v3509
  %v3611 = vpack.c.bf16 %v3512, %v3511
  %v3612 = vpack.c.bf16 %v3514, %v3513
  %v3613 = vmax.bf16 %v3515, 0
  %v3614 = vmax.bf16 %v3516, 0
  %v3615 = vmax.bf16 %v3517, 0
  %v3616 = vmax.bf16 %v3518, 0
  %v3617 = vmax.bf16 %v3519, 0
  %v3618 = vmax.bf16 %v3520, 0
  %v3619 = vmax.bf16 %v3521, 0
  %v3620 = vmax.bf16 %v3522, 0
  %v3621 = vmax.bf16 %v3523, 0
  %v3622 = vmax.bf16 %v3524, 0
  %v3623 = vmax.bf16 %v3525, 0
  %v3624 = vmax.bf16 %v3526, 0
  %v3625 = vmax.bf16 %v3527, 0
  %v3626 = vmax.bf16 %v3528, 0
  %v3627 = vmax.bf16 %v3529, 0
  %v3628 = vmax.bf16 %v3530, 0
  %v3629 = vmax.bf16 %v3531, 0
  %v3630 = vmax.bf16 %v3532, 0
  %v3631 = vmax.bf16 %v3533, 0
  %v3632 = vmax.bf16 %v3534, 0
  %v3633 = vmax.bf16 %v3535, 0
  %v3634 = vmax.bf16 %v3536, 0
  %v3635 = vmax.bf16 %v3537, 0
  %v3636 = vmax.bf16 %v3538, 0
  %v3637 = vmax.bf16 %v3539, 0
  %v3638 = vmax.bf16 %v3540, 0
  %v3639 = vmax.bf16 %v3541, 0
  %v3640 = vmax.bf16 %v3542, 0
  %v3641 = vmax.bf16 %v3543, 0
  %v3642 = vmax.bf16 %v3544, 0
  %v3643 = vmax.bf16 %v3545, 0
  %v3644 = vmax.bf16 %v3546, 0
  %v3645 = vmax.bf16 %v3547, 0
  %v3646 = vmax.bf16 %v3548, 0
  %v3647 = vmax.bf16 %v3549, 0
  %v3648 = vmax.bf16 %v3550, 0
  %v3649 = vmax.bf16 %v3551, 0
  %v3650 = vmax.bf16 %v3552, 0
  %v3651 = vmax.bf16 %v3553, 0
  %v3652 = vmax.bf16 %v3554, 0
  %v3653 = vmax.bf16 %v3555, 0
  %v3654 = vmax.bf16 %v3556, 0
  %v3655 = vmax.bf16 %v3557, 0
  %v3656 = vmax.bf16 %v3558, 0
  %v3657 = vmax.bf16 %v3559, 0
  %v3658 = vmax.bf16 %v3560, 0
  %v3659 = vmax.bf16 %v3561, 0
  %v3660 = vmax.bf16 %v3562, 0
  %v3661 = vmax.bf16 %v3563, 0
  %v3662 = vmax.bf16 %v3564, 0
  %v3663 = vmax.bf16 %v3565, 0
  %v3664 = vmax.bf16 %v3566, 0
  %v3665 = vmax.bf16 %v3567, 0
  %v3666 = vmax.bf16 %v3568, 0
  %v3667 = vmax.bf16 %v3569, 0
  %v3668 = vmax.bf16 %v3570, 0
  %v3669 = vmax.bf16 %v3571, 0
  %v3670 = vmax.bf16 %v3572, 0
  %v3671 = vmax.bf16 %v3573, 0
  %v3672 = vmax.bf16 %v3574, 0
  %v3673 = vmax.bf16 %v3575, 0
  %v3674 = vmax.bf16 %v3576, 0
  %v3675 = vmax.bf16 %v3577, 0
  %v3676 = vmax.bf16 %v3578, 0
  %v3677 = vmax.bf16 %v3579, 0
  %v3678 = vmax.bf16 %v3580, 0
  %v3679 = vmax.bf16 %v3581, 0
  %v3680 = vmax.bf16 %v3582, 0
  %v3681 = vmax.bf16 %v3583, 0
  %v3682 = vmax.bf16 %v3584, 0
  %v3683 = vmax.bf16 %v3585, 0
  %v3684 = vmax.bf16 %v3586, 0
  %v3685 = vmax.bf16 %v3587, 0
  %v3686 = vmax.bf16 %v3588, 0
  %v3687 = vmax.bf16 %v3589, 0
  %v3688 = vmax.bf16 %v3590, 0
  %v3689 = vmax.bf16 %v3591, 0
  %v3690 = vmax.bf16 %v3592, 0
  %v3691 = vmax.bf16 %v3593, 0
  %v3692 = vmax.bf16 %v3594, 0
  %v3693 = vmax.bf16 %v3595, 0
  %v3694 = vmax.bf16 %v3596, 0
  %v3695 = vmax.bf16 %v3597, 0
  %v3696 = vmax.bf16 %v3598, 0
  %v3697 = vmax.bf16 %v3599, 0
  %v3698 = vmax.bf16 %v3600, 0
  %v3699 = vmax.bf16 %v3601, 0
  %v3700 = vmax.bf16 %v3602, 0
  %v3701 = vmax.bf16 %v3603, 0
  %v3702 = vmax.bf16 %v3604, 0
  %v3703 = vmax.bf16 %v3605, 0
  %v3704 = vmax.bf16 %v3606, 0
  %v3705 = vmax.bf16 %v3607, 0
  %v3706 = vmax.bf16 %v3608, 0
  %v3707 = vmax.bf16 %v3609, 0
  %v3708 = vmax.bf16 %v3610, 0
  %v3709 = vmax.bf16 %v3611, 0
  %v3710 = vmax.bf16 %v3612, 0
  %v3809 = vunpack.c.l.b16 %v3613
  %v3810 = vunpack.c.h.b16 %v3613
  %v3811 = vunpack.c.l.b16 %v3614
  %v3812 = vunpack.c.h.b16 %v3614
  %v3813 = vunpack.c.l.b16 %v3615
  %v3814 = vunpack.c.h.b16 %v3615
  %v3815 = vunpack.c.l.b16 %v3616
  %v3816 = vunpack.c.h.b16 %v3616
  %v3817 = vunpack.c.l.b16 %v3617
  %v3818 = vunpack.c.h.b16 %v3617
  %v3819 = vunpack.c.l.b16 %v3618
  %v3820 = vunpack.c.h.b16 %v3618
  %v3821 = vunpack.c.l.b16 %v3619
  %v3822 = vunpack.c.h.b16 %v3619
  %v3823 = vunpack.c.l.b16 %v3620
  %v3824 = vunpack.c.h.b16 %v3620
  %v3825 = vunpack.c.l.b16 %v3621
  %v3826 = vunpack.c.h.b16 %v3621
  %v3827 = vunpack.c.l.b16 %v3622
  %v3828 = vunpack.c.h.b16 %v3622
  %v3829 = vunpack.c.l.b16 %v3623
  %v3830 = vunpack.c.h.b16 %v3623
  %v3831 = vunpack.c.l.b16 %v3624
  %v3832 = vunpack.c.h.b16 %v3624
  %v3833 = vunpack.c.l.b16 %v3625
  %v3834 = vunpack.c.h.b16 %v3625
  %v3835 = vunpack.c.l.b16 %v3626
  %v3836 = vunpack.c.h.b16 %v3626
  %v3837 = vunpack.c.l.b16 %v3627
  %v3838 = vunpack.c.h.b16 %v3627
  %v3839 = vunpack.c.l.b16 %v3628
  %v3840 = vunpack.c.h.b16 %v3628
  %v3841 = vunpack.c.l.b16 %v3629
  %v3842 = vunpack.c.h.b16 %v3629
  %v3843 = vunpack.c.l.b16 %v3630
  %v3844 = vunpack.c.h.b16 %v3630
  %v3845 = vunpack.c.l.b16 %v3631
  %v3846 = vunpack.c.h.b16 %v3631
  %v3847 = vunpack.c.l.b16 %v3632
  %v3848 = vunpack.c.h.b16 %v3632
  %v3849 = vunpack.c.l.b16 %v3633
  %v3850 = vunpack.c.h.b16 %v3633
  %v3851 = vunpack.c.l.b16 %v3634
  %v3852 = vunpack.c.h.b16 %v3634
  %v3853 = vunpack.c.l.b16 %v3635
  %v3854 = vunpack.c.h.b16 %v3635
  %v3855 = vunpack.c.l.b16 %v3636
  %v3856 = vunpack.c.h.b16 %v3636
  %v3857 = vunpack.c.l.b16 %v3637
  %v3858 = vunpack.c.h.b16 %v3637
  %v3859 = vunpack.c.l.b16 %v3638
  %v3860 = vunpack.c.h.b16 %v3638
  %v3861 = vunpack.c.l.b16 %v3639
  %v3862 = vunpack.c.h.b16 %v3639
  %v3863 = vunpack.c.l.b16 %v3640
  %v3864 = vunpack.c.h.b16 %v3640
  %v3865 = vunpack.c.l.b16 %v3641
  %v3866 = vunpack.c.h.b16 %v3641
  %v3867 = vunpack.c.l.b16 %v3642
  %v3868 = vunpack.c.h.b16 %v3642
  %v3869 = vunpack.c.l.b16 %v3643
  %v3870 = vunpack.c.h.b16 %v3643
  %v3871 = vunpack.c.l.b16 %v3644
  %v3872 = vunpack.c.h.b16 %v3644
  %v3873 = vunpack.c.l.b16 %v3645
  %v3874 = vunpack.c.h.b16 %v3645
  %v3875 = vunpack.c.l.b16 %v3646
  %v3876 = vunpack.c.h.b16 %v3646
  %v3877 = vunpack.c.l.b16 %v3647
  %v3878 = vunpack.c.h.b16 %v3647
  %v3879 = vunpack.c.l.b16 %v3648
  %v3880 = vunpack.c.h.b16 %v3648
  %v3881 = vunpack.c.l.b16 %v3649
  %v3882 = vunpack.c.h.b16 %v3649
  %v3883 = vunpack.c.l.b16 %v3650
  %v3884 = vunpack.c.h.b16 %v3650
  %v3885 = vunpack.c.l.b16 %v3651
  %v3886 = vunpack.c.h.b16 %v3651
  %v3887 = vunpack.c.l.b16 %v3652
  %v3888 = vunpack.c.h.b16 %v3652
  %v3889 = vunpack.c.l.b16 %v3653
  %v3890 = vunpack.c.h.b16 %v3653
  %v3891 = vunpack.c.l.b16 %v3654
  %v3892 = vunpack.c.h.b16 %v3654
  %v3893 = vunpack.c.l.b16 %v3655
  %v3894 = vunpack.c.h.b16 %v3655
  %v3895 = vunpack.c.l.b16 %v3656
  %v3896 = vunpack.c.h.b16 %v3656
  %v3897 = vunpack.c.l.b16 %v3657
  %v3898 = vunpack.c.h.b16 %v3657
  %v3899 = vunpack.c.l.b16 %v3658
  %v3900 = vunpack.c.h.b16 %v3658
  %v3901 = vunpack.c.l.b16 %v3659
  %v3902 = vunpack.c.h.b16 %v3659
  %v3903 = vunpack.c.l.b16 %v3660
  %v3904 = vunpack.c.h.b16 %v3660
  %v3905 = vunpack.c.l.b16 %v3661
  %v3906 = vunpack.c.h.b16 %v3661
  %v3907 = vunpack.c.l.b16 %v3662
  %v3908 = vunpack.c.h.b16 %v3662
  %v3909 = vunpack.c.l.b16 %v3663
  %v3910 = vunpack.c.h.b16 %v3663
  %v3911 = vunpack.c.l.b16 %v3664
  %v3912 = vunpack.c.h.b16 %v3664
  %v3913 = vunpack.c.l.b16 %v3665
  %v3914 = vunpack.c.h.b16 %v3665
  %v3915 = vunpack.c.l.b16 %v3666
  %v3916 = vunpack.c.h.b16 %v3666
  %v3917 = vunpack.c.l.b16 %v3667
  %v3918 = vunpack.c.h.b16 %v3667
  %v3919 = vunpack.c.l.b16 %v3668
  %v3920 = vunpack.c.h.b16 %v3668
  %v3921 = vunpack.c.l.b16 %v3669
  %v3922 = vunpack.c.h.b16 %v3669
  %v3923 = vunpack.c.l.b16 %v3670
  %v3924 = vunpack.c.h.b16 %v3670
  %v3925 = vunpack.c.l.b16 %v3671
  %v3926 = vunpack.c.h.b16 %v3671
  %v3927 = vunpack.c.l.b16 %v3672
  %v3928 = vunpack.c.h.b16 %v3672
  %v3929 = vunpack.c.l.b16 %v3673
  %v3930 = vunpack.c.h.b16 %v3673
  %v3931 = vunpack.c.l.b16 %v3674
  %v3932 = vunpack.c.h.b16 %v3674
  %v3933 = vunpack.c.l.b16 %v3675
  %v3934 = vunpack.c.h.b16 %v3675
  %v3935 = vunpack.c.l.b16 %v3676
  %v3936 = vunpack.c.h.b16 %v3676
  %v3937 = vunpack.c.l.b16 %v3677
  %v3938 = vunpack.c.h.b16 %v3677
  %v3939 = vunpack.c.l.b16 %v3678
  %v3940 = vunpack.c.h.b16 %v3678
  %v3941 = vunpack.c.l.b16 %v3679
  %v3942 = vunpack.c.h.b16 %v3679
  %v3943 = vunpack.c.l.b16 %v3680
  %v3944 = vunpack.c.h.b16 %v3680
  %v3945 = vunpack.c.l.b16 %v3681
  %v3946 = vunpack.c.h.b16 %v3681
  %v3947 = vunpack.c.l.b16 %v3682
  %v3948 = vunpack.c.h.b16 %v3682
  %v3949 = vunpack.c.l.b16 %v3683
  %v3950 = vunpack.c.h.b16 %v3683
  %v3951 = vunpack.c.l.b16 %v3684
  %v3952 = vunpack.c.h.b16 %v3684
  %v3953 = vunpack.c.l.b16 %v3685
  %v3954 = vunpack.c.h.b16 %v3685
  %v3955 = vunpack.c.l.b16 %v3686
  %v3956 = vunpack.c.h.b16 %v3686
  %v3957 = vunpack.c.l.b16 %v3687
  %v3958 = vunpack.c.h.b16 %v3687
  %v3959 = vunpack.c.l.b16 %v3688
  %v3960 = vunpack.c.h.b16 %v3688
  %v3961 = vunpack.c.l.b16 %v3689
  %v3962 = vunpack.c.h.b16 %v3689
  %v3963 = vunpack.c.l.b16 %v3690
  %v3964 = vunpack.c.h.b16 %v3690
  %v3965 = vunpack.c.l.b16 %v3691
  %v3966 = vunpack.c.h.b16 %v3691
  %v3967 = vunpack.c.l.b16 %v3692
  %v3968 = vunpack.c.h.b16 %v3692
  %v3969 = vunpack.c.l.b16 %v3693
  %v3970 = vunpack.c.h.b16 %v3693
  %v3971 = vunpack.c.l.b16 %v3694
  %v3972 = vunpack.c.h.b16 %v3694
  %v3973 = vunpack.c.l.b16 %v3695
  %v3974 = vunpack.c.h.b16 %v3695
  %v3975 = vunpack.c.l.b16 %v3696
  %v3976 = vunpack.c.h.b16 %v3696
  %v3977 = vunpack.c.l.b16 %v3697
  %v3978 = vunpack.c.h.b16 %v3697
  %v3979 = vunpack.c.l.b16 %v3698
  %v3980 = vunpack.c.h.b16 %v3698
  %v3981 = vunpack.c.l.b16 %v3699
  %v3982 = vunpack.c.h.b16 %v3699
  %v3983 = vunpack.c.l.b16 %v3700
  %v3984 = vunpack.c.h.b16 %v3700
  %v3985 = vunpack.c.l.b16 %v3701
  %v3986 = vunpack.c.h.b16 %v3701
  %v3987 = vunpack.c.l.b16 %v3702
  %v3988 = vunpack.c.h.b16 %v3702
  %v3989 = vunpack.c.l.b16 %v3703
  %v3990 = vunpack.c.h.b16 %v3703
  %v3991 = vunpack.c.l.b16 %v3704
  %v3992 = vunpack.c.h.b16 %v3704
  %v3993 = vunpack.c.l.b16 %v3705
  %v3994 = vunpack.c.h.b16 %v3705
  %v3995 = vunpack.c.l.b16 %v3706
  %v3996 = vunpack.c.h.b16 %v3706
  %v3997 = vunpack.c.l.b16 %v3707
  %v3998 = vunpack.c.h.b16 %v3707
  %v3999 = vunpack.c.l.b16 %v3708
  %v4000 = vunpack.c.h.b16 %v3708
  %v4001 = vunpack.c.l.b16 %v3709
  %v4002 = vunpack.c.h.b16 %v3709
  %v4003 = vunpack.c.l.b16 %v3710
  %v4004 = vunpack.c.h.b16 %v3710
  %v4005 = vpack.c.b16 %v3809, %v3809
  %v4006 = vpack.c.b16 %v3810, %v3810
  %v4007 = vpack.c.b16 %v3811, %v3811
  %v4008 = vpack.c.b16 %v3812, %v3812
  %v4009 = vpack.c.b16 %v3813, %v3813
  %v4010 = vpack.c.b16 %v3814, %v3814
  %v4011 = vpack.c.b16 %v3815, %v3815
  %v4012 = vpack.c.b16 %v3816, %v3816
  %v4013 = vpack.c.b16 %v3817, %v3817
  %v4014 = vpack.c.b16 %v3818, %v3818
  %v4015 = vpack.c.b16 %v3819, %v3819
  %v4016 = vpack.c.b16 %v3820, %v3820
  %v4017 = vpack.c.b16 %v3821, %v3821
  %v4018 = vpack.c.b16 %v3822, %v3822
  %v4019 = vpack.c.b16 %v3823, %v3823
  %v4020 = vpack.c.b16 %v3824, %v3824
  %v4021 = vpack.c.b16 %v3825, %v3825
  %v4022 = vpack.c.b16 %v3826, %v3826
  %v4023 = vpack.c.b16 %v3827, %v3827
  %v4024 = vpack.c.b16 %v3828, %v3828
  %v4025 = vpack.c.b16 %v3829, %v3829
  %v4026 = vpack.c.b16 %v3830, %v3830
  %v4027 = vpack.c.b16 %v3831, %v3831
  %v4028 = vpack.c.b16 %v3832, %v3832
  %v4029 = vpack.c.b16 %v3833, %v3833
  %v4030 = vpack.c.b16 %v3834, %v3834
  %v4031 = vpack.c.b16 %v3835, %v3835
  %v4032 = vpack.c.b16 %v3836, %v3836
  %v4033 = vpack.c.b16 %v3837, %v3837
  %v4034 = vpack.c.b16 %v3838, %v3838
  %v4035 = vpack.c.b16 %v3839, %v3839
  %v4036 = vpack.c.b16 %v3840, %v3840
  %v4037 = vpack.c.b16 %v3841, %v3841
  %v4038 = vpack.c.b16 %v3842, %v3842
  %v4039 = vpack.c.b16 %v3843, %v3843
  %v4040 = vpack.c.b16 %v3844, %v3844
  %v4041 = vpack.c.b16 %v3845, %v3845
  %v4042 = vpack.c.b16 %v3846, %v3846
  %v4043 = vpack.c.b16 %v3847, %v3847
  %v4044 = vpack.c.b16 %v3848, %v3848
  %v4045 = vpack.c.b16 %v3849, %v3849
  %v4046 = vpack.c.b16 %v3850, %v3850
  %v4047 = vpack.c.b16 %v3851, %v3851
  %v4048 = vpack.c.b16 %v3852, %v3852
  %v4049 = vpack.c.b16 %v3853, %v3853
  %v4050 = vpack.c.b16 %v3854, %v3854
  %v4051 = vpack.c.b16 %v3855, %v3855
  %v4052 = vpack.c.b16 %v3856, %v3856
  %v4053 = vpack.c.b16 %v3857, %v3857
  %v4054 = vpack.c.b16 %v3858, %v3858
  %v4055 = vpack.c.b16 %v3859, %v3859
  %v4056 = vpack.c.b16 %v3860, %v3860
  %v4057 = vpack.c.b16 %v3861, %v3861
  %v4058 = vpack.c.b16 %v3862, %v3862
  %v4059 = vpack.c.b16 %v3863, %v3863
  %v4060 = vpack.c.b16 %v3864, %v3864
  %v4061 = vpack.c.b16 %v3865, %v3865
  %v4062 = vpack.c.b16 %v3866, %v3866
  %v4063 = vpack.c.b16 %v3867, %v3867
  %v4064 = vpack.c.b16 %v3868, %v3868
  %v4065 = vpack.c.b16 %v3869, %v3869
  %v4066 = vpack.c.b16 %v3870, %v3870
  %v4067 = vpack.c.b16 %v3871, %v3871
  %v4068 = vpack.c.b16 %v3872, %v3872
  %v4069 = vpack.c.b16 %v3873, %v3873
  %v4070 = vpack.c.b16 %v3874, %v3874
  %v4071 = vpack.c.b16 %v3875, %v3875
  %v4072 = vpack.c.b16 %v3876, %v3876
  %v4073 = vpack.c.b16 %v3877, %v3877
  %v4074 = vpack.c.b16 %v3878, %v3878
  %v4075 = vpack.c.b16 %v3879, %v3879
  %v4076 = vpack.c.b16 %v3880, %v3880
  %v4077 = vpack.c.b16 %v3881, %v3881
  %v4078 = vpack.c.b16 %v3882, %v3882
  %v4079 = vpack.c.b16 %v3883, %v3883
  %v4080 = vpack.c.b16 %v3884, %v3884
  %v4081 = vpack.c.b16 %v3885, %v3885
  %v4082 = vpack.c.b16 %v3886, %v3886
  %v4083 = vpack.c.b16 %v3887, %v3887
  %v4084 = vpack.c.b16 %v3888, %v3888
  %v4085 = vpack.c.b16 %v3889, %v3889
  %v4086 = vpack.c.b16 %v3890, %v3890
  %v4087 = vpack.c.b16 %v3891, %v3891
  %v4088 = vpack.c.b16 %v3892, %v3892
  %v4089 = vpack.c.b16 %v3893, %v3893
  %v4090 = vpack.c.b16 %v3894, %v3894
  %v4091 = vpack.c.b16 %v3895, %v3895
  %v4092 = vpack.c.b16 %v3896, %v3896
  %v4093 = vpack.c.b16 %v3897, %v3897
  %v4094 = vpack.c.b16 %v3898, %v3898
  %v4095 = vpack.c.b16 %v3899, %v3899
  %v4096 = vpack.c.b16 %v3900, %v3900
  %v4097 = vpack.c.b16 %v3901, %v3901
  %v4098 = vpack.c.b16 %v3902, %v3902
  %v4099 = vpack.c.b16 %v3903, %v3903
  %v4100 = vpack.c.b16 %v3904, %v3904
  %v4101 = vpack.c.b16 %v3905, %v3905
  %v4102 = vpack.c.b16 %v3906, %v3906
  %v4103 = vpack.c.b16 %v3907, %v3907
  %v4104 = vpack.c.b16 %v3908, %v3908
  %v4105 = vpack.c.b16 %v3909, %v3909
  %v4106 = vpack.c.b16 %v3910, %v3910
  %v4107 = vpack.c.b16 %v3911, %v3911
  %v4108 = vpack.c.b16 %v3912, %v3912
  %v4109 = vpack.c.b16 %v3913, %v3913
  %v4110 = vpack.c.b16 %v3914, %v3914
  %v4111 = vpack.c.b16 %v3915, %v3915
  %v4112 = vpack.c.b16 %v3916, %v3916
  %v4113 = vpack.c.b16 %v3917, %v3917
  %v4114 = vpack.c.b16 %v3918, %v3918
  %v4115 = vpack.c.b16 %v3919, %v3919
  %v4116 = vpack.c.b16 %v3920, %v3920
  %v4117 = vpack.c.b16 %v3921, %v3921
  %v4118 = vpack.c.b16 %v3922, %v3922
  %v4119 = vpack.c.b16 %v3923, %v3923
  %v4120 = vpack.c.b16 %v3924, %v3924
  %v4121 = vpack.c.b16 %v3925, %v3925
  %v4122 = vpack.c.b16 %v3926, %v3926
  %v4123 = vpack.c.b16 %v3927, %v3927
  %v4124 = vpack.c.b16 %v3928, %v3928
  %v4125 = vpack.c.b16 %v3929, %v3929
  %v4126 = vpack.c.b16 %v3930, %v3930
  %v4127 = vpack.c.b16 %v3931, %v3931
  %v4128 = vpack.c.b16 %v3932, %v3932
  %v4129 = vpack.c.b16 %v3933, %v3933
  %v4130 = vpack.c.b16 %v3934, %v3934
  %v4131 = vpack.c.b16 %v3935, %v3935
  %v4132 = vpack.c.b16 %v3936, %v3936
  %v4133 = vpack.c.b16 %v3937, %v3937
  %v4134 = vpack.c.b16 %v3938, %v3938
  %v4135 = vpack.c.b16 %v3939, %v3939
  %v4136 = vpack.c.b16 %v3940, %v3940
  %v4137 = vpack.c.b16 %v3941, %v3941
  %v4138 = vpack.c.b16 %v3942, %v3942
  %v4139 = vpack.c.b16 %v3943, %v3943
  %v4140 = vpack.c.b16 %v3944, %v3944
  %v4141 = vpack.c.b16 %v3945, %v3945
  %v4142 = vpack.c.b16 %v3946, %v3946
  %v4143 = vpack.c.b16 %v3947, %v3947
  %v4144 = vpack.c.b16 %v3948, %v3948
  %v4145 = vpack.c.b16 %v3949, %v3949
  %v4146 = vpack.c.b16 %v3950, %v3950
  %v4147 = vpack.c.b16 %v3951, %v3951
  %v4148 = vpack.c.b16 %v3952, %v3952
  %v4149 = vpack.c.b16 %v3953, %v3953
  %v4150 = vpack.c.b16 %v3954, %v3954
  %v4151 = vpack.c.b16 %v3955, %v3955
  %v4152 = vpack.c.b16 %v3956, %v3956
  %v4153 = vpack.c.b16 %v3957, %v3957
  %v4154 = vpack.c.b16 %v3958, %v3958
  %v4155 = vpack.c.b16 %v3959, %v3959
  %v4156 = vpack.c.b16 %v3960, %v3960
  %v4157 = vpack.c.b16 %v3961, %v3961
  %v4158 = vpack.c.b16 %v3962, %v3962
  %v4159 = vpack.c.b16 %v3963, %v3963
  %v4160 = vpack.c.b16 %v3964, %v3964
  %v4161 = vpack.c.b16 %v3965, %v3965
  %v4162 = vpack.c.b16 %v3966, %v3966
  %v4163 = vpack.c.b16 %v3967, %v3967
  %v4164 = vpack.c.b16 %v3968, %v3968
  %v4165 = vpack.c.b16 %v3969, %v3969
  %v4166 = vpack.c.b16 %v3970, %v3970
  %v4167 = vpack.c.b16 %v3971, %v3971
  %v4168 = vpack.c.b16 %v3972, %v3972
  %v4169 = vpack.c.b16 %v3973, %v3973
  %v4170 = vpack.c.b16 %v3974, %v3974
  %v4171 = vpack.c.b16 %v3975, %v3975
  %v4172 = vpack.c.b16 %v3976, %v3976
  %v4173 = vpack.c.b16 %v3977, %v3977
  %v4174 = vpack.c.b16 %v3978, %v3978
  %v4175 = vpack.c.b16 %v3979, %v3979
  %v4176 = vpack.c.b16 %v3980, %v3980
  %v4177 = vpack.c.b16 %v3981, %v3981
  %v4178 = vpack.c.b16 %v3982, %v3982
  %v4179 = vpack.c.b16 %v3983, %v3983
  %v4180 = vpack.c.b16 %v3984, %v3984
  %v4181 = vpack.c.b16 %v3985, %v3985
  %v4182 = vpack.c.b16 %v3986, %v3986
  %v4183 = vpack.c.b16 %v3987, %v3987
  %v4184 = vpack.c.b16 %v3988, %v3988
  %v4185 = vpack.c.b16 %v3989, %v3989
  %v4186 = vpack.c.b16 %v3990, %v3990
  %v4187 = vpack.c.b16 %v3991, %v3991
  %v4188 = vpack.c.b16 %v3992, %v3992
  %v4189 = vpack.c.b16 %v3993, %v3993
  %v4190 = vpack.c.b16 %v3994, %v3994
  %v4191 = vpack.c.b16 %v3995, %v3995
  %v4192 = vpack.c.b16 %v3996, %v3996
  %v4193 = vpack.c.b16 %v3997, %v3997
  %v4194 = vpack.c.b16 %v3998, %v3998
  %v4195 = vpack.c.b16 %v3999, %v3999
  %v4196 = vpack.c.b16 %v4000, %v4000
  %v4197 = vpack.c.b16 %v4001, %v4001
  %v4198 = vpack.c.b16 %v4002, %v4002
  %v4199 = vpack.c.b16 %v4003, %v4003
  %v4200 = vpack.c.b16 %v4004, %v4004
  %vm4397 = vcmask 44032
  %4398 = vst.msk [vmem:[%s2] sm:$0xf] %vm4397, %v4005
  %4399 = vst.msk [vmem:[%s2 + $0x4] sm:$0xf] %vm4397, %v4006
  %4400 = vst.msk [vmem:[%s2 + $0x8] sm:$0xf] %vm4397, %v4007
  %4401 = vst.msk [vmem:[%s2 + $0xc] sm:$0xf] %vm4397, %v4008
  %4402 = vst.msk [vmem:[%s2 + $0x10] sm:$0xf] %vm4397, %v4009
  %4403 = vst.msk [vmem:[%s2 + $0x14] sm:$0xf] %vm4397, %v4010
  %4404 = vst.msk [vmem:[%s2 + $0x18] sm:$0xf] %vm4397, %v4011
  %4405 = vst.msk [vmem:[%s2 + $0x1c] sm:$0xf] %vm4397, %v4012
  %4406 = vst.msk [vmem:[%s2 + $0x20] sm:$0xf] %vm4397, %v4013
  %4407 = vst.msk [vmem:[%s2 + $0x24] sm:$0xf] %vm4397, %v4014
  %4408 = vst.msk [vmem:[%s2 + $0x28] sm:$0xf] %vm4397, %v4015
  %4409 = vst.msk [vmem:[%s2 + $0x2c] sm:$0xf] %vm4397, %v4016
  %4410 = vst.msk [vmem:[%s2 + $0x30] sm:$0xf] %vm4397, %v4017
  %4411 = vst.msk [vmem:[%s2 + $0x34] sm:$0xf] %vm4397, %v4018
  %4412 = vst.msk [vmem:[%s2 + $0x38] sm:$0xf] %vm4397, %v4019
  %4413 = vst.msk [vmem:[%s2 + $0x3c] sm:$0xf] %vm4397, %v4020
  %4414 = vst.msk [vmem:[%s2 + $0x40] sm:$0xf] %vm4397, %v4021
  %4415 = vst.msk [vmem:[%s2 + $0x44] sm:$0xf] %vm4397, %v4022
  %4416 = vst.msk [vmem:[%s2 + $0x48] sm:$0xf] %vm4397, %v4023
  %4417 = vst.msk [vmem:[%s2 + $0x4c] sm:$0xf] %vm4397, %v4024
  %4418 = vst.msk [vmem:[%s2 + $0x50] sm:$0xf] %vm4397, %v4025
  %4419 = vst.msk [vmem:[%s2 + $0x54] sm:$0xf] %vm4397, %v4026
  %4420 = vst.msk [vmem:[%s2 + $0x58] sm:$0xf] %vm4397, %v4027
  %4421 = vst.msk [vmem:[%s2 + $0x5c] sm:$0xf] %vm4397, %v4028
  %4422 = vst.msk [vmem:[%s2 + $0x60] sm:$0xf] %vm4397, %v4029
  %4423 = vst.msk [vmem:[%s2 + $0x64] sm:$0xf] %vm4397, %v4030
  %4424 = vst.msk [vmem:[%s2 + $0x68] sm:$0xf] %vm4397, %v4031
  %4425 = vst.msk [vmem:[%s2 + $0x6c] sm:$0xf] %vm4397, %v4032
  %4426 = vst.msk [vmem:[%s2 + $0x70] sm:$0xf] %vm4397, %v4033
  %4427 = vst.msk [vmem:[%s2 + $0x74] sm:$0xf] %vm4397, %v4034
  %4428 = vst.msk [vmem:[%s2 + $0x78] sm:$0xf] %vm4397, %v4035
  %4429 = vst.msk [vmem:[%s2 + $0x7c] sm:$0xf] %vm4397, %v4036
  %4430 = vst.msk [vmem:[%s2 + $0x80] sm:$0xf] %vm4397, %v4037
  %4431 = vst.msk [vmem:[%s2 + $0x84] sm:$0xf] %vm4397, %v4038
  %4432 = vst.msk [vmem:[%s2 + $0x88] sm:$0xf] %vm4397, %v4039
  %4433 = vst.msk [vmem:[%s2 + $0x8c] sm:$0xf] %vm4397, %v4040
  %4434 = vst.msk [vmem:[%s2 + $0x90] sm:$0xf] %vm4397, %v4041
  %4435 = vst.msk [vmem:[%s2 + $0x94] sm:$0xf] %vm4397, %v4042
  %4436 = vst.msk [vmem:[%s2 + $0x98] sm:$0xf] %vm4397, %v4043
  %4437 = vst.msk [vmem:[%s2 + $0x9c] sm:$0xf] %vm4397, %v4044
  %4438 = vst.msk [vmem:[%s2 + $0xa0] sm:$0xf] %vm4397, %v4045
  %4439 = vst.msk [vmem:[%s2 + $0xa4] sm:$0xf] %vm4397, %v4046
  %4440 = vst.msk [vmem:[%s2 + $0xa8] sm:$0xf] %vm4397, %v4047
  %4441 = vst.msk [vmem:[%s2 + $0xac] sm:$0xf] %vm4397, %v4048
  %4442 = vst.msk [vmem:[%s2 + $0xb0] sm:$0xf] %vm4397, %v4049
  %4443 = vst.msk [vmem:[%s2 + $0xb4] sm:$0xf] %vm4397, %v4050
  %4444 = vst.msk [vmem:[%s2 + $0xb8] sm:$0xf] %vm4397, %v4051
  %4445 = vst.msk [vmem:[%s2 + $0xbc] sm:$0xf] %vm4397, %v4052
  %4446 = vst.msk [vmem:[%s2 + $0xc0] sm:$0xf] %vm4397, %v4053
  %4447 = vst.msk [vmem:[%s2 + $0xc4] sm:$0xf] %vm4397, %v4054
  %4448 = vst.msk [vmem:[%s2 + $0xc8] sm:$0xf] %vm4397, %v4055
  %4449 = vst.msk [vmem:[%s2 + $0xcc] sm:$0xf] %vm4397, %v4056
  %4450 = vst.msk [vmem:[%s2 + $0xd0] sm:$0xf] %vm4397, %v4057
  %4451 = vst.msk [vmem:[%s2 + $0xd4] sm:$0xf] %vm4397, %v4058
  %4452 = vst.msk [vmem:[%s2 + $0xd8] sm:$0xf] %vm4397, %v4059
  %4453 = vst.msk [vmem:[%s2 + $0xdc] sm:$0xf] %vm4397, %v4060
  %4454 = vst.msk [vmem:[%s2 + $0xe0] sm:$0xf] %vm4397, %v4061
  %4455 = vst.msk [vmem:[%s2 + $0xe4] sm:$0xf] %vm4397, %v4062
  %4456 = vst.msk [vmem:[%s2 + $0xe8] sm:$0xf] %vm4397, %v4063
  %4457 = vst.msk [vmem:[%s2 + $0xec] sm:$0xf] %vm4397, %v4064
  %4458 = vst.msk [vmem:[%s2 + $0xf0] sm:$0xf] %vm4397, %v4065
  %4459 = vst.msk [vmem:[%s2 + $0xf4] sm:$0xf] %vm4397, %v4066
  %4460 = vst.msk [vmem:[%s2 + $0xf8] sm:$0xf] %vm4397, %v4067
  %4461 = vst.msk [vmem:[%s2 + $0xfc] sm:$0xf] %vm4397, %v4068
  %4462 = vst.msk [vmem:[%s2 + $0x100] sm:$0xf] %vm4397, %v4069
  %4463 = vst.msk [vmem:[%s2 + $0x104] sm:$0xf] %vm4397, %v4070
  %4464 = vst.msk [vmem:[%s2 + $0x108] sm:$0xf] %vm4397, %v4071
  %4465 = vst.msk [vmem:[%s2 + $0x10c] sm:$0xf] %vm4397, %v4072
  %4466 = vst.msk [vmem:[%s2 + $0x110] sm:$0xf] %vm4397, %v4073
  %4467 = vst.msk [vmem:[%s2 + $0x114] sm:$0xf] %vm4397, %v4074
  %4468 = vst.msk [vmem:[%s2 + $0x118] sm:$0xf] %vm4397, %v4075
  %4469 = vst.msk [vmem:[%s2 + $0x11c] sm:$0xf] %vm4397, %v4076
  %4470 = vst.msk [vmem:[%s2 + $0x120] sm:$0xf] %vm4397, %v4077
  %4471 = vst.msk [vmem:[%s2 + $0x124] sm:$0xf] %vm4397, %v4078
  %4472 = vst.msk [vmem:[%s2 + $0x128] sm:$0xf] %vm4397, %v4079
  %4473 = vst.msk [vmem:[%s2 + $0x12c] sm:$0xf] %vm4397, %v4080
  %4474 = vst.msk [vmem:[%s2 + $0x130] sm:$0xf] %vm4397, %v4081
  %4475 = vst.msk [vmem:[%s2 + $0x134] sm:$0xf] %vm4397, %v4082
  %4476 = vst.msk [vmem:[%s2 + $0x138] sm:$0xf] %vm4397, %v4083
  %4477 = vst.msk [vmem:[%s2 + $0x13c] sm:$0xf] %vm4397, %v4084
  %4478 = vst.msk [vmem:[%s2 + $0x140] sm:$0xf] %vm4397, %v4085
  %4479 = vst.msk [vmem:[%s2 + $0x144] sm:$0xf] %vm4397, %v4086
  %4480 = vst.msk [vmem:[%s2 + $0x148] sm:$0xf] %vm4397, %v4087
  %4481 = vst.msk [vmem:[%s2 + $0x14c] sm:$0xf] %vm4397, %v4088
  %4482 = vst.msk [vmem:[%s2 + $0x150] sm:$0xf] %vm4397, %v4089
  %4483 = vst.msk [vmem:[%s2 + $0x154] sm:$0xf] %vm4397, %v4090
  %4484 = vst.msk [vmem:[%s2 + $0x158] sm:$0xf] %vm4397, %v4091
  %4485 = vst.msk [vmem:[%s2 + $0x15c] sm:$0xf] %vm4397, %v4092
  %4486 = vst.msk [vmem:[%s2 + $0x160] sm:$0xf] %vm4397, %v4093
  %4487 = vst.msk [vmem:[%s2 + $0x164] sm:$0xf] %vm4397, %v4094
  %4488 = vst.msk [vmem:[%s2 + $0x168] sm:$0xf] %vm4397, %v4095
  %4489 = vst.msk [vmem:[%s2 + $0x16c] sm:$0xf] %vm4397, %v4096
  %4490 = vst.msk [vmem:[%s2 + $0x170] sm:$0xf] %vm4397, %v4097
  %4491 = vst.msk [vmem:[%s2 + $0x174] sm:$0xf] %vm4397, %v4098
  %4492 = vst.msk [vmem:[%s2 + $0x178] sm:$0xf] %vm4397, %v4099
  %4493 = vst.msk [vmem:[%s2 + $0x17c] sm:$0xf] %vm4397, %v4100
  %4494 = vst.msk [vmem:[%s2 + $0x180] sm:$0xf] %vm4397, %v4101
  %4495 = vst.msk [vmem:[%s2 + $0x184] sm:$0xf] %vm4397, %v4102
  %4496 = vst.msk [vmem:[%s2 + $0x188] sm:$0xf] %vm4397, %v4103
  %4497 = vst.msk [vmem:[%s2 + $0x18c] sm:$0xf] %vm4397, %v4104
  %4498 = vst.msk [vmem:[%s2 + $0x190] sm:$0xf] %vm4397, %v4105
  %4499 = vst.msk [vmem:[%s2 + $0x194] sm:$0xf] %vm4397, %v4106
  %4500 = vst.msk [vmem:[%s2 + $0x198] sm:$0xf] %vm4397, %v4107
  %4501 = vst.msk [vmem:[%s2 + $0x19c] sm:$0xf] %vm4397, %v4108
  %4502 = vst.msk [vmem:[%s2 + $0x1a0] sm:$0xf] %vm4397, %v4109
  %4503 = vst.msk [vmem:[%s2 + $0x1a4] sm:$0xf] %vm4397, %v4110
  %4504 = vst.msk [vmem:[%s2 + $0x1a8] sm:$0xf] %vm4397, %v4111
  %4505 = vst.msk [vmem:[%s2 + $0x1ac] sm:$0xf] %vm4397, %v4112
  %4506 = vst.msk [vmem:[%s2 + $0x1b0] sm:$0xf] %vm4397, %v4113
  %4507 = vst.msk [vmem:[%s2 + $0x1b4] sm:$0xf] %vm4397, %v4114
  %4508 = vst.msk [vmem:[%s2 + $0x1b8] sm:$0xf] %vm4397, %v4115
  %4509 = vst.msk [vmem:[%s2 + $0x1bc] sm:$0xf] %vm4397, %v4116
  %4510 = vst.msk [vmem:[%s2 + $0x1c0] sm:$0xf] %vm4397, %v4117
  %4511 = vst.msk [vmem:[%s2 + $0x1c4] sm:$0xf] %vm4397, %v4118
  %4512 = vst.msk [vmem:[%s2 + $0x1c8] sm:$0xf] %vm4397, %v4119
  %4513 = vst.msk [vmem:[%s2 + $0x1cc] sm:$0xf] %vm4397, %v4120
  %4514 = vst.msk [vmem:[%s2 + $0x1d0] sm:$0xf] %vm4397, %v4121
  %4515 = vst.msk [vmem:[%s2 + $0x1d4] sm:$0xf] %vm4397, %v4122
  %4516 = vst.msk [vmem:[%s2 + $0x1d8] sm:$0xf] %vm4397, %v4123
  %4517 = vst.msk [vmem:[%s2 + $0x1dc] sm:$0xf] %vm4397, %v4124
  %4518 = vst.msk [vmem:[%s2 + $0x1e0] sm:$0xf] %vm4397, %v4125
  %4519 = vst.msk [vmem:[%s2 + $0x1e4] sm:$0xf] %vm4397, %v4126
  %4520 = vst.msk [vmem:[%s2 + $0x1e8] sm:$0xf] %vm4397, %v4127
  %4521 = vst.msk [vmem:[%s2 + $0x1ec] sm:$0xf] %vm4397, %v4128
  %4522 = vst.msk [vmem:[%s2 + $0x1f0] sm:$0xf] %vm4397, %v4129
  %4523 = vst.msk [vmem:[%s2 + $0x1f4] sm:$0xf] %vm4397, %v4130
  %4524 = vst.msk [vmem:[%s2 + $0x1f8] sm:$0xf] %vm4397, %v4131
  %4525 = vst.msk [vmem:[%s2 + $0x1fc] sm:$0xf] %vm4397, %v4132
  %4526 = vst.msk [vmem:[%s2 + $0x200] sm:$0xf] %vm4397, %v4133
  %4527 = vst.msk [vmem:[%s2 + $0x204] sm:$0xf] %vm4397, %v4134
  %4528 = vst.msk [vmem:[%s2 + $0x208] sm:$0xf] %vm4397, %v4135
  %4529 = vst.msk [vmem:[%s2 + $0x20c] sm:$0xf] %vm4397, %v4136
  %4530 = vst.msk [vmem:[%s2 + $0x210] sm:$0xf] %vm4397, %v4137
  %4531 = vst.msk [vmem:[%s2 + $0x214] sm:$0xf] %vm4397, %v4138
  %4532 = vst.msk [vmem:[%s2 + $0x218] sm:$0xf] %vm4397, %v4139
  %4533 = vst.msk [vmem:[%s2 + $0x21c] sm:$0xf] %vm4397, %v4140
  %4534 = vst.msk [vmem:[%s2 + $0x220] sm:$0xf] %vm4397, %v4141
  %4535 = vst.msk [vmem:[%s2 + $0x224] sm:$0xf] %vm4397, %v4142
  %4536 = vst.msk [vmem:[%s2 + $0x228] sm:$0xf] %vm4397, %v4143
  %4537 = vst.msk [vmem:[%s2 + $0x22c] sm:$0xf] %vm4397, %v4144
  %4538 = vst.msk [vmem:[%s2 + $0x230] sm:$0xf] %vm4397, %v4145
  %4539 = vst.msk [vmem:[%s2 + $0x234] sm:$0xf] %vm4397, %v4146
  %4540 = vst.msk [vmem:[%s2 + $0x238] sm:$0xf] %vm4397, %v4147
  %4541 = vst.msk [vmem:[%s2 + $0x23c] sm:$0xf] %vm4397, %v4148
  %4542 = vst.msk [vmem:[%s2 + $0x240] sm:$0xf] %vm4397, %v4149
  %4543 = vst.msk [vmem:[%s2 + $0x244] sm:$0xf] %vm4397, %v4150
  %4544 = vst.msk [vmem:[%s2 + $0x248] sm:$0xf] %vm4397, %v4151
  %4545 = vst.msk [vmem:[%s2 + $0x24c] sm:$0xf] %vm4397, %v4152
  %4546 = vst.msk [vmem:[%s2 + $0x250] sm:$0xf] %vm4397, %v4153
  %4547 = vst.msk [vmem:[%s2 + $0x254] sm:$0xf] %vm4397, %v4154
  %4548 = vst.msk [vmem:[%s2 + $0x258] sm:$0xf] %vm4397, %v4155
  %4549 = vst.msk [vmem:[%s2 + $0x25c] sm:$0xf] %vm4397, %v4156
  %4550 = vst.msk [vmem:[%s2 + $0x260] sm:$0xf] %vm4397, %v4157
  %4551 = vst.msk [vmem:[%s2 + $0x264] sm:$0xf] %vm4397, %v4158
  %4552 = vst.msk [vmem:[%s2 + $0x268] sm:$0xf] %vm4397, %v4159
  %4553 = vst.msk [vmem:[%s2 + $0x26c] sm:$0xf] %vm4397, %v4160
  %4554 = vst.msk [vmem:[%s2 + $0x270] sm:$0xf] %vm4397, %v4161
  %4555 = vst.msk [vmem:[%s2 + $0x274] sm:$0xf] %vm4397, %v4162
  %4556 = vst.msk [vmem:[%s2 + $0x278] sm:$0xf] %vm4397, %v4163
  %4557 = vst.msk [vmem:[%s2 + $0x27c] sm:$0xf] %vm4397, %v4164
  %4558 = vst.msk [vmem:[%s2 + $0x280] sm:$0xf] %vm4397, %v4165
  %4559 = vst.msk [vmem:[%s2 + $0x284] sm:$0xf] %vm4397, %v4166
  %4560 = vst.msk [vmem:[%s2 + $0x288] sm:$0xf] %vm4397, %v4167
  %4561 = vst.msk [vmem:[%s2 + $0x28c] sm:$0xf] %vm4397, %v4168
  %4562 = vst.msk [vmem:[%s2 + $0x290] sm:$0xf] %vm4397, %v4169
  %4563 = vst.msk [vmem:[%s2 + $0x294] sm:$0xf] %vm4397, %v4170
  %4564 = vst.msk [vmem:[%s2 + $0x298] sm:$0xf] %vm4397, %v4171
  %4565 = vst.msk [vmem:[%s2 + $0x29c] sm:$0xf] %vm4397, %v4172
  %4566 = vst.msk [vmem:[%s2 + $0x2a0] sm:$0xf] %vm4397, %v4173
  %4567 = vst.msk [vmem:[%s2 + $0x2a4] sm:$0xf] %vm4397, %v4174
  %4568 = vst.msk [vmem:[%s2 + $0x2a8] sm:$0xf] %vm4397, %v4175
  %4569 = vst.msk [vmem:[%s2 + $0x2ac] sm:$0xf] %vm4397, %v4176
  %4570 = vst.msk [vmem:[%s2 + $0x2b0] sm:$0xf] %vm4397, %v4177
  %4571 = vst.msk [vmem:[%s2 + $0x2b4] sm:$0xf] %vm4397, %v4178
  %4572 = vst.msk [vmem:[%s2 + $0x2b8] sm:$0xf] %vm4397, %v4179
  %4573 = vst.msk [vmem:[%s2 + $0x2bc] sm:$0xf] %vm4397, %v4180
  %4574 = vst.msk [vmem:[%s2 + $0x2c0] sm:$0xf] %vm4397, %v4181
  %4575 = vst.msk [vmem:[%s2 + $0x2c4] sm:$0xf] %vm4397, %v4182
  %4576 = vst.msk [vmem:[%s2 + $0x2c8] sm:$0xf] %vm4397, %v4183
  %4577 = vst.msk [vmem:[%s2 + $0x2cc] sm:$0xf] %vm4397, %v4184
  %4578 = vst.msk [vmem:[%s2 + $0x2d0] sm:$0xf] %vm4397, %v4185
  %4579 = vst.msk [vmem:[%s2 + $0x2d4] sm:$0xf] %vm4397, %v4186
  %4580 = vst.msk [vmem:[%s2 + $0x2d8] sm:$0xf] %vm4397, %v4187
  %4581 = vst.msk [vmem:[%s2 + $0x2dc] sm:$0xf] %vm4397, %v4188
  %4582 = vst.msk [vmem:[%s2 + $0x2e0] sm:$0xf] %vm4397, %v4189
  %4583 = vst.msk [vmem:[%s2 + $0x2e4] sm:$0xf] %vm4397, %v4190
  %4584 = vst.msk [vmem:[%s2 + $0x2e8] sm:$0xf] %vm4397, %v4191
  %4585 = vst.msk [vmem:[%s2 + $0x2ec] sm:$0xf] %vm4397, %v4192
  %4586 = vst.msk [vmem:[%s2 + $0x2f0] sm:$0xf] %vm4397, %v4193
  %4587 = vst.msk [vmem:[%s2 + $0x2f4] sm:$0xf] %vm4397, %v4194
  %4588 = vst.msk [vmem:[%s2 + $0x2f8] sm:$0xf] %vm4397, %v4195
  %4589 = vst.msk [vmem:[%s2 + $0x2fc] sm:$0xf] %vm4397, %v4196
  %4590 = vst.msk [vmem:[%s2 + $0x300] sm:$0xf] %vm4397, %v4197
  %4591 = vst.msk [vmem:[%s2 + $0x304] sm:$0xf] %vm4397, %v4198
  %4592 = vst.msk [vmem:[%s2 + $0x308] sm:$0xf] %vm4397, %v4199
  %4593 = vst.msk [vmem:[%s2 + $0x30c] sm:$0xf] %vm4397, %v4200
  // Predicated region
  $region10: #{qlenet_forward.3} parent=0 // pred_check
    _
  $region11: #{qlenet_forward.3} parent=0 // pred_check_branch
    %4595 = sbr.rel (0) target = $region13
  $region12: #{qlenet_forward.3} parent=0 // pred_region
    _
  $region13: #{qlenet_forward.3} parent=0 // pred_fallthru
    _
  // Predicated region
  $region14: #{qlenet_forward.3} parent=0 // pred_check
    _
  $region15: #{qlenet_forward.3} parent=0 // pred_check_branch
    %4597 = sbr.rel (0) target = $region17
  $region16: #{qlenet_forward.3} parent=0 // pred_region
    _
  $region17: #{qlenet_forward.3} parent=0 // pred_fallthru
    _

// kernel: qlenet_forward.4
$region0: #{qlenet_forward.4}
  #allocation0 [shape = 'u32[]', space=smem, size = 0x4, offset = 0x4, fixed_abs, tag = 'smem constant byte address 0x4 - core index']
  #allocation1 [shape = 'u32[144,128]{1,0:T(1,128)}', space=vmem, size = 0x12000, scoped, tag = 'internal scratch']
  %s0 = inlined_call_operand.vmem [shape: bf16[200,150], index: 0, kind: input, shape index: {}]
  %s1 = inlined_call_operand.vmem [shape: bf16[150,16], index: 1, kind: input, shape index: {}]
  %s2 = inlined_call_operand.vmem [shape: bf16[200,16], index: 2, kind: output, shape index: {}]
  %s3 = sld [smem:[#allocation0]]
  $region18: #{qlenet_forward.4} parent=0
    _
  %s5 = ssub.s32 1, %s3
  %s6 = scalar_select 0, %s5, %s3
  // Predicated region
  $region2: #{qlenet_forward.4} parent=0 // pred_check
    _
  $region3: #{qlenet_forward.4} parent=0 // pred_check_branch
    %8 = sbr.rel (0) target = $region5
  $region4: #{qlenet_forward.4} parent=0 // pred_region
    _
  $region5: #{qlenet_forward.4} parent=0 // pred_fallthru
    _
  // Predicated region
  $region6: #{qlenet_forward.4} parent=0 // pred_check
    _
  $region7: #{qlenet_forward.4} parent=0 // pred_check_branch
    %10 = sbr.rel (0) target = $region9
  $region8: #{qlenet_forward.4} parent=0 // pred_region
    _
  $region9: #{qlenet_forward.4} parent=0 // pred_fallthru
    _
  %v12 = vld [vmem:[%s0] sm:$0xff]
  %v13 = vld [vmem:[%s0 + $0x8] sm:$0xff]
  %v14 = vld [vmem:[%s0 + $0x10] sm:$0xff]
  %v15 = vld [vmem:[%s0 + $0x18] sm:$0xff]
  %v16 = vld [vmem:[%s0 + $0x20] sm:$0xff]
  %v17 = vld [vmem:[%s0 + $0x28] sm:$0xff]
  %v18 = vld [vmem:[%s0 + $0x30] sm:$0xff]
  %v19 = vld [vmem:[%s0 + $0x38] sm:$0xff]
  %v20 = vld [vmem:[%s0 + $0x40] sm:$0xff]
  %v21 = vld [vmem:[%s0 + $0x48] sm:$0xff]
  %v22 = vld [vmem:[%s0 + $0x50] sm:$0xff]
  %v23 = vld [vmem:[%s0 + $0x58] sm:$0xff]
  %v24 = vld [vmem:[%s0 + $0x60] sm:$0xff]
  %v25 = vld [vmem:[%s0 + $0x68] sm:$0xff]
  %v26 = vld [vmem:[%s0 + $0x70] sm:$0xff]
  %v27 = vld [vmem:[%s0 + $0x78] sm:$0xff]
  %v28 = vld [vmem:[%s0 + $0x80] sm:$0xff]
  %v29 = vld [vmem:[%s0 + $0x88] sm:$0xff]
  %v30 = vld [vmem:[%s0 + $0x90] sm:$0xff]
  %v31 = vld [vmem:[%s0 + $0x98] sm:$0xff]
  %v32 = vld [vmem:[%s0 + $0xa0] sm:$0xff]
  %v33 = vld [vmem:[%s0 + $0xa8] sm:$0xff]
  %v34 = vld [vmem:[%s0 + $0xb0] sm:$0xff]
  %v35 = vld [vmem:[%s0 + $0xb8] sm:$0xff]
  %v36 = vld [vmem:[%s0 + $0xc0] sm:$0xff]
  %v37 = vld [vmem:[%s1] sm:$0xf]
  %v38 = vld [vmem:[%s1 + $0x4] sm:$0xf]
  %v39 = vld [vmem:[%s1 + $0x8] sm:$0xf]
  %v40 = vld [vmem:[%s1 + $0xc] sm:$0xf]
  %v41 = vld [vmem:[%s1 + $0x10] sm:$0xf]
  %v42 = vld [vmem:[%s1 + $0x14] sm:$0xf]
  %v43 = vld [vmem:[%s1 + $0x18] sm:$0xf]
  %v44 = vld [vmem:[%s1 + $0x1c] sm:$0xf]
  %v45 = vld [vmem:[%s1 + $0x20] sm:$0xf]
  %v46 = vld [vmem:[%s1 + $0x24] sm:$0xf]
  %v47 = vld [vmem:[%s1 + $0x28] sm:$0xf]
  %v48 = vld [vmem:[%s1 + $0x2c] sm:$0xf]
  %v49 = vld [vmem:[%s1 + $0x30] sm:$0xf]
  %v50 = vld [vmem:[%s1 + $0x34] sm:$0xf]
  %v51 = vld [vmem:[%s1 + $0x38] sm:$0xf]
  %v52 = vld [vmem:[%s1 + $0x3c] sm:$0xf]
  %v53 = vld [vmem:[%s1 + $0x40] sm:$0xf]
  %v54 = vld [vmem:[%s1 + $0x44] sm:$0xf]
  %v55 = vld [vmem:[%s1 + $0x48] sm:$0x7]
  %v81 = vunpack.c.l.b16 %v12
  %v82 = vunpack.c.h.b16 %v12
  %v83 = vunpack.c.l.b16 %v13
  %v84 = vunpack.c.h.b16 %v13
  %v85 = vunpack.c.l.b16 %v14
  %v86 = vunpack.c.h.b16 %v14
  %v87 = vunpack.c.l.b16 %v15
  %v88 = vunpack.c.h.b16 %v15
  %v89 = vunpack.c.l.b16 %v16
  %v90 = vunpack.c.h.b16 %v16
  %v91 = vunpack.c.l.b16 %v17
  %v92 = vunpack.c.h.b16 %v17
  %v93 = vunpack.c.l.b16 %v18
  %v94 = vunpack.c.h.b16 %v18
  %v95 = vunpack.c.l.b16 %v19
  %v96 = vunpack.c.h.b16 %v19
  %v97 = vunpack.c.l.b16 %v20
  %v98 = vunpack.c.h.b16 %v20
  %v99 = vunpack.c.l.b16 %v21
  %v100 = vunpack.c.h.b16 %v21
  %v101 = vunpack.c.l.b16 %v22
  %v102 = vunpack.c.h.b16 %v22
  %v103 = vunpack.c.l.b16 %v23
  %v104 = vunpack.c.h.b16 %v23
  %v105 = vunpack.c.l.b16 %v24
  %v106 = vunpack.c.h.b16 %v24
  %v107 = vunpack.c.l.b16 %v25
  %v108 = vunpack.c.h.b16 %v25
  %v109 = vunpack.c.l.b16 %v26
  %v110 = vunpack.c.h.b16 %v26
  %v111 = vunpack.c.l.b16 %v27
  %v112 = vunpack.c.h.b16 %v27
  %v113 = vunpack.c.l.b16 %v28
  %v114 = vunpack.c.h.b16 %v28
  %v115 = vunpack.c.l.b16 %v29
  %v116 = vunpack.c.h.b16 %v29
  %v117 = vunpack.c.l.b16 %v30
  %v118 = vunpack.c.h.b16 %v30
  %v119 = vunpack.c.l.b16 %v31
  %v120 = vunpack.c.h.b16 %v31
  %v121 = vunpack.c.l.b16 %v32
  %v122 = vunpack.c.h.b16 %v32
  %v123 = vunpack.c.l.b16 %v33
  %v124 = vunpack.c.h.b16 %v33
  %v125 = vunpack.c.l.b16 %v34
  %v126 = vunpack.c.h.b16 %v34
  %v127 = vunpack.c.l.b16 %v35
  %v128 = vunpack.c.h.b16 %v35
  %v129 = vunpack.c.l.b16 %v36
  %v130 = vunpack.c.h.b16 %v36
  %v131 = vpack.c.b16 %v83, %v81
  %v132 = vpack.c.b16 %v84, %v82
  %v133 = vpack.c.b16 %v87, %v85
  %v134 = vpack.c.b16 %v88, %v86
  %v135 = vpack.c.b16 %v91, %v89
  %v136 = vpack.c.b16 %v92, %v90
  %v137 = vpack.c.b16 %v95, %v93
  %v138 = vpack.c.b16 %v96, %v94
  %v139 = vpack.c.b16 %v99, %v97
  %v140 = vpack.c.b16 %v100, %v98
  %v141 = vpack.c.b16 %v103, %v101
  %v142 = vpack.c.b16 %v104, %v102
  %v143 = vpack.c.b16 %v107, %v105
  %v144 = vpack.c.b16 %v108, %v106
  %v145 = vpack.c.b16 %v111, %v109
  %v146 = vpack.c.b16 %v112, %v110
  %v147 = vpack.c.b16 %v115, %v113
  %v148 = vpack.c.b16 %v116, %v114
  %v149 = vpack.c.b16 %v119, %v117
  %v150 = vpack.c.b16 %v120, %v118
  %v151 = vpack.c.b16 %v123, %v121
  %v152 = vpack.c.b16 %v124, %v122
  %v153 = vpack.c.b16 %v127, %v125
  %v154 = vpack.c.b16 %v128, %v126
  %v155 = vpack.c.b16 %v129, %v129
  %v156 = vpack.c.b16 %v130, %v130
  %v189 = vunpack.c.l.b16 %v37
  %v190 = vunpack.c.l.b16 %v38
  %v191 = vunpack.c.l.b16 %v39
  %v192 = vunpack.c.l.b16 %v40
  %v193 = vunpack.c.l.b16 %v41
  %v194 = vunpack.c.l.b16 %v42
  %v195 = vunpack.c.l.b16 %v43
  %v196 = vunpack.c.l.b16 %v44
  %v197 = vunpack.c.l.b16 %v45
  %v198 = vunpack.c.l.b16 %v46
  %v199 = vunpack.c.l.b16 %v47
  %v200 = vunpack.c.l.b16 %v48
  %v201 = vunpack.c.l.b16 %v49
  %v202 = vunpack.c.l.b16 %v50
  %v203 = vunpack.c.l.b16 %v51
  %v204 = vunpack.c.l.b16 %v52
  %v205 = vunpack.c.l.b16 %v53
  %v206 = vunpack.c.l.b16 %v54
  %v207 = vunpack.c.l.b16 %v55
  %v208 = vpack.c.b16 %v190, %v189
  %v209 = vpack.c.b16 %v192, %v191
  %v210 = vpack.c.b16 %v194, %v193
  %v211 = vpack.c.b16 %v196, %v195
  %v212 = vpack.c.b16 %v198, %v197
  %v213 = vpack.c.b16 %v200, %v199
  %v214 = vpack.c.b16 %v202, %v201
  %v215 = vpack.c.b16 %v204, %v203
  %v216 = vpack.c.b16 %v206, %v205
  %v217 = vpack.c.b16 %v207, %v207
  %vm227 = vcmask 179200
  %v229 = vsel %vm227, %v132, 0
  %v232 = vsel %vm227, %v134, 0
  %v235 = vsel %vm227, %v136, 0
  %v238 = vsel %vm227, %v138, 0
  %v241 = vsel %vm227, %v140, 0
  %v244 = vsel %vm227, %v142, 0
  %v247 = vsel %vm227, %v144, 0
  %v250 = vsel %vm227, %v146, 0
  %v253 = vsel %vm227, %v148, 0
  %v256 = vsel %vm227, %v150, 0
  %v259 = vsel %vm227, %v152, 0
  %v262 = vsel %vm227, %v154, 0
  %v265 = vsel %vm227, %v156, 0
  %vm267 = vcmask 1042432
  %v269 = vsel %vm267, %v217, 0
  %271 = vmatprep.subr.bf16.mxu0 0
  %272 = vmatpush1.bf16.msra.mxu0 %v215
  %273 = vmatprep.subr.bf16.mxu0 0
  %274 = vmatpush1.bf16.msra.mxu0 %v214
  %275 = vmatprep.subr.bf16.mxu0 0
  %276 = vmatpush1.bf16.msra.mxu0 %v213
  %277 = vmatprep.subr.bf16.mxu0 0
  %278 = vmatpush1.bf16.msra.mxu0 %v212
  %279 = vmatprep.subr.bf16.mxu0 0
  %280 = vmatpush1.bf16.msra.mxu0 %v211
  %281 = vmatprep.subr.bf16.mxu0 0
  %282 = vmatpush1.bf16.msra.mxu0 %v210
  %283 = vmatprep.subr.bf16.mxu0 0
  %284 = vmatpush1.bf16.msra.mxu0 %v209
  %285 = vmatprep.subr.bf16.mxu0 0
  %286 = vmatpush1.bf16.msra.mxu0 %v208
  %287 = vmatprep.subr.bf16.mxu0 0
  %288 = vmatpush2.bf16.msra.mxu0 0
  %289 = vmatprep.subr.bf16.mxu0 0
  %290 = vmatpush2.bf16.msra.mxu0 0
  %291 = vmatprep.subr.bf16.mxu0 0
  %292 = vmatpush2.bf16.msra.mxu0 0
  %293 = vmatprep.subr.bf16.mxu0 0
  %294 = vmatpush2.bf16.msra.mxu0 0
  %295 = vmatprep.subr.bf16.mxu0 0
  %296 = vmatpush2.bf16.msra.mxu0 0
  %297 = vmatprep.subr.bf16.mxu0 0
  %298 = vmatpush2.bf16.msra.mxu0 0
  %299 = vmatprep.subr.bf16.mxu0 0
  %300 = vmatpush2.bf16.msra.mxu0 %v269
  %301 = vmatprep.subr.bf16.mxu0 0
  %302 = vmatpush2.bf16.msra.mxu0 %v216
  %303 = vmatprep.mubr.bf16.mxu0 %v229
  %304 = vmatmul.mubr.bf16.gmra.mxu0 %v131
  %v305 = vpop.f32.mrf.mxu0
  %v306 = vadd.f32 0.0, %v305
  %v307 = vpop.f32.mrf.mxu0
  %v308 = vpop.f32.mrf.mxu0
  %v309 = vadd.f32 0.0, %v308
  %v310 = vpop.f32.mrf.mxu0
  %311 = vmatprep.mubr.bf16.mxu0 %v232
  %312 = vmatmul.mubr.bf16.gmra.mxu0 %v133
  %v313 = vpop.f32.mrf.mxu0
  %v314 = vadd.f32 0.0, %v313
  %v315 = vpop.f32.mrf.mxu0
  %v316 = vpop.f32.mrf.mxu0
  %v317 = vadd.f32 0.0, %v316
  %v318 = vpop.f32.mrf.mxu0
  %319 = vmatprep.mubr.bf16.mxu0 %v235
  %320 = vmatmul.mubr.bf16.gmra.mxu0 %v135
  %v321 = vpop.f32.mrf.mxu0
  %v322 = vadd.f32 0.0, %v321
  %v323 = vpop.f32.mrf.mxu0
  %v324 = vpop.f32.mrf.mxu0
  %v325 = vadd.f32 0.0, %v324
  %v326 = vpop.f32.mrf.mxu0
  %327 = vmatprep.mubr.bf16.mxu0 %v238
  %328 = vmatmul.mubr.bf16.gmra.mxu0 %v137
  %v329 = vpop.f32.mrf.mxu0
  %v330 = vadd.f32 0.0, %v329
  %v331 = vpop.f32.mrf.mxu0
  %v332 = vpop.f32.mrf.mxu0
  %v333 = vadd.f32 0.0, %v332
  %v334 = vpop.f32.mrf.mxu0
  %335 = vmatprep.mubr.bf16.mxu0 %v241
  %336 = vmatmul.mubr.bf16.gmra.mxu0 %v139
  %v337 = vpop.f32.mrf.mxu0
  %v338 = vadd.f32 0.0, %v337
  %v339 = vpop.f32.mrf.mxu0
  %v340 = vpop.f32.mrf.mxu0
  %v341 = vadd.f32 0.0, %v340
  %v342 = vpop.f32.mrf.mxu0
  %343 = vmatprep.mubr.bf16.mxu0 %v244
  %344 = vmatmul.mubr.bf16.gmra.mxu0 %v141
  %v345 = vpop.f32.mrf.mxu0
  %v346 = vadd.f32 0.0, %v345
  %v347 = vpop.f32.mrf.mxu0
  %v348 = vpop.f32.mrf.mxu0
  %v349 = vadd.f32 0.0, %v348
  %v350 = vpop.f32.mrf.mxu0
  %351 = vmatprep.mubr.bf16.mxu0 %v247
  %352 = vmatmul.mubr.bf16.gmra.mxu0 %v143
  %v353 = vpop.f32.mrf.mxu0
  %v354 = vadd.f32 0.0, %v353
  %v355 = vpop.f32.mrf.mxu0
  %v356 = vpop.f32.mrf.mxu0
  %v357 = vadd.f32 0.0, %v356
  %v358 = vpop.f32.mrf.mxu0
  %359 = vmatprep.mubr.bf16.mxu0 %v250
  %360 = vmatmul.mubr.bf16.gmra.mxu0 %v145
  %v361 = vpop.f32.mrf.mxu0
  %v362 = vadd.f32 0.0, %v361
  %v363 = vpop.f32.mrf.mxu0
  %v364 = vpop.f32.mrf.mxu0
  %v365 = vadd.f32 0.0, %v364
  %v366 = vpop.f32.mrf.mxu0
  %367 = vmatprep.mubr.bf16.mxu0 %v253
  %368 = vmatmul.mubr.bf16.gmra.mxu0 %v147
  %v369 = vpop.f32.mrf.mxu0
  %v370 = vadd.f32 0.0, %v369
  %v371 = vpop.f32.mrf.mxu0
  %v372 = vpop.f32.mrf.mxu0
  %v373 = vadd.f32 0.0, %v372
  %v374 = vpop.f32.mrf.mxu0
  %375 = vmatprep.mubr.bf16.mxu0 %v256
  %376 = vmatmul.mubr.bf16.gmra.mxu0 %v149
  %v377 = vpop.f32.mrf.mxu0
  %v378 = vadd.f32 0.0, %v377
  %v379 = vpop.f32.mrf.mxu0
  %v380 = vpop.f32.mrf.mxu0
  %v381 = vadd.f32 0.0, %v380
  %v382 = vpop.f32.mrf.mxu0
  %383 = vmatprep.mubr.bf16.mxu0 %v259
  %384 = vmatmul.mubr.bf16.gmra.mxu0 %v151
  %v385 = vpop.f32.mrf.mxu0
  %v386 = vadd.f32 0.0, %v385
  %v387 = vpop.f32.mrf.mxu0
  %v388 = vpop.f32.mrf.mxu0
  %v389 = vadd.f32 0.0, %v388
  %v390 = vpop.f32.mrf.mxu0
  %391 = vmatprep.mubr.bf16.mxu0 %v262
  %392 = vmatmul.mubr.bf16.gmra.mxu0 %v153
  %v393 = vpop.f32.mrf.mxu0
  %v394 = vadd.f32 0.0, %v393
  %v395 = vpop.f32.mrf.mxu0
  %v396 = vpop.f32.mrf.mxu0
  %v397 = vadd.f32 0.0, %v396
  %v398 = vpop.f32.mrf.mxu0
  %399 = vmatprep.mubr.bf16.mxu0 %v265
  %400 = vmatmul.mubr.bf16.gmra.mxu0 %v155
  %v401 = vpop.f32.mrf.mxu0
  %v402 = vadd.f32 0.0, %v401
  %v403 = vpop.f32.mrf.mxu0
  %v404 = vpop.f32.mrf.mxu0
  %v405 = vpop.f32.mrf.mxu0
  %406 = vdwg.mxu0
  %v407 = vpack.c.bf16 %v309, %v306
  %v408 = vpack.c.bf16 %v317, %v314
  %v409 = vpack.c.bf16 %v325, %v322
  %v410 = vpack.c.bf16 %v333, %v330
  %v411 = vpack.c.bf16 %v341, %v338
  %v412 = vpack.c.bf16 %v349, %v346
  %v413 = vpack.c.bf16 %v357, %v354
  %v414 = vpack.c.bf16 %v365, %v362
  %v415 = vpack.c.bf16 %v373, %v370
  %v416 = vpack.c.bf16 %v381, %v378
  %v417 = vpack.c.bf16 %v389, %v386
  %v418 = vpack.c.bf16 %v397, %v394
  %v419 = vpack.c.bf16 %v402, %v402
  %v420 = vunpack.c.l.bf16 %v407
  %v421 = vunpack.c.h.bf16 %v407
  %v422 = vunpack.c.l.bf16 %v408
  %v423 = vunpack.c.h.bf16 %v408
  %v424 = vunpack.c.l.bf16 %v409
  %v425 = vunpack.c.h.bf16 %v409
  %v426 = vunpack.c.l.bf16 %v410
  %v427 = vunpack.c.h.bf16 %v410
  %v428 = vunpack.c.l.bf16 %v411
  %v429 = vunpack.c.h.bf16 %v411
  %v430 = vunpack.c.l.bf16 %v412
  %v431 = vunpack.c.h.bf16 %v412
  %v432 = vunpack.c.l.bf16 %v413
  %v433 = vunpack.c.h.bf16 %v413
  %v434 = vunpack.c.l.bf16 %v414
  %v435 = vunpack.c.h.bf16 %v414
  %v436 = vunpack.c.l.bf16 %v415
  %v437 = vunpack.c.h.bf16 %v415
  %v438 = vunpack.c.l.bf16 %v416
  %v439 = vunpack.c.h.bf16 %v416
  %v440 = vunpack.c.l.bf16 %v417
  %v441 = vunpack.c.h.bf16 %v417
  %v442 = vunpack.c.l.bf16 %v418
  %v443 = vunpack.c.h.bf16 %v418
  %v444 = vunpack.c.l.bf16 %v419
  %vm445 = vcmask 130048
  %v446 = vsel %vm445, %v420, 0.0
  %v447 = vsel %vm445, %v421, 0.0
  %v448 = vadd.f32 %v446, %v447
  %v449 = vsel %vm445, %v422, 0.0
  %v450 = vadd.f32 %v448, %v449
  %v451 = vsel %vm445, %v423, 0.0
  %v452 = vadd.f32 %v450, %v451
  %v453 = vsel %vm445, %v424, 0.0
  %v454 = vadd.f32 %v452, %v453
  %v455 = vsel %vm445, %v425, 0.0
  %v456 = vadd.f32 %v454, %v455
  %v457 = vsel %vm445, %v426, 0.0
  %v458 = vadd.f32 %v456, %v457
  %v459 = vsel %vm445, %v427, 0.0
  %v460 = vadd.f32 %v458, %v459
  %v461 = vsel %vm445, %v428, 0.0
  %v462 = vadd.f32 %v460, %v461
  %v463 = vsel %vm445, %v429, 0.0
  %v464 = vadd.f32 %v462, %v463
  %v465 = vsel %vm445, %v430, 0.0
  %v466 = vadd.f32 %v464, %v465
  %v467 = vsel %vm445, %v431, 0.0
  %v468 = vadd.f32 %v466, %v467
  %v469 = vsel %vm445, %v432, 0.0
  %v470 = vadd.f32 %v468, %v469
  %v471 = vsel %vm445, %v433, 0.0
  %v472 = vadd.f32 %v470, %v471
  %v473 = vsel %vm445, %v434, 0.0
  %v474 = vadd.f32 %v472, %v473
  %v475 = vsel %vm445, %v435, 0.0
  %v476 = vadd.f32 %v474, %v475
  %v477 = vsel %vm445, %v436, 0.0
  %v478 = vadd.f32 %v476, %v477
  %v479 = vsel %vm445, %v437, 0.0
  %v480 = vadd.f32 %v478, %v479
  %v481 = vsel %vm445, %v438, 0.0
  %v482 = vadd.f32 %v480, %v481
  %v483 = vsel %vm445, %v439, 0.0
  %v484 = vadd.f32 %v482, %v483
  %v485 = vsel %vm445, %v440, 0.0
  %v486 = vadd.f32 %v484, %v485
  %v487 = vsel %vm445, %v441, 0.0
  %v488 = vadd.f32 %v486, %v487
  %v489 = vsel %vm445, %v442, 0.0
  %v490 = vadd.f32 %v488, %v489
  %v491 = vsel %vm445, %v443, 0.0
  %v492 = vadd.f32 %v490, %v491
  %v493 = vsel %vm445, %v444, 0.0
  %v494 = vadd.f32 %v492, %v493
  %v495 = vrot.slane %v494, 4
  %v496 = vadd.f32 %v494, %v495
  %v497 = vrot.slane %v496, 2
  %v498 = vadd.f32 %v496, %v497
  %v499 = vrot.slane %v498, 1
  %v500 = vadd.f32 %v498, %v499
  %v501 = vmul.f32 %v420, %v420
  %v502 = vmul.f32 %v421, %v421
  %v503 = vmul.f32 %v422, %v422
  %v504 = vmul.f32 %v423, %v423
  %v505 = vmul.f32 %v424, %v424
  %v506 = vmul.f32 %v425, %v425
  %v507 = vmul.f32 %v426, %v426
  %v508 = vmul.f32 %v427, %v427
  %v509 = vmul.f32 %v428, %v428
  %v510 = vmul.f32 %v429, %v429
  %v511 = vmul.f32 %v430, %v430
  %v512 = vmul.f32 %v431, %v431
  %v513 = vmul.f32 %v432, %v432
  %v514 = vmul.f32 %v433, %v433
  %v515 = vmul.f32 %v434, %v434
  %v516 = vmul.f32 %v435, %v435
  %v517 = vmul.f32 %v436, %v436
  %v518 = vmul.f32 %v437, %v437
  %v519 = vmul.f32 %v438, %v438
  %v520 = vmul.f32 %v439, %v439
  %v521 = vmul.f32 %v440, %v440
  %v522 = vmul.f32 %v441, %v441
  %v523 = vmul.f32 %v442, %v442
  %v524 = vmul.f32 %v443, %v443
  %v525 = vmul.f32 %v444, %v444
  %v526 = vsel %vm445, %v501, 0.0
  %v527 = vsel %vm445, %v502, 0.0
  %v528 = vadd.f32 %v526, %v527
  %v529 = vsel %vm445, %v503, 0.0
  %v530 = vadd.f32 %v528, %v529
  %v531 = vsel %vm445, %v504, 0.0
  %v532 = vadd.f32 %v530, %v531
  %v533 = vsel %vm445, %v505, 0.0
  %v534 = vadd.f32 %v532, %v533
  %v535 = vsel %vm445, %v506, 0.0
  %v536 = vadd.f32 %v534, %v535
  %v537 = vsel %vm445, %v507, 0.0
  %v538 = vadd.f32 %v536, %v537
  %v539 = vsel %vm445, %v508, 0.0
  %v540 = vadd.f32 %v538, %v539
  %v541 = vsel %vm445, %v509, 0.0
  %v542 = vadd.f32 %v540, %v541
  %v543 = vsel %vm445, %v510, 0.0
  %v544 = vadd.f32 %v542, %v543
  %v545 = vsel %vm445, %v511, 0.0
  %v546 = vadd.f32 %v544, %v545
  %v547 = vsel %vm445, %v512, 0.0
  %v548 = vadd.f32 %v546, %v547
  %v549 = vsel %vm445, %v513, 0.0
  %v550 = vadd.f32 %v548, %v549
  %v551 = vsel %vm445, %v514, 0.0
  %v552 = vadd.f32 %v550, %v551
  %v553 = vsel %vm445, %v515, 0.0
  %v554 = vadd.f32 %v552, %v553
  %v555 = vsel %vm445, %v516, 0.0
  %v556 = vadd.f32 %v554, %v555
  %v557 = vsel %vm445, %v517, 0.0
  %v558 = vadd.f32 %v556, %v557
  %v559 = vsel %vm445, %v518, 0.0
  %v560 = vadd.f32 %v558, %v559
  %v561 = vsel %vm445, %v519, 0.0
  %v562 = vadd.f32 %v560, %v561
  %v563 = vsel %vm445, %v520, 0.0
  %v564 = vadd.f32 %v562, %v563
  %v565 = vsel %vm445, %v521, 0.0
  %v566 = vadd.f32 %v564, %v565
  %v567 = vsel %vm445, %v522, 0.0
  %v568 = vadd.f32 %v566, %v567
  %v569 = vsel %vm445, %v523, 0.0
  %v570 = vadd.f32 %v568, %v569
  %v571 = vsel %vm445, %v524, 0.0
  %v572 = vadd.f32 %v570, %v571
  %v573 = vsel %vm445, %v525, 0.0
  %v574 = vadd.f32 %v572, %v573
  %v575 = vrot.slane %v574, 4
  %v576 = vadd.f32 %v574, %v575
  %v577 = vrot.slane %v576, 2
  %v578 = vadd.f32 %v576, %v577
  %v579 = vrot.slane %v578, 1
  %v580 = vadd.f32 %v578, %v579
  %v581 = vmul.f32 %v500, 0.005
  %v582 = vmul.f32 %v580, 0.005
  %v583 = vmul.f32 %v581, %v581
  %v584 = vsub.f32 %v582, %v583
  %v585 = vsub.f32 %v420, %v581
  %v586 = vsub.f32 %v421, %v581
  %v587 = vsub.f32 %v422, %v581
  %v588 = vsub.f32 %v423, %v581
  %v589 = vsub.f32 %v424, %v581
  %v590 = vsub.f32 %v425, %v581
  %v591 = vsub.f32 %v426, %v581
  %v592 = vsub.f32 %v427, %v581
  %v593 = vsub.f32 %v428, %v581
  %v594 = vsub.f32 %v429, %v581
  %v595 = vsub.f32 %v430, %v581
  %v596 = vsub.f32 %v431, %v581
  %v597 = vsub.f32 %v432, %v581
  %v598 = vsub.f32 %v433, %v581
  %v599 = vsub.f32 %v434, %v581
  %v600 = vsub.f32 %v435, %v581
  %v601 = vsub.f32 %v436, %v581
  %v602 = vsub.f32 %v437, %v581
  %v603 = vsub.f32 %v438, %v581
  %v604 = vsub.f32 %v439, %v581
  %v605 = vsub.f32 %v440, %v581
  %v606 = vsub.f32 %v441, %v581
  %v607 = vsub.f32 %v442, %v581
  %v608 = vsub.f32 %v443, %v581
  %v609 = vsub.f32 %v444, %v581
  %v610 = vadd.f32 %v584, 1e-05
  %v611 = vrsqrt.pop %v610
  %v612 = vmul.f32 %v585, %v611
  %v613 = vmul.f32 %v586, %v611
  %v614 = vmul.f32 %v587, %v611
  %v615 = vmul.f32 %v588, %v611
  %v616 = vmul.f32 %v589, %v611
  %v617 = vmul.f32 %v590, %v611
  %v618 = vmul.f32 %v591, %v611
  %v619 = vmul.f32 %v592, %v611
  %v620 = vmul.f32 %v593, %v611
  %v621 = vmul.f32 %v594, %v611
  %v622 = vmul.f32 %v595, %v611
  %v623 = vmul.f32 %v596, %v611
  %v624 = vmul.f32 %v597, %v611
  %v625 = vmul.f32 %v598, %v611
  %v626 = vmul.f32 %v599, %v611
  %v627 = vmul.f32 %v600, %v611
  %v628 = vmul.f32 %v601, %v611
  %v629 = vmul.f32 %v602, %v611
  %v630 = vmul.f32 %v603, %v611
  %v631 = vmul.f32 %v604, %v611
  %v632 = vmul.f32 %v605, %v611
  %v633 = vmul.f32 %v606, %v611
  %v634 = vmul.f32 %v607, %v611
  %v635 = vmul.f32 %v608, %v611
  %v636 = vmul.f32 %v609, %v611
  %v637 = vpack.c.bf16 %v613, %v612
  %v638 = vpack.c.bf16 %v615, %v614
  %v639 = vpack.c.bf16 %v617, %v616
  %v640 = vpack.c.bf16 %v619, %v618
  %v641 = vpack.c.bf16 %v621, %v620
  %v642 = vpack.c.bf16 %v623, %v622
  %v643 = vpack.c.bf16 %v625, %v624
  %v644 = vpack.c.bf16 %v627, %v626
  %v645 = vpack.c.bf16 %v629, %v628
  %v646 = vpack.c.bf16 %v631, %v630
  %v647 = vpack.c.bf16 %v633, %v632
  %v648 = vpack.c.bf16 %v635, %v634
  %v649 = vpack.c.bf16 %v636, %v636
  %v650 = vmax.bf16 %v637, 0
  %v651 = vmax.bf16 %v638, 0
  %v652 = vmax.bf16 %v639, 0
  %v653 = vmax.bf16 %v640, 0
  %v654 = vmax.bf16 %v641, 0
  %v655 = vmax.bf16 %v642, 0
  %v656 = vmax.bf16 %v643, 0
  %v657 = vmax.bf16 %v644, 0
  %v658 = vmax.bf16 %v645, 0
  %v659 = vmax.bf16 %v646, 0
  %v660 = vmax.bf16 %v647, 0
  %v661 = vmax.bf16 %v648, 0
  %v662 = vmax.bf16 %v649, 0
  %v676 = vunpack.c.l.b16 %v650
  %v677 = vunpack.c.h.b16 %v650
  %v678 = vunpack.c.l.b16 %v651
  %v679 = vunpack.c.h.b16 %v651
  %v680 = vunpack.c.l.b16 %v652
  %v681 = vunpack.c.h.b16 %v652
  %v682 = vunpack.c.l.b16 %v653
  %v683 = vunpack.c.h.b16 %v653
  %v684 = vunpack.c.l.b16 %v654
  %v685 = vunpack.c.h.b16 %v654
  %v686 = vunpack.c.l.b16 %v655
  %v687 = vunpack.c.h.b16 %v655
  %v688 = vunpack.c.l.b16 %v656
  %v689 = vunpack.c.h.b16 %v656
  %v690 = vunpack.c.l.b16 %v657
  %v691 = vunpack.c.h.b16 %v657
  %v692 = vunpack.c.l.b16 %v658
  %v693 = vunpack.c.h.b16 %v658
  %v694 = vunpack.c.l.b16 %v659
  %v695 = vunpack.c.h.b16 %v659
  %v696 = vunpack.c.l.b16 %v660
  %v697 = vunpack.c.h.b16 %v660
  %v698 = vunpack.c.l.b16 %v661
  %v699 = vunpack.c.h.b16 %v661
  %v700 = vunpack.c.l.b16 %v662
  %v701 = vpack.c.b16 %v676, %v676
  %v702 = vpack.c.b16 %v677, %v677
  %v703 = vpack.c.b16 %v678, %v678
  %v704 = vpack.c.b16 %v679, %v679
  %v705 = vpack.c.b16 %v680, %v680
  %v706 = vpack.c.b16 %v681, %v681
  %v707 = vpack.c.b16 %v682, %v682
  %v708 = vpack.c.b16 %v683, %v683
  %v709 = vpack.c.b16 %v684, %v684
  %v710 = vpack.c.b16 %v685, %v685
  %v711 = vpack.c.b16 %v686, %v686
  %v712 = vpack.c.b16 %v687, %v687
  %v713 = vpack.c.b16 %v688, %v688
  %v714 = vpack.c.b16 %v689, %v689
  %v715 = vpack.c.b16 %v690, %v690
  %v716 = vpack.c.b16 %v691, %v691
  %v717 = vpack.c.b16 %v692, %v692
  %v718 = vpack.c.b16 %v693, %v693
  %v719 = vpack.c.b16 %v694, %v694
  %v720 = vpack.c.b16 %v695, %v695
  %v721 = vpack.c.b16 %v696, %v696
  %v722 = vpack.c.b16 %v697, %v697
  %v723 = vpack.c.b16 %v698, %v698
  %v724 = vpack.c.b16 %v699, %v699
  %v725 = vpack.c.b16 %v700, %v700
  %vm751 = vcmask 125952
  %752 = vst.msk [vmem:[%s2] sm:$0xf] %vm751, %v701
  %753 = vst.msk [vmem:[%s2 + $0x4] sm:$0xf] %vm751, %v702
  %754 = vst.msk [vmem:[%s2 + $0x8] sm:$0xf] %vm751, %v703
  %755 = vst.msk [vmem:[%s2 + $0xc] sm:$0xf] %vm751, %v704
  %756 = vst.msk [vmem:[%s2 + $0x10] sm:$0xf] %vm751, %v705
  %757 = vst.msk [vmem:[%s2 + $0x14] sm:$0xf] %vm751, %v706
  %758 = vst.msk [vmem:[%s2 + $0x18] sm:$0xf] %vm751, %v707
  %759 = vst.msk [vmem:[%s2 + $0x1c] sm:$0xf] %vm751, %v708
  %760 = vst.msk [vmem:[%s2 + $0x20] sm:$0xf] %vm751, %v709
  %761 = vst.msk [vmem:[%s2 + $0x24] sm:$0xf] %vm751, %v710
  %762 = vst.msk [vmem:[%s2 + $0x28] sm:$0xf] %vm751, %v711
  %763 = vst.msk [vmem:[%s2 + $0x2c] sm:$0xf] %vm751, %v712
  %764 = vst.msk [vmem:[%s2 + $0x30] sm:$0xf] %vm751, %v713
  %765 = vst.msk [vmem:[%s2 + $0x34] sm:$0xf] %vm751, %v714
  %766 = vst.msk [vmem:[%s2 + $0x38] sm:$0xf] %vm751, %v715
  %767 = vst.msk [vmem:[%s2 + $0x3c] sm:$0xf] %vm751, %v716
  %768 = vst.msk [vmem:[%s2 + $0x40] sm:$0xf] %vm751, %v717
  %769 = vst.msk [vmem:[%s2 + $0x44] sm:$0xf] %vm751, %v718
  %770 = vst.msk [vmem:[%s2 + $0x48] sm:$0xf] %vm751, %v719
  %771 = vst.msk [vmem:[%s2 + $0x4c] sm:$0xf] %vm751, %v720
  %772 = vst.msk [vmem:[%s2 + $0x50] sm:$0xf] %vm751, %v721
  %773 = vst.msk [vmem:[%s2 + $0x54] sm:$0xf] %vm751, %v722
  %774 = vst.msk [vmem:[%s2 + $0x58] sm:$0xf] %vm751, %v723
  %775 = vst.msk [vmem:[%s2 + $0x5c] sm:$0xf] %vm751, %v724
  %776 = vst.msk [vmem:[%s2 + $0x60] sm:$0xf] %vm751, %v725
  // Predicated region
  $region10: #{qlenet_forward.4} parent=0 // pred_check
    _
  $region11: #{qlenet_forward.4} parent=0 // pred_check_branch
    %778 = sbr.rel (0) target = $region13
  $region12: #{qlenet_forward.4} parent=0 // pred_region
    _
  $region13: #{qlenet_forward.4} parent=0 // pred_fallthru
    _
  // Predicated region
  $region14: #{qlenet_forward.4} parent=0 // pred_check
    _
  $region15: #{qlenet_forward.4} parent=0 // pred_check_branch
    %780 = sbr.rel (0) target = $region17
  $region16: #{qlenet_forward.4} parent=0 // pred_region
    _
  $region17: #{qlenet_forward.4} parent=0 // pred_fallthru
    _

// kernel: qlenet_forward.5
$region0: #{qlenet_forward.5}
  #allocation0 [shape = 'u32[]', space=smem, size = 0x4, offset = 0x4, fixed_abs, tag = 'smem constant byte address 0x4 - core index']
  #allocation1 [shape = 'u32[144,128]{1,0:T(1,128)}', space=vmem, size = 0x12000, scoped, tag = 'internal scratch']
  %s0 = inlined_call_operand.vmem [shape: bf16[2,400], index: 0, kind: input, shape index: {}]
  %s1 = inlined_call_operand.vmem [shape: bf16[400,120], index: 1, kind: input, shape index: {}]
  %s2 = inlined_call_operand.vmem [shape: bf16[1,120], index: 2, kind: input, shape index: {}]
  %s3 = inlined_call_operand.vmem [shape: bf16[120,84], index: 3, kind: input, shape index: {}]
  %s4 = inlined_call_operand.vmem [shape: bf16[1,84], index: 4, kind: input, shape index: {}]
  %s5 = inlined_call_operand.vmem [shape: bf16[84,10], index: 5, kind: input, shape index: {}]
  %s6 = inlined_call_operand.vmem [shape: bf16[1,10], index: 6, kind: input, shape index: {}]
  %s7 = inlined_call_operand.hbm [shape: f32[2,10], index: 7, kind: output, shape index: {}]
  %s8 = sld [smem:[#allocation0]]
  $region38: #{qlenet_forward.5} parent=0
    _
  %s10 = ssub.s32 1, %s8
  %s11 = scalar_select 0, %s10, %s8
  $region1: #{qlenet_forward.5} parent=0
    #allocation2 [shape = 'u8[1024]{0}', space=vmem, size = 0x400, scoped, tag = 'output window, operand 0, single buffered']
    #allocation3 [shape = 's32[1]{0}', space=sflag, size = 0x4, scoped, tag = 'scoped memory for qlenet_forward.5']
    %12 = vsyncpa [#allocation3], 0
    // Predicated region
    $region2: #{qlenet_forward.5} parent=1 // pred_check
      _
    $region3: #{qlenet_forward.5} parent=1 // pred_check_branch
      %14 = sbr.rel (0) target = $region5
    $region4: #{qlenet_forward.5} parent=1 // pred_region
      _
    $region5: #{qlenet_forward.5} parent=1 // pred_fallthru
      _
    // Predicated region
    $region6: #{qlenet_forward.5} parent=1 // pred_check
      _
    $region7: #{qlenet_forward.5} parent=1 // pred_check_branch
      %16 = sbr.rel (0) target = $region9
    $region8: #{qlenet_forward.5} parent=1 // pred_region
      _
    $region9: #{qlenet_forward.5} parent=1 // pred_fallthru
      _
    // Predicated region
    $region10: #{qlenet_forward.5} parent=1 // pred_check
      _
    $region11: #{qlenet_forward.5} parent=1 // pred_check_branch
      %18 = sbr.rel (0) target = $region13
    $region12: #{qlenet_forward.5} parent=1 // pred_region
      _
    $region13: #{qlenet_forward.5} parent=1 // pred_fallthru
      _
    // Predicated region
    $region14: #{qlenet_forward.5} parent=1 // pred_check
      _
    $region15: #{qlenet_forward.5} parent=1 // pred_check_branch
      %20 = sbr.rel (0) target = $region17
    $region16: #{qlenet_forward.5} parent=1 // pred_region
      _
    $region17: #{qlenet_forward.5} parent=1 // pred_fallthru
      _
    // Predicated region
    $region18: #{qlenet_forward.5} parent=1 // pred_check
      _
    $region19: #{qlenet_forward.5} parent=1 // pred_check_branch
      %22 = sbr.rel (0) target = $region21
    $region20: #{qlenet_forward.5} parent=1 // pred_region
      _
    $region21: #{qlenet_forward.5} parent=1 // pred_fallthru
      _
    // Predicated region
    $region22: #{qlenet_forward.5} parent=1 // pred_check
      _
    $region23: #{qlenet_forward.5} parent=1 // pred_check_branch
      %24 = sbr.rel (0) target = $region25
    $region24: #{qlenet_forward.5} parent=1 // pred_region
      _
    $region25: #{qlenet_forward.5} parent=1 // pred_fallthru
      _
    // Predicated region
    $region26: #{qlenet_forward.5} parent=1 // pred_check
      _
    $region27: #{qlenet_forward.5} parent=1 // pred_check_branch
      %26 = sbr.rel (0) target = $region29
    $region28: #{qlenet_forward.5} parent=1 // pred_region
      _
    $region29: #{qlenet_forward.5} parent=1 // pred_fallthru
      _
    %v28 = vld [vmem:[%s0] sm:$0xf]
    %v29 = vld [vmem:[%s1] sm:$0xf]
    %v30 = vld [vmem:[%s1 + $0x4] sm:$0xf]
    %v31 = vld [vmem:[%s1 + $0x8] sm:$0xf]
    %v32 = vld [vmem:[%s1 + $0xc] sm:$0xf]
    %v33 = vld [vmem:[%s1 + $0x10] sm:$0xf]
    %v34 = vld [vmem:[%s1 + $0x14] sm:$0xf]
    %v35 = vld [vmem:[%s1 + $0x18] sm:$0xf]
    %v36 = vld [vmem:[%s1 + $0x1c] sm:$0xf]
    %v37 = vld [vmem:[%s1 + $0x20] sm:$0xf]
    %v38 = vld [vmem:[%s1 + $0x24] sm:$0xf]
    %v39 = vld [vmem:[%s1 + $0x28] sm:$0xf]
    %v40 = vld [vmem:[%s1 + $0x2c] sm:$0xf]
    %v41 = vld [vmem:[%s1 + $0x30] sm:$0xf]
    %v42 = vld [vmem:[%s1 + $0x34] sm:$0xf]
    %v43 = vld [vmem:[%s1 + $0x38] sm:$0xf]
    %v44 = vld [vmem:[%s1 + $0x3c] sm:$0xf]
    %v45 = vld [vmem:[%s1 + $0x40] sm:$0xf]
    %v46 = vld [vmem:[%s1 + $0x44] sm:$0xf]
    %v47 = vld [vmem:[%s1 + $0x48] sm:$0xf]
    %v48 = vld [vmem:[%s1 + $0x4c] sm:$0xf]
    %v49 = vld [vmem:[%s1 + $0x50] sm:$0xf]
    %v50 = vld [vmem:[%s1 + $0x54] sm:$0xf]
    %v51 = vld [vmem:[%s1 + $0x58] sm:$0xf]
    %v52 = vld [vmem:[%s1 + $0x5c] sm:$0xf]
    %v53 = vld [vmem:[%s1 + $0x60] sm:$0xf]
    %v54 = vld [vmem:[%s1 + $0x64] sm:$0xf]
    %v55 = vld [vmem:[%s1 + $0x68] sm:$0xf]
    %v56 = vld [vmem:[%s1 + $0x6c] sm:$0xf]
    %v57 = vld [vmem:[%s1 + $0x70] sm:$0xf]
    %v58 = vld [vmem:[%s1 + $0x74] sm:$0xf]
    %v59 = vld [vmem:[%s1 + $0x78] sm:$0xf]
    %v60 = vld [vmem:[%s1 + $0x7c] sm:$0xf]
    %v61 = vld [vmem:[%s1 + $0x80] sm:$0xf]
    %v62 = vld [vmem:[%s1 + $0x84] sm:$0xf]
    %v63 = vld [vmem:[%s1 + $0x88] sm:$0xf]
    %v64 = vld [vmem:[%s1 + $0x8c] sm:$0xf]
    %v65 = vld [vmem:[%s1 + $0x90] sm:$0xf]
    %v66 = vld [vmem:[%s1 + $0x94] sm:$0xf]
    %v67 = vld [vmem:[%s1 + $0x98] sm:$0xf]
    %v68 = vld [vmem:[%s1 + $0x9c] sm:$0xf]
    %v69 = vld [vmem:[%s1 + $0xa0] sm:$0xf]
    %v70 = vld [vmem:[%s1 + $0xa4] sm:$0xf]
    %v71 = vld [vmem:[%s1 + $0xa8] sm:$0xf]
    %v72 = vld [vmem:[%s1 + $0xac] sm:$0xf]
    %v73 = vld [vmem:[%s1 + $0xb0] sm:$0xf]
    %v74 = vld [vmem:[%s1 + $0xb4] sm:$0xf]
    %v75 = vld [vmem:[%s1 + $0xb8] sm:$0xf]
    %v76 = vld [vmem:[%s1 + $0xbc] sm:$0xf]
    %v77 = vld [vmem:[%s1 + $0xc0] sm:$0xf]
    %v78 = vld [vmem:[%s1 + $0xc4] sm:$0xf]
    %v79 = vld [vmem:[%s2] sm:$0x1]
    %v80 = vunpack.c.l.bf16 %v79
    %v81 = vlaneseq
    %v82 = vshrl.u32 %v81, 7
    %v83 = vsub.s32 0, %v82
    %v84 = vrot.slane %v80, %v83
    %v87 = vunpack.c.l.s4 1966171168
    %v88 = vunpack.c.0.s8 %v87
    %v89 = vlaneseq
    %v90 = vshrl.u32 %v89, 7
    %v91 = vsub.s32 %v88, %v90
    %v92 = vrot.slane %v28, %v91
    %v93 = vcombine.high %v92, %v92
    %v95 = vunpack.c.l.s4 1966171168
    %v96 = vunpack.c.0.s8 %v95
    %v97 = vlaneseq
    %v98 = vshrl.u32 %v97, 7
    %v99 = vsub.s32 %v96, %v98
    %v100 = vrot.slane %v92, %v99
    %v102 = vunpack.c.l.s4 1966171168
    %v103 = vunpack.c.0.s8 %v102
    %v104 = vlaneseq
    %v105 = vshrl.u32 %v104, 7
    %v106 = vsub.s32 %v103, %v105
    %v107 = vrot.slane %v93, %v106
    %v108 = vcombine.high %v100, %v100
    %v109 = vcombine.high %v107, %v107
    %v163 = vunpack.c.l.b16 %v29
    %v164 = vunpack.c.l.b16 %v30
    %v165 = vunpack.c.l.b16 %v31
    %v166 = vunpack.c.l.b16 %v32
    %v167 = vunpack.c.l.b16 %v33
    %v168 = vunpack.c.l.b16 %v34
    %v169 = vunpack.c.l.b16 %v35
    %v170 = vunpack.c.l.b16 %v36
    %v171 = vunpack.c.l.b16 %v37
    %v172 = vunpack.c.l.b16 %v38
    %v173 = vunpack.c.l.b16 %v39
    %v174 = vunpack.c.l.b16 %v40
    %v175 = vunpack.c.l.b16 %v41
    %v176 = vunpack.c.l.b16 %v42
    %v177 = vunpack.c.l.b16 %v43
    %v178 = vunpack.c.l.b16 %v44
    %v179 = vunpack.c.l.b16 %v45
    %v180 = vunpack.c.l.b16 %v46
    %v181 = vunpack.c.l.b16 %v47
    %v182 = vunpack.c.l.b16 %v48
    %v183 = vunpack.c.l.b16 %v49
    %v184 = vunpack.c.l.b16 %v50
    %v185 = vunpack.c.l.b16 %v51
    %v186 = vunpack.c.l.b16 %v52
    %v187 = vunpack.c.l.b16 %v53
    %v188 = vunpack.c.l.b16 %v54
    %v189 = vunpack.c.l.b16 %v55
    %v190 = vunpack.c.l.b16 %v56
    %v191 = vunpack.c.l.b16 %v57
    %v192 = vunpack.c.l.b16 %v58
    %v193 = vunpack.c.l.b16 %v59
    %v194 = vunpack.c.l.b16 %v60
    %v195 = vunpack.c.l.b16 %v61
    %v196 = vunpack.c.l.b16 %v62
    %v197 = vunpack.c.l.b16 %v63
    %v198 = vunpack.c.l.b16 %v64
    %v199 = vunpack.c.l.b16 %v65
    %v200 = vunpack.c.l.b16 %v66
    %v201 = vunpack.c.l.b16 %v67
    %v202 = vunpack.c.l.b16 %v68
    %v203 = vunpack.c.l.b16 %v69
    %v204 = vunpack.c.l.b16 %v70
    %v205 = vunpack.c.l.b16 %v71
    %v206 = vunpack.c.l.b16 %v72
    %v207 = vunpack.c.l.b16 %v73
    %v208 = vunpack.c.l.b16 %v74
    %v209 = vunpack.c.l.b16 %v75
    %v210 = vunpack.c.l.b16 %v76
    %v211 = vunpack.c.l.b16 %v77
    %v212 = vunpack.c.l.b16 %v78
    %v213 = vpack.c.b16 %v164, %v163
    %v214 = vpack.c.b16 %v166, %v165
    %v215 = vpack.c.b16 %v168, %v167
    %v216 = vpack.c.b16 %v170, %v169
    %v217 = vpack.c.b16 %v172, %v171
    %v218 = vpack.c.b16 %v174, %v173
    %v219 = vpack.c.b16 %v176, %v175
    %v220 = vpack.c.b16 %v178, %v177
    %v221 = vpack.c.b16 %v180, %v179
    %v222 = vpack.c.b16 %v182, %v181
    %v223 = vpack.c.b16 %v184, %v183
    %v224 = vpack.c.b16 %v186, %v185
    %v225 = vpack.c.b16 %v188, %v187
    %v226 = vpack.c.b16 %v190, %v189
    %v227 = vpack.c.b16 %v192, %v191
    %v228 = vpack.c.b16 %v194, %v193
    %v229 = vpack.c.b16 %v196, %v195
    %v230 = vpack.c.b16 %v198, %v197
    %v231 = vpack.c.b16 %v200, %v199
    %v232 = vpack.c.b16 %v202, %v201
    %v233 = vpack.c.b16 %v204, %v203
    %v234 = vpack.c.b16 %v206, %v205
    %v235 = vpack.c.b16 %v208, %v207
    %v236 = vpack.c.b16 %v210, %v209
    %v237 = vpack.c.b16 %v212, %v211
    %vm263 = vcmask 130048
    %v265 = vsel %vm263, %v109, 0
    %267 = vmatprep.subr.bf16.mxu0 0
    %268 = vmatpush1.bf16.msra.mxu0 %v220
    %269 = vmatprep.subr.bf16.mxu0 0
    %270 = vmatpush1.bf16.msra.mxu0 %v219
    %271 = vmatprep.subr.bf16.mxu0 0
    %272 = vmatpush1.bf16.msra.mxu0 %v218
    %273 = vmatprep.subr.bf16.mxu0 0
    %274 = vmatpush1.bf16.msra.mxu0 %v217
    %275 = vmatprep.subr.bf16.mxu0 0
    %276 = vmatpush1.bf16.msra.mxu0 %v216
    %277 = vmatprep.subr.bf16.mxu0 0
    %278 = vmatpush1.bf16.msra.mxu0 %v215
    %279 = vmatprep.subr.bf16.mxu0 0
    %280 = vmatpush1.bf16.msra.mxu0 %v214
    %281 = vmatprep.subr.bf16.mxu0 0
    %282 = vmatpush1.bf16.msra.mxu0 %v213
    %283 = vmatprep.subr.bf16.mxu0 0
    %284 = vmatpush2.bf16.msra.mxu0 %v228
    %285 = vmatprep.subr.bf16.mxu0 0
    %286 = vmatpush2.bf16.msra.mxu0 %v227
    %287 = vmatprep.subr.bf16.mxu0 0
    %288 = vmatpush2.bf16.msra.mxu0 %v226
    %289 = vmatprep.subr.bf16.mxu0 0
    %290 = vmatpush2.bf16.msra.mxu0 %v225
    %291 = vmatprep.subr.bf16.mxu0 0
    %292 = vmatpush2.bf16.msra.mxu0 %v224
    %293 = vmatprep.subr.bf16.mxu0 0
    %294 = vmatpush2.bf16.msra.mxu0 %v223
    %295 = vmatprep.subr.bf16.mxu0 0
    %296 = vmatpush2.bf16.msra.mxu0 %v222
    %297 = vmatprep.subr.bf16.mxu0 0
    %298 = vmatpush2.bf16.msra.mxu0 %v221
    %299 = vmatprep.mubr.bf16.mxu0 %v107
    %300 = vmatmul.mubr.bf16.gmra.mxu0 %v100
    %v301 = vpop.f32.mrf.mxu0
    %v302 = vadd.f32 %v84, %v301
    %v303 = vpop.f32.mrf.mxu0
    %v304 = vpop.f32.mrf.mxu0
    %v305 = vpop.f32.mrf.mxu0
    %306 = vdwg.mxu0
    %307 = vmatprep.subr.bf16.mxu0 0
    %308 = vmatpush1.bf16.msra.mxu0 %v236
    %309 = vmatprep.subr.bf16.mxu0 0
    %310 = vmatpush1.bf16.msra.mxu0 %v235
    %311 = vmatprep.subr.bf16.mxu0 0
    %312 = vmatpush1.bf16.msra.mxu0 %v234
    %313 = vmatprep.subr.bf16.mxu0 0
    %314 = vmatpush1.bf16.msra.mxu0 %v233
    %315 = vmatprep.subr.bf16.mxu0 0
    %316 = vmatpush1.bf16.msra.mxu0 %v232
    %317 = vmatprep.subr.bf16.mxu0 0
    %318 = vmatpush1.bf16.msra.mxu0 %v231
    %319 = vmatprep.subr.bf16.mxu0 0
    %320 = vmatpush1.bf16.msra.mxu0 %v230
    %321 = vmatprep.subr.bf16.mxu0 0
    %322 = vmatpush1.bf16.msra.mxu0 %v229
    %323 = vmatprep.subr.bf16.mxu0 0
    %324 = vmatpush2.bf16.msra.mxu0 0
    %325 = vmatprep.subr.bf16.mxu0 0
    %326 = vmatpush2.bf16.msra.mxu0 0
    %327 = vmatprep.subr.bf16.mxu0 0
    %328 = vmatpush2.bf16.msra.mxu0 0
    %329 = vmatprep.subr.bf16.mxu0 0
    %330 = vmatpush2.bf16.msra.mxu0 0
    %331 = vmatprep.subr.bf16.mxu0 0
    %332 = vmatpush2.bf16.msra.mxu0 0
    %333 = vmatprep.subr.bf16.mxu0 0
    %334 = vmatpush2.bf16.msra.mxu0 0
    %335 = vmatprep.subr.bf16.mxu0 0
    %336 = vmatpush2.bf16.msra.mxu0 0
    %337 = vmatprep.subr.bf16.mxu0 0
    %338 = vmatpush2.bf16.msra.mxu0 %v237
    %339 = vmatprep.mubr.bf16.mxu0 %v265
    %340 = vmatmul.mubr.bf16.gmra.mxu0 %v108
    %v341 = vpop.f32.mrf.mxu0
    %v342 = vadd.f32 %v302, %v341
    %v343 = vpop.f32.mrf.mxu0
    %v344 = vpop.f32.mrf.mxu0
    %v345 = vpop.f32.mrf.mxu0
    %346 = vdwg.mxu0
    %v347 = vpack.c.bf16 %v342, %v342
    %v348 = vmax.bf16 %v347, 0
    %v349 = vld [vmem:[%s3] sm:$0xf]
    %v350 = vld [vmem:[%s3 + $0x4] sm:$0xf]
    %v351 = vld [vmem:[%s3 + $0x8] sm:$0xf]
    %v352 = vld [vmem:[%s3 + $0xc] sm:$0xf]
    %v353 = vld [vmem:[%s3 + $0x10] sm:$0xf]
    %v354 = vld [vmem:[%s3 + $0x14] sm:$0xf]
    %v355 = vld [vmem:[%s3 + $0x18] sm:$0xf]
    %v356 = vld [vmem:[%s3 + $0x1c] sm:$0xf]
    %v357 = vld [vmem:[%s3 + $0x20] sm:$0xf]
    %v358 = vld [vmem:[%s3 + $0x24] sm:$0xf]
    %v359 = vld [vmem:[%s3 + $0x28] sm:$0xf]
    %v360 = vld [vmem:[%s3 + $0x2c] sm:$0xf]
    %v361 = vld [vmem:[%s3 + $0x30] sm:$0xf]
    %v362 = vld [vmem:[%s3 + $0x34] sm:$0xf]
    %v363 = vld [vmem:[%s3 + $0x38] sm:$0xf]
    %v364 = vld [vmem:[%s4] sm:$0x1]
    %v365 = vunpack.c.l.bf16 %v364
    %v366 = vlaneseq
    %v367 = vshrl.u32 %v366, 7
    %v368 = vsub.s32 0, %v367
    %v369 = vrot.slane %v365, %v368
    %v385 = vunpack.c.l.b16 %v349
    %v386 = vunpack.c.l.b16 %v350
    %v387 = vunpack.c.l.b16 %v351
    %v388 = vunpack.c.l.b16 %v352
    %v389 = vunpack.c.l.b16 %v353
    %v390 = vunpack.c.l.b16 %v354
    %v391 = vunpack.c.l.b16 %v355
    %v392 = vunpack.c.l.b16 %v356
    %v393 = vunpack.c.l.b16 %v357
    %v394 = vunpack.c.l.b16 %v358
    %v395 = vunpack.c.l.b16 %v359
    %v396 = vunpack.c.l.b16 %v360
    %v397 = vunpack.c.l.b16 %v361
    %v398 = vunpack.c.l.b16 %v362
    %v399 = vunpack.c.l.b16 %v363
    %v400 = vpack.c.b16 %v386, %v385
    %v401 = vpack.c.b16 %v388, %v387
    %v402 = vpack.c.b16 %v390, %v389
    %v403 = vpack.c.b16 %v392, %v391
    %v404 = vpack.c.b16 %v394, %v393
    %v405 = vpack.c.b16 %v396, %v395
    %v406 = vpack.c.b16 %v398, %v397
    %v407 = vpack.c.b16 %v399, %v399
    %vm415 = vcmask 982016
    %v417 = vsel %vm415, %v348, 0
    %vm419 = vcmask 1043456
    %v421 = vsel %vm419, %v407, 0
    %423 = vmatprep.subr.bf16.mxu0 0
    %424 = vmatpush1.bf16.msra.mxu0 %v421
    %425 = vmatprep.subr.bf16.mxu0 0
    %426 = vmatpush1.bf16.msra.mxu0 %v406
    %427 = vmatprep.subr.bf16.mxu0 0
    %428 = vmatpush1.bf16.msra.mxu0 %v405
    %429 = vmatprep.subr.bf16.mxu0 0
    %430 = vmatpush1.bf16.msra.mxu0 %v404
    %431 = vmatprep.subr.bf16.mxu0 0
    %432 = vmatpush1.bf16.msra.mxu0 %v403
    %433 = vmatprep.subr.bf16.mxu0 0
    %434 = vmatpush1.bf16.msra.mxu0 %v402
    %435 = vmatprep.subr.bf16.mxu0 0
    %436 = vmatpush1.bf16.msra.mxu0 %v401
    %437 = vmatprep.subr.bf16.mxu0 0
    %438 = vmatpush1.bf16.msra.mxu0 %v400
    %439 = vmatprep.subr.bf16.mxu0 0
    %440 = vmatpush2.bf16.msra.mxu0 0
    %441 = vmatprep.subr.bf16.mxu0 0
    %442 = vmatpush2.bf16.msra.mxu0 0
    %443 = vmatprep.subr.bf16.mxu0 0
    %444 = vmatpush2.bf16.msra.mxu0 0
    %445 = vmatprep.subr.bf16.mxu0 0
    %446 = vmatpush2.bf16.msra.mxu0 0
    %447 = vmatprep.subr.bf16.mxu0 0
    %448 = vmatpush2.bf16.msra.mxu0 0
    %449 = vmatprep.subr.bf16.mxu0 0
    %450 = vmatpush2.bf16.msra.mxu0 0
    %451 = vmatprep.subr.bf16.mxu0 0
    %452 = vmatpush2.bf16.msra.mxu0 0
    %453 = vmatprep.subr.bf16.mxu0 0
    %454 = vmatpush2.bf16.msra.mxu0 0
    %455 = vmatprep.mubr.bf16.mxu0 0
    %456 = vmatmul.mubr.bf16.gmra.mxu0 %v417
    %v457 = vpop.f32.mrf.mxu0
    %v458 = vadd.f32 %v369, %v457
    %v459 = vpop.f32.mrf.mxu0
    %v460 = vpop.f32.mrf.mxu0
    %v461 = vpop.f32.mrf.mxu0
    %462 = vdwg.mxu0
    %v463 = vpack.c.bf16 %v458, %v458
    %v464 = vmax.bf16 %v463, 0
    %v465 = vld [vmem:[%s5] sm:$0xf]
    %v466 = vld [vmem:[%s5 + $0x4] sm:$0xf]
    %v467 = vld [vmem:[%s5 + $0x8] sm:$0xf]
    %v468 = vld [vmem:[%s5 + $0xc] sm:$0xf]
    %v469 = vld [vmem:[%s5 + $0x10] sm:$0xf]
    %v470 = vld [vmem:[%s5 + $0x14] sm:$0xf]
    %v471 = vld [vmem:[%s5 + $0x18] sm:$0xf]
    %v472 = vld [vmem:[%s5 + $0x1c] sm:$0xf]
    %v473 = vld [vmem:[%s5 + $0x20] sm:$0xf]
    %v474 = vld [vmem:[%s5 + $0x24] sm:$0xf]
    %v475 = vld [vmem:[%s5 + $0x28] sm:$0x3]
    %v476 = vld [vmem:[%s6] sm:$0x1]
    %v477 = vunpack.c.l.bf16 %v476
    %v478 = vlaneseq
    %v479 = vshrl.u32 %v478, 7
    %v480 = vsub.s32 0, %v479
    %v481 = vrot.slane %v477, %v480
    %v493 = vunpack.c.l.b16 %v465
    %v494 = vunpack.c.l.b16 %v466
    %v495 = vunpack.c.l.b16 %v467
    %v496 = vunpack.c.l.b16 %v468
    %v497 = vunpack.c.l.b16 %v469
    %v498 = vunpack.c.l.b16 %v470
    %v499 = vunpack.c.l.b16 %v471
    %v500 = vunpack.c.l.b16 %v472
    %v501 = vunpack.c.l.b16 %v473
    %v502 = vunpack.c.l.b16 %v474
    %v503 = vunpack.c.l.b16 %v475
    %v504 = vpack.c.b16 %v494, %v493
    %v505 = vpack.c.b16 %v496, %v495
    %v506 = vpack.c.b16 %v498, %v497
    %v507 = vpack.c.b16 %v500, %v499
    %v508 = vpack.c.b16 %v502, %v501
    %v509 = vpack.c.b16 %v503, %v503
    %vm515 = vcmask 687104
    %v517 = vsel %vm515, %v464, 0
    %vm519 = vcmask 1041408
    %v521 = vsel %vm519, %v509, 0
    %523 = vmatprep.subr.bf16.mxu0 0
    %524 = vmatpush1.bf16.msra.mxu0 0
    %525 = vmatprep.subr.bf16.mxu0 0
    %526 = vmatpush1.bf16.msra.mxu0 0
    %527 = vmatprep.subr.bf16.mxu0 0
    %528 = vmatpush1.bf16.msra.mxu0 %v521
    %529 = vmatprep.subr.bf16.mxu0 0
    %530 = vmatpush1.bf16.msra.mxu0 %v508
    %531 = vmatprep.subr.bf16.mxu0 0
    %532 = vmatpush1.bf16.msra.mxu0 %v507
    %533 = vmatprep.subr.bf16.mxu0 0
    %534 = vmatpush1.bf16.msra.mxu0 %v506
    %535 = vmatprep.subr.bf16.mxu0 0
    %536 = vmatpush1.bf16.msra.mxu0 %v505
    %537 = vmatprep.subr.bf16.mxu0 0
    %538 = vmatpush1.bf16.msra.mxu0 %v504
    %539 = vmatprep.subr.bf16.mxu0 0
    %540 = vmatpush2.bf16.msra.mxu0 0
    %541 = vmatprep.subr.bf16.mxu0 0
    %542 = vmatpush2.bf16.msra.mxu0 0
    %543 = vmatprep.subr.bf16.mxu0 0
    %544 = vmatpush2.bf16.msra.mxu0 0
    %545 = vmatprep.subr.bf16.mxu0 0
    %546 = vmatpush2.bf16.msra.mxu0 0
    %547 = vmatprep.subr.bf16.mxu0 0
    %548 = vmatpush2.bf16.msra.mxu0 0
    %549 = vmatprep.subr.bf16.mxu0 0
    %550 = vmatpush2.bf16.msra.mxu0 0
    %551 = vmatprep.subr.bf16.mxu0 0
    %552 = vmatpush2.bf16.msra.mxu0 0
    %553 = vmatprep.subr.bf16.mxu0 0
    %554 = vmatpush2.bf16.msra.mxu0 0
    %555 = vmatprep.mubr.bf16.mxu0 0
    %556 = vmatmul.mubr.bf16.gmra.mxu0 %v517
    %v557 = vpop.f32.mrf.mxu0
    %v558 = vadd.f32 %v481, %v557
    %v559 = vpop.f32.mrf.mxu0
    %v560 = vpop.f32.mrf.mxu0
    %v561 = vpop.f32.mrf.mxu0
    %562 = vdwg.mxu0
    %v563 = vpack.c.bf16 %v558, %v558
    %v564 = vunpack.c.l.bf16 %v563
    %vm565 = vcmask 74752
    %566 = vst.msk [vmem:[#allocation2] sm:$0x3] %vm565, %v564
    // Predicated region
    $region30: #{qlenet_forward.5} parent=1 // pred_check
      _
    $region31: #{qlenet_forward.5} parent=1 // pred_check_branch
      %568 = sbr.rel (0) target = $region33
    $region32: #{qlenet_forward.5} parent=1 // pred_region
      %s570 = ssub.s32 32, 32
      %571 = vsyncadd [#allocation3], %s570
      %s573 = sshll.u32 [#allocation2], 4
      %s574 = int_to_ptr.vmem [resolvable:$true] %s573
      %576 = dma.vmem_to_hbm [thread:$0]  %s574, 32, %s7, [#allocation3]
    $region33: #{qlenet_forward.5} parent=1 // pred_fallthru
      _
    // Predicated region
    $region34: #{qlenet_forward.5} parent=1 // pred_check
      _
    $region35: #{qlenet_forward.5} parent=1 // pred_check_branch
      %578 = sbr.rel (0) target = $region37
    $region36: #{qlenet_forward.5} parent=1 // pred_region
      %579 = dma.done [#allocation3], 32
    $region37: #{qlenet_forward.5} parent=1 // pred_fallthru
      _
    %580 = vsyncpa [#allocation3], 1

</llo_original>
